<compile_context>
chip_gen: v6e
topology: v6e:2x2x1
jax: 0.10.0
libtpu: 0.0.40
codegen_flags: <defaults>
</compile_context>

<pallas_src>
import functools

import jax
import jax.numpy as jnp
from jax.experimental import pallas as pl
from jax.experimental.pallas import tpu as pltpu


def cnn_lstm_kernel(x_ref, conv_w_ref, conv_b_ref, gamma_ref, beta_ref,
                    wih0_ref, whh0_ref, wcat_ref, bias_ref,
                    fc_w_ref, fc_b_ref, o_ref, *,
                    batch, seq_len, num_layers, hidden, eps):
    B, L, H, K = batch, seq_len, hidden, num_layers

    # ---- Conv1d(kernel_size=1), Cout == 1 --------------------------------
    # A (L*B, Cin) x (Cin, 1) "matmul" is ~0% MXU utilization; do it on the
    # VPU (broadcast multiply) + XLU (lane reduce) instead.
    x = x_ref[...]                                                  # (L*B, Cin)
    y = jnp.sum(x * conv_w_ref[...], axis=1, keepdims=True) + conv_b_ref[...]

    # ---- BatchNorm1d (training-mode forward: batch stats, biased variance)
    mean = jnp.mean(y, axis=0, keepdims=True)
    var = jnp.mean((y - mean) ** 2, axis=0, keepdims=True)
    y = (y - mean) * jax.lax.rsqrt(var + eps) * gamma_ref[...] + beta_ref[...]
    # TODO(synk): running_mean / running_var buffer updates (training-only side
    # effect of nn.BatchNorm1d) are not reproduced; eval()-mode stats differ.

    # ---- Sigmoid activation ----------------------------------------------
    seq = jax.nn.sigmoid(y)                                         # (L*B, 1)

    # ---- Layer-0 input projection for ALL timesteps (off the MXU) ---------
    # Cout == 1  =>  outer product on the VPU; hoisted out of the recurrence.
    xproj0 = seq * wih0_ref[...] + bias_ref[0]                      # (L*B, 4H)

    # ---- Hoisted per-layer recurrence weights (bf16, loaded once) ---------
    whh0 = whh0_ref[...]                                            # (H, 4H) bf16
    wcat = [wcat_ref[k] for k in range(K - 1)]                      # (2H, 4H) bf16
    biases = [bias_ref[k] for k in range(1, K)]                     # (1, 4H) f32

    # ---- Stacked LSTM as a wavefront over (layer, time) --------------------
    # PyTorch gate order i, f, g, o; bias_ref already holds b_ih + b_hh.
    h = [jnp.zeros((B, H), jnp.float32) for _ in range(K)]
    c = [jnp.zeros((B, H), jnp.float32) for _ in range(K)]

    def cell(gates, c_prev):
        sg = jax.nn.sigmoid(gates)            # one full-width (B,4H) EUP push
        i_g = sg[:, 0 * H:1 * H]              # H = 128 -> lane-aligned slices
        f_g = sg[:, 1 * H:2 * H]
        o_g = sg[:, 3 * H:4 * H]
        g_g = jnp.tanh(gates[:, 2 * H:3 * H])
        c_new = f_g * c_prev + i_g * g_g
        h_new = o_g * jnp.tanh(c_new)
        return h_new, c_new

    # Static unroll: L + K - 1 = 12 wavefront steps (L, K small & static).
    for s in range(L + K - 1):
        # Snapshot the previous-step state so the (up to K) cells inside this
        # wavefront step are fully independent -> their MXU pushes pipeline.
        hb = [v.astype(jnp.bfloat16) for v in h]      # bf16 LHS for the MXU
        c_old = list(c)
        for k in range(K):
            t = s - k
            if 0 <= t < L:
                if k == 0:
                    gates = xproj0[t * B:(t + 1) * B, :] + jnp.dot(
                        hb[0], whh0, preferred_element_type=jnp.float32)
                else:
                    inp = jnp.concatenate([hb[k - 1], hb[k]], axis=1)  # (B, 2H)
                    gates = jnp.dot(inp, wcat[k - 1],
                                    preferred_element_type=jnp.float32) + biases[k - 1]
                h[k], c[k] = cell(gates, c_old[k])

    # ---- fc on the last timestep only: output[:, -1, :] == fc(h_top) ------
    # 1-column output: keep it on the VPU/XLU (no trailing MXU fill/drain).
    out = jnp.sum(h[K - 1] * fc_w_ref[...], axis=1, keepdims=True) + fc_b_ref[...]
    o_ref[...] = out


def cnn_lstm_forward(x, params, *, num_layers, hidden):
    B, L, Cin = x.shape
    # Layout plumbing in plain XLA: time-major 2-D slab (row = t*B + b), so the
    # kernel never reshapes across an (8,128) tile boundary.
    x2d = jnp.transpose(x, (1, 0, 2)).reshape(L * B, Cin)

    # Fused per-layer recurrence weights for layers >= 1: [W_ih; W_hh] stacked
    # on the contraction dim, cast to bf16 for the MXU (f32 accumulate inside).
    whh0 = params["whh"][0].astype(jnp.bfloat16)                     # (H, 4H)
    wcat = jnp.concatenate([params["wih_rest"], params["whh"][1:]],
                           axis=1).astype(jnp.bfloat16)              # (K-1, 2H, 4H)

    inputs = (x2d,
              params["conv_w"], params["conv_b"],
              params["gamma"], params["beta"],
              params["wih0"], whh0, wcat, params["bias"],
              params["fc_w"], params["fc_b"])

    def full_spec(a):
        n = a.ndim
        return pl.BlockSpec(a.shape, lambda i, _n=n: (0,) * _n)

    kernel = functools.partial(cnn_lstm_kernel,
                               batch=B, seq_len=L,
                               num_layers=num_layers, hidden=hidden, eps=1e-5)

    # NOTE: grid stays (1,) — BatchNorm uses whole-batch statistics, so a
    # batch-parallel grid axis (v7x dual-TC win) would need a BN-stats
    # pre-pass first.
    return pl.pallas_call(
        kernel,
        out_shape=jax.ShapeDtypeStruct((B, 1), jnp.float32),
        grid=(1,),
        in_specs=[full_spec(a) for a in inputs],
        out_specs=pl.BlockSpec((B, 1), lambda i: (0, 0)),
        compiler_params=pltpu.CompilerParams(
            dimension_semantics=("arbitrary",),
            vmem_limit_bytes=32 * 1024 * 1024),
    )(*inputs)


def init_params(key, *, input_size, out_channels, hidden, num_layers):
    """Deterministic parameter init mirroring the PyTorch module's shapes."""
    assert out_channels == 1, "kernel specializes the module's out_channels=1"
    ks = jax.random.split(key, 9)
    kc = 1.0 / jnp.sqrt(jnp.float32(input_size))      # Conv1d fan-in (kernel=1)
    kh = 1.0 / jnp.sqrt(jnp.float32(hidden))          # LSTM / Linear scale

    def u(k, shape, s):
        return jax.random.uniform(k, shape, jnp.float32, -s, s)

    params = {
        "conv_w": u(ks[0], (1, input_size), kc),          # (Cout=1, Cin) row
        "conv_b": u(ks[1], (1, 1), kc),
        "gamma": jnp.ones((1, 1), jnp.float32),           # BN default init
        "beta": jnp.zeros((1, 1), jnp.float32),
        "fc_w": u(ks[2], (1, hidden), kh),                # Linear(H, 1) as row
        "fc_b": u(ks[3], (1, 1), kh),
    }
    # LSTM weights: layer 0 input = out_channels(=1), layers >= 1 input = hidden.
    params["wih0"] = u(ks[4], (out_channels, 4 * hidden), kh)
    params["wih_rest"] = u(ks[5], (num_layers - 1, hidden, 4 * hidden), kh)
    params["whh"] = u(ks[6], (num_layers, hidden, 4 * hidden), kh)
    # combined bias b_ih + b_hh per layer
    params["bias"] = (u(ks[7], (num_layers, 1, 4 * hidden), kh)
                      + u(ks[8], (num_layers, 1, 4 * hidden), kh))
    return params


if __name__ == "__main__":
    # Shapes from the module: L=10, hidden_size=128, num_layers=3, out_channels=1.
    B, L, INPUT_SIZE = 2, 10, 4
    HIDDEN, NUM_LAYERS, OUT_CHANNELS = 128, 3, 1

    key = jax.random.PRNGKey(0)
    kx, kp = jax.random.split(key)
    x = jax.random.normal(kx, (B, L, INPUT_SIZE), jnp.float32)
    params = init_params(kp, input_size=INPUT_SIZE, out_channels=OUT_CHANNELS,
                         hidden=HIDDEN, num_layers=NUM_LAYERS)

    out = cnn_lstm_forward(x, params, num_layers=NUM_LAYERS, hidden=HIDDEN)
    out = jax.block_until_ready(out)
    assert out.shape == (B, 1) and bool(jnp.all(jnp.isfinite(out)))
    print("KERNEL_OK")
</pallas_src>

<mosaic_0001>
module attributes {stable_mosaic.version = 11 : i64} {
  func.func @cnn_lstm_kernel(%arg0: i32, %arg1: memref<20x4xf32, #tpu.memory_space<vmem>>, %arg2: memref<1x4xf32, #tpu.memory_space<vmem>>, %arg3: memref<1x1xf32, #tpu.memory_space<vmem>>, %arg4: memref<1x1xf32, #tpu.memory_space<vmem>>, %arg5: memref<1x1xf32, #tpu.memory_space<vmem>>, %arg6: memref<1x512xf32, #tpu.memory_space<vmem>>, %arg7: memref<128x512xbf16, #tpu.memory_space<vmem>>, %arg8: memref<2x256x512xbf16, #tpu.memory_space<vmem>>, %arg9: memref<3x1x512xf32, #tpu.memory_space<vmem>>, %arg10: memref<1x128xf32, #tpu.memory_space<vmem>>, %arg11: memref<1x1xf32, #tpu.memory_space<vmem>>, %arg12: memref<2x1xf32, #tpu.memory_space<vmem>>) attributes {dimension_semantics = [#tpu.dimension_semantics<arbitrary>], iteration_bounds = array<i64: 1>, scalar_prefetch = 0 : i64, scratch_operands = 0 : i64, tpu.core_type = #tpu.core_type<tc>, window_params = [{pipeline_mode = #tpu.pipeline_mode<synchronous>, transform_indices = @transform_0, window_bounds = array<i64: 20, 4>}, {pipeline_mode = #tpu.pipeline_mode<synchronous>, transform_indices = @transform_1, window_bounds = array<i64: 1, 4>}, {pipeline_mode = #tpu.pipeline_mode<synchronous>, transform_indices = @transform_2, window_bounds = array<i64: 1, 1>}, {pipeline_mode = #tpu.pipeline_mode<synchronous>, transform_indices = @transform_3, window_bounds = array<i64: 1, 1>}, {pipeline_mode = #tpu.pipeline_mode<synchronous>, transform_indices = @transform_4, window_bounds = array<i64: 1, 1>}, {pipeline_mode = #tpu.pipeline_mode<synchronous>, transform_indices = @transform_5, window_bounds = array<i64: 1, 512>}, {pipeline_mode = #tpu.pipeline_mode<synchronous>, transform_indices = @transform_6, window_bounds = array<i64: 128, 512>}, {pipeline_mode = #tpu.pipeline_mode<synchronous>, transform_indices = @transform_7, window_bounds = array<i64: 2, 256, 512>}, {pipeline_mode = #tpu.pipeline_mode<synchronous>, transform_indices = @transform_8, window_bounds = array<i64: 3, 1, 512>}, {pipeline_mode = #tpu.pipeline_mode<synchronous>, transform_indices = @transform_9, window_bounds = array<i64: 1, 128>}, {pipeline_mode = #tpu.pipeline_mode<synchronous>, transform_indices = @transform_10, window_bounds = array<i64: 1, 1>}, {pipeline_mode = #tpu.pipeline_mode<synchronous>, transform_indices = @transform_11, window_bounds = array<i64: 2, 1>}]} {
    %c0 = arith.constant 0 : index
    %c0_0 = arith.constant 0 : index
    %0 = vector.load %arg1[%c0, %c0_0] : memref<20x4xf32, #tpu.memory_space<vmem>>, vector<20x4xf32>
    %c0_1 = arith.constant 0 : index
    %c0_2 = arith.constant 0 : index
    %1 = vector.load %arg2[%c0_1, %c0_2] : memref<1x4xf32, #tpu.memory_space<vmem>>, vector<1x4xf32>
    %2 = vector.broadcast %1 : vector<1x4xf32> to vector<20x4xf32>
    %3 = arith.mulf %0, %2 : vector<20x4xf32>
    %cst = arith.constant dense<0.000000e+00> : vector<20xf32>
    %4 = vector.multi_reduction <add>, %3, %cst [1] : vector<20x4xf32> to vector<20xf32>
    %5 = vector.shape_cast %4 : vector<20xf32> to vector<20x1xf32>
    %c0_3 = arith.constant 0 : index
    %c0_4 = arith.constant 0 : index
    %6 = vector.load %arg3[%c0_3, %c0_4] : memref<1x1xf32, #tpu.memory_space<vmem>>, vector<1x1xf32>
    %7 = vector.broadcast %6 : vector<1x1xf32> to vector<20x1xf32>
    %8 = arith.addf %5, %7 : vector<20x1xf32>
    %cst_5 = arith.constant dense<0.000000e+00> : vector<1xf32>
    %9 = vector.multi_reduction <add>, %8, %cst_5 [0] : vector<20x1xf32> to vector<1xf32>
    %10 = vector.shape_cast %9 : vector<1xf32> to vector<1x1xf32>
    %cst_6 = arith.constant 2.000000e+01 : f32
    %11 = vector.broadcast %cst_6 : f32 to vector<1x1xf32>
    %12 = arith.divf %10, %11 : vector<1x1xf32>
    %13 = vector.broadcast %12 : vector<1x1xf32> to vector<20x1xf32>
    %14 = arith.subf %8, %13 : vector<20x1xf32>
    %15 = arith.mulf %14, %14 : vector<20x1xf32>
    %cst_7 = arith.constant dense<0.000000e+00> : vector<1xf32>
    %16 = vector.multi_reduction <add>, %15, %cst_7 [0] : vector<20x1xf32> to vector<1xf32>
    %17 = vector.shape_cast %16 : vector<1xf32> to vector<1x1xf32>
    %cst_8 = arith.constant 2.000000e+01 : f32
    %18 = vector.broadcast %cst_8 : f32 to vector<1x1xf32>
    %19 = arith.divf %17, %18 : vector<1x1xf32>
    %20 = vector.broadcast %12 : vector<1x1xf32> to vector<20x1xf32>
    %21 = arith.subf %8, %20 : vector<20x1xf32>
    %cst_9 = arith.constant 9.99999974E-6 : f32
    %22 = vector.broadcast %cst_9 : f32 to vector<1x1xf32>
    %23 = arith.addf %19, %22 : vector<1x1xf32>
    %24 = math.rsqrt %23 : vector<1x1xf32>
    %25 = vector.broadcast %24 : vector<1x1xf32> to vector<20x1xf32>
    %26 = arith.mulf %21, %25 : vector<20x1xf32>
    %c0_10 = arith.constant 0 : index
    %c0_11 = arith.constant 0 : index
    %27 = vector.load %arg4[%c0_10, %c0_11] : memref<1x1xf32, #tpu.memory_space<vmem>>, vector<1x1xf32>
    %28 = vector.broadcast %27 : vector<1x1xf32> to vector<20x1xf32>
    %29 = arith.mulf %26, %28 : vector<20x1xf32>
    %c0_12 = arith.constant 0 : index
    %c0_13 = arith.constant 0 : index
    %30 = vector.load %arg5[%c0_12, %c0_13] : memref<1x1xf32, #tpu.memory_space<vmem>>, vector<1x1xf32>
    %31 = vector.broadcast %30 : vector<1x1xf32> to vector<20x1xf32>
    %32 = arith.addf %29, %31 : vector<20x1xf32>
    %33 = arith.negf %32 : vector<20x1xf32>
    %34 = math.exp %33 : vector<20x1xf32>
    %cst_14 = arith.constant 1.000000e+00 : f32
    %35 = vector.broadcast %cst_14 : f32 to vector<20x1xf32>
    %36 = arith.addf %35, %34 : vector<20x1xf32>
    %37 = arith.divf %35, %36 : vector<20x1xf32>
    %c0_15 = arith.constant 0 : index
    %c0_16 = arith.constant 0 : index
    %38 = vector.load %arg6[%c0_15, %c0_16] : memref<1x512xf32, #tpu.memory_space<vmem>>, vector<1x512xf32>
    %39 = vector.broadcast %37 : vector<20x1xf32> to vector<20x512xf32>
    %40 = vector.broadcast %38 : vector<1x512xf32> to vector<20x512xf32>
    %41 = arith.mulf %39, %40 : vector<20x512xf32>
    %c0_17 = arith.constant 0 : index
    %c0_18 = arith.constant 0 : index
    %c0_19 = arith.constant 0 : index
    %42 = vector.load %arg9[%c0_17, %c0_18, %c0_19] : memref<3x1x512xf32, #tpu.memory_space<vmem>>, vector<1x1x512xf32>
    %43 = vector.shape_cast %42 : vector<1x1x512xf32> to vector<1x512xf32>
    %44 = vector.broadcast %43 : vector<1x512xf32> to vector<20x512xf32>
    %45 = arith.addf %41, %44 : vector<20x512xf32>
    %c0_20 = arith.constant 0 : index
    %c0_21 = arith.constant 0 : index
    %46 = vector.load %arg7[%c0_20, %c0_21] : memref<128x512xbf16, #tpu.memory_space<vmem>>, vector<128x512xbf16>
    %c0_22 = arith.constant 0 : index
    %c0_23 = arith.constant 0 : index
    %c0_24 = arith.constant 0 : index
    %47 = vector.load %arg8[%c0_22, %c0_23, %c0_24] : memref<2x256x512xbf16, #tpu.memory_space<vmem>>, vector<1x256x512xbf16>
    %48 = vector.shape_cast %47 : vector<1x256x512xbf16> to vector<256x512xbf16>
    %c1 = arith.constant 1 : index
    %c0_25 = arith.constant 0 : index
    %c0_26 = arith.constant 0 : index
    %49 = vector.load %arg8[%c1, %c0_25, %c0_26] : memref<2x256x512xbf16, #tpu.memory_space<vmem>>, vector<1x256x512xbf16>
    %50 = vector.shape_cast %49 : vector<1x256x512xbf16> to vector<256x512xbf16>
    %c1_27 = arith.constant 1 : index
    %c0_28 = arith.constant 0 : index
    %c0_29 = arith.constant 0 : index
    %51 = vector.load %arg9[%c1_27, %c0_28, %c0_29] : memref<3x1x512xf32, #tpu.memory_space<vmem>>, vector<1x1x512xf32>
    %52 = vector.shape_cast %51 : vector<1x1x512xf32> to vector<1x512xf32>
    %c2 = arith.constant 2 : index
    %c0_30 = arith.constant 0 : index
    %c0_31 = arith.constant 0 : index
    %53 = vector.load %arg9[%c2, %c0_30, %c0_31] : memref<3x1x512xf32, #tpu.memory_space<vmem>>, vector<1x1x512xf32>
    %54 = vector.shape_cast %53 : vector<1x1x512xf32> to vector<1x512xf32>
    %cst_32 = arith.constant 0.000000e+00 : f32
    %55 = vector.broadcast %cst_32 : f32 to vector<2x128xf32>
    %cst_33 = arith.constant 0.000000e+00 : f32
    %56 = vector.broadcast %cst_33 : f32 to vector<2x128xf32>
    %cst_34 = arith.constant 0.000000e+00 : f32
    %57 = vector.broadcast %cst_34 : f32 to vector<2x128xf32>
    %cst_35 = arith.constant 0.000000e+00 : f32
    %58 = vector.broadcast %cst_35 : f32 to vector<2x128xf32>
    %cst_36 = arith.constant 0.000000e+00 : f32
    %59 = vector.broadcast %cst_36 : f32 to vector<2x128xf32>
    %cst_37 = arith.constant 0.000000e+00 : f32
    %60 = vector.broadcast %cst_37 : f32 to vector<2x128xf32>
    %61 = arith.truncf %55 : vector<2x128xf32> to vector<2x128xbf16>
    %62 = vector.extract_strided_slice %45 {offsets = [0, 0], sizes = [2, 512], strides = [1, 1]} : vector<20x512xf32> to vector<2x512xf32>
    %cst_38 = arith.constant dense<0.000000e+00> : vector<2x512xf32>
    %63 = tpu.matmul %61, %46, %cst_38 {dimension_numbers = #tpu.dot_dimension_numbers<[1], [0], [0], [1], [0, 0, 1, 1], [], []>} : vector<2x128xbf16>, vector<128x512xbf16>, vector<2x512xf32> -> vector<2x512xf32>
    %64 = arith.addf %62, %63 : vector<2x512xf32>
    %65 = arith.negf %64 : vector<2x512xf32>
    %66 = math.exp %65 : vector<2x512xf32>
    %cst_39 = arith.constant 1.000000e+00 : f32
    %67 = vector.broadcast %cst_39 : f32 to vector<2x512xf32>
    %68 = arith.addf %67, %66 : vector<2x512xf32>
    %69 = arith.divf %67, %68 : vector<2x512xf32>
    %70 = vector.extract_strided_slice %69 {offsets = [0, 0], sizes = [2, 128], strides = [1, 1]} : vector<2x512xf32> to vector<2x128xf32>
    %71 = vector.extract_strided_slice %69 {offsets = [0, 128], sizes = [2, 128], strides = [1, 1]} : vector<2x512xf32> to vector<2x128xf32>
    %72 = vector.extract_strided_slice %69 {offsets = [0, 384], sizes = [2, 128], strides = [1, 1]} : vector<2x512xf32> to vector<2x128xf32>
    %73 = vector.extract_strided_slice %64 {offsets = [0, 256], sizes = [2, 128], strides = [1, 1]} : vector<2x512xf32> to vector<2x128xf32>
    %74 = math.tanh %73 : vector<2x128xf32>
    %75 = arith.mulf %71, %58 : vector<2x128xf32>
    %76 = arith.mulf %70, %74 : vector<2x128xf32>
    %77 = arith.addf %75, %76 : vector<2x128xf32>
    %78 = math.tanh %77 : vector<2x128xf32>
    %79 = arith.mulf %72, %78 : vector<2x128xf32>
    %80 = arith.truncf %79 : vector<2x128xf32> to vector<2x128xbf16>
    %81 = arith.truncf %56 : vector<2x128xf32> to vector<2x128xbf16>
    %82 = vector.extract_strided_slice %45 {offsets = [2, 0], sizes = [2, 512], strides = [1, 1]} : vector<20x512xf32> to vector<2x512xf32>
    %cst_40 = arith.constant dense<0.000000e+00> : vector<2x512xf32>
    %83 = tpu.matmul %80, %46, %cst_40 {dimension_numbers = #tpu.dot_dimension_numbers<[1], [0], [0], [1], [0, 0, 1, 1], [], []>} : vector<2x128xbf16>, vector<128x512xbf16>, vector<2x512xf32> -> vector<2x512xf32>
    %84 = arith.addf %82, %83 : vector<2x512xf32>
    %85 = arith.negf %84 : vector<2x512xf32>
    %86 = math.exp %85 : vector<2x512xf32>
    %cst_41 = arith.constant 1.000000e+00 : f32
    %87 = vector.broadcast %cst_41 : f32 to vector<2x512xf32>
    %88 = arith.addf %87, %86 : vector<2x512xf32>
    %89 = arith.divf %87, %88 : vector<2x512xf32>
    %90 = vector.extract_strided_slice %89 {offsets = [0, 0], sizes = [2, 128], strides = [1, 1]} : vector<2x512xf32> to vector<2x128xf32>
    %91 = vector.extract_strided_slice %89 {offsets = [0, 128], sizes = [2, 128], strides = [1, 1]} : vector<2x512xf32> to vector<2x128xf32>
    %92 = vector.extract_strided_slice %89 {offsets = [0, 384], sizes = [2, 128], strides = [1, 1]} : vector<2x512xf32> to vector<2x128xf32>
    %93 = vector.extract_strided_slice %84 {offsets = [0, 256], sizes = [2, 128], strides = [1, 1]} : vector<2x512xf32> to vector<2x128xf32>
    %94 = math.tanh %93 : vector<2x128xf32>
    %95 = arith.mulf %91, %77 : vector<2x128xf32>
    %96 = arith.mulf %90, %94 : vector<2x128xf32>
    %97 = arith.addf %95, %96 : vector<2x128xf32>
    %98 = math.tanh %97 : vector<2x128xf32>
    %99 = arith.mulf %92, %98 : vector<2x128xf32>
    %100 = tpu.concatenate %80, %81 in 1 : vector<2x128xbf16>, vector<2x128xbf16> -> vector<2x256xbf16>
    %cst_42 = arith.constant dense<0.000000e+00> : vector<2x512xf32>
    %101 = tpu.matmul %100, %48, %cst_42 {dimension_numbers = #tpu.dot_dimension_numbers<[1], [0], [0], [1], [0, 0, 1, 1], [], []>} : vector<2x256xbf16>, vector<256x512xbf16>, vector<2x512xf32> -> vector<2x512xf32>
    %102 = vector.broadcast %52 : vector<1x512xf32> to vector<2x512xf32>
    %103 = arith.addf %101, %102 : vector<2x512xf32>
    %104 = arith.negf %103 : vector<2x512xf32>
    %105 = math.exp %104 : vector<2x512xf32>
    %cst_43 = arith.constant 1.000000e+00 : f32
    %106 = vector.broadcast %cst_43 : f32 to vector<2x512xf32>
    %107 = arith.addf %106, %105 : vector<2x512xf32>
    %108 = arith.divf %106, %107 : vector<2x512xf32>
    %109 = vector.extract_strided_slice %108 {offsets = [0, 0], sizes = [2, 128], strides = [1, 1]} : vector<2x512xf32> to vector<2x128xf32>
    %110 = vector.extract_strided_slice %108 {offsets = [0, 128], sizes = [2, 128], strides = [1, 1]} : vector<2x512xf32> to vector<2x128xf32>
    %111 = vector.extract_strided_slice %108 {offsets = [0, 384], sizes = [2, 128], strides = [1, 1]} : vector<2x512xf32> to vector<2x128xf32>
    %112 = vector.extract_strided_slice %103 {offsets = [0, 256], sizes = [2, 128], strides = [1, 1]} : vector<2x512xf32> to vector<2x128xf32>
    %113 = math.tanh %112 : vector<2x128xf32>
    %114 = arith.mulf %110, %59 : vector<2x128xf32>
    %115 = arith.mulf %109, %113 : vector<2x128xf32>
    %116 = arith.addf %114, %115 : vector<2x128xf32>
    %117 = math.tanh %116 : vector<2x128xf32>
    %118 = arith.mulf %111, %117 : vector<2x128xf32>
    %119 = arith.truncf %99 : vector<2x128xf32> to vector<2x128xbf16>
    %120 = arith.truncf %118 : vector<2x128xf32> to vector<2x128xbf16>
    %121 = arith.truncf %57 : vector<2x128xf32> to vector<2x128xbf16>
    %122 = vector.extract_strided_slice %45 {offsets = [4, 0], sizes = [2, 512], strides = [1, 1]} : vector<20x512xf32> to vector<2x512xf32>
    %cst_44 = arith.constant dense<0.000000e+00> : vector<2x512xf32>
    %123 = tpu.matmul %119, %46, %cst_44 {dimension_numbers = #tpu.dot_dimension_numbers<[1], [0], [0], [1], [0, 0, 1, 1], [], []>} : vector<2x128xbf16>, vector<128x512xbf16>, vector<2x512xf32> -> vector<2x512xf32>
    %124 = arith.addf %122, %123 : vector<2x512xf32>
    %125 = arith.negf %124 : vector<2x512xf32>
    %126 = math.exp %125 : vector<2x512xf32>
    %cst_45 = arith.constant 1.000000e+00 : f32
    %127 = vector.broadcast %cst_45 : f32 to vector<2x512xf32>
    %128 = arith.addf %127, %126 : vector<2x512xf32>
    %129 = arith.divf %127, %128 : vector<2x512xf32>
    %130 = vector.extract_strided_slice %129 {offsets = [0, 0], sizes = [2, 128], strides = [1, 1]} : vector<2x512xf32> to vector<2x128xf32>
    %131 = vector.extract_strided_slice %129 {offsets = [0, 128], sizes = [2, 128], strides = [1, 1]} : vector<2x512xf32> to vector<2x128xf32>
    %132 = vector.extract_strided_slice %129 {offsets = [0, 384], sizes = [2, 128], strides = [1, 1]} : vector<2x512xf32> to vector<2x128xf32>
    %133 = vector.extract_strided_slice %124 {offsets = [0, 256], sizes = [2, 128], strides = [1, 1]} : vector<2x512xf32> to vector<2x128xf32>
    %134 = math.tanh %133 : vector<2x128xf32>
    %135 = arith.mulf %131, %97 : vector<2x128xf32>
    %136 = arith.mulf %130, %134 : vector<2x128xf32>
    %137 = arith.addf %135, %136 : vector<2x128xf32>
    %138 = math.tanh %137 : vector<2x128xf32>
    %139 = arith.mulf %132, %138 : vector<2x128xf32>
    %140 = tpu.concatenate %119, %120 in 1 : vector<2x128xbf16>, vector<2x128xbf16> -> vector<2x256xbf16>
    %cst_46 = arith.constant dense<0.000000e+00> : vector<2x512xf32>
    %141 = tpu.matmul %140, %48, %cst_46 {dimension_numbers = #tpu.dot_dimension_numbers<[1], [0], [0], [1], [0, 0, 1, 1], [], []>} : vector<2x256xbf16>, vector<256x512xbf16>, vector<2x512xf32> -> vector<2x512xf32>
    %142 = vector.broadcast %52 : vector<1x512xf32> to vector<2x512xf32>
    %143 = arith.addf %141, %142 : vector<2x512xf32>
    %144 = arith.negf %143 : vector<2x512xf32>
    %145 = math.exp %144 : vector<2x512xf32>
    %cst_47 = arith.constant 1.000000e+00 : f32
    %146 = vector.broadcast %cst_47 : f32 to vector<2x512xf32>
    %147 = arith.addf %146, %145 : vector<2x512xf32>
    %148 = arith.divf %146, %147 : vector<2x512xf32>
    %149 = vector.extract_strided_slice %148 {offsets = [0, 0], sizes = [2, 128], strides = [1, 1]} : vector<2x512xf32> to vector<2x128xf32>
    %150 = vector.extract_strided_slice %148 {offsets = [0, 128], sizes = [2, 128], strides = [1, 1]} : vector<2x512xf32> to vector<2x128xf32>
    %151 = vector.extract_strided_slice %148 {offsets = [0, 384], sizes = [2, 128], strides = [1, 1]} : vector<2x512xf32> to vector<2x128xf32>
    %152 = vector.extract_strided_slice %143 {offsets = [0, 256], sizes = [2, 128], strides = [1, 1]} : vector<2x512xf32> to vector<2x128xf32>
    %153 = math.tanh %152 : vector<2x128xf32>
    %154 = arith.mulf %150, %116 : vector<2x128xf32>
    %155 = arith.mulf %149, %153 : vector<2x128xf32>
    %156 = arith.addf %154, %155 : vector<2x128xf32>
    %157 = math.tanh %156 : vector<2x128xf32>
    %158 = arith.mulf %151, %157 : vector<2x128xf32>
    %159 = tpu.concatenate %120, %121 in 1 : vector<2x128xbf16>, vector<2x128xbf16> -> vector<2x256xbf16>
    %cst_48 = arith.constant dense<0.000000e+00> : vector<2x512xf32>
    %160 = tpu.matmul %159, %50, %cst_48 {dimension_numbers = #tpu.dot_dimension_numbers<[1], [0], [0], [1], [0, 0, 1, 1], [], []>} : vector<2x256xbf16>, vector<256x512xbf16>, vector<2x512xf32> -> vector<2x512xf32>
    %161 = vector.broadcast %54 : vector<1x512xf32> to vector<2x512xf32>
    %162 = arith.addf %160, %161 : vector<2x512xf32>
    %163 = arith.negf %162 : vector<2x512xf32>
    %164 = math.exp %163 : vector<2x512xf32>
    %cst_49 = arith.constant 1.000000e+00 : f32
    %165 = vector.broadcast %cst_49 : f32 to vector<2x512xf32>
    %166 = arith.addf %165, %164 : vector<2x512xf32>
    %167 = arith.divf %165, %166 : vector<2x512xf32>
    %168 = vector.extract_strided_slice %167 {offsets = [0, 0], sizes = [2, 128], strides = [1, 1]} : vector<2x512xf32> to vector<2x128xf32>
    %169 = vector.extract_strided_slice %167 {offsets = [0, 128], sizes = [2, 128], strides = [1, 1]} : vector<2x512xf32> to vector<2x128xf32>
    %170 = vector.extract_strided_slice %167 {offsets = [0, 384], sizes = [2, 128], strides = [1, 1]} : vector<2x512xf32> to vector<2x128xf32>
    %171 = vector.extract_strided_slice %162 {offsets = [0, 256], sizes = [2, 128], strides = [1, 1]} : vector<2x512xf32> to vector<2x128xf32>
    %172 = math.tanh %171 : vector<2x128xf32>
    %173 = arith.mulf %169, %60 : vector<2x128xf32>
    %174 = arith.mulf %168, %172 : vector<2x128xf32>
    %175 = arith.addf %173, %174 : vector<2x128xf32>
    %176 = math.tanh %175 : vector<2x128xf32>
    %177 = arith.mulf %170, %176 : vector<2x128xf32>
    %178 = arith.truncf %139 : vector<2x128xf32> to vector<2x128xbf16>
    %179 = arith.truncf %158 : vector<2x128xf32> to vector<2x128xbf16>
    %180 = arith.truncf %177 : vector<2x128xf32> to vector<2x128xbf16>
    %181 = vector.extract_strided_slice %45 {offsets = [6, 0], sizes = [2, 512], strides = [1, 1]} : vector<20x512xf32> to vector<2x512xf32>
    %cst_50 = arith.constant dense<0.000000e+00> : vector<2x512xf32>
    %182 = tpu.matmul %178, %46, %cst_50 {dimension_numbers = #tpu.dot_dimension_numbers<[1], [0], [0], [1], [0, 0, 1, 1], [], []>} : vector<2x128xbf16>, vector<128x512xbf16>, vector<2x512xf32> -> vector<2x512xf32>
    %183 = arith.addf %181, %182 : vector<2x512xf32>
    %184 = arith.negf %183 : vector<2x512xf32>
    %185 = math.exp %184 : vector<2x512xf32>
    %cst_51 = arith.constant 1.000000e+00 : f32
    %186 = vector.broadcast %cst_51 : f32 to vector<2x512xf32>
    %187 = arith.addf %186, %185 : vector<2x512xf32>
    %188 = arith.divf %186, %187 : vector<2x512xf32>
    %189 = vector.extract_strided_slice %188 {offsets = [0, 0], sizes = [2, 128], strides = [1, 1]} : vector<2x512xf32> to vector<2x128xf32>
    %190 = vector.extract_strided_slice %188 {offsets = [0, 128], sizes = [2, 128], strides = [1, 1]} : vector<2x512xf32> to vector<2x128xf32>
    %191 = vector.extract_strided_slice %188 {offsets = [0, 384], sizes = [2, 128], strides = [1, 1]} : vector<2x512xf32> to vector<2x128xf32>
    %192 = vector.extract_strided_slice %183 {offsets = [0, 256], sizes = [2, 128], strides = [1, 1]} : vector<2x512xf32> to vector<2x128xf32>
    %193 = math.tanh %192 : vector<2x128xf32>
    %194 = arith.mulf %190, %137 : vector<2x128xf32>
    %195 = arith.mulf %189, %193 : vector<2x128xf32>
    %196 = arith.addf %194, %195 : vector<2x128xf32>
    %197 = math.tanh %196 : vector<2x128xf32>
    %198 = arith.mulf %191, %197 : vector<2x128xf32>
    %199 = tpu.concatenate %178, %179 in 1 : vector<2x128xbf16>, vector<2x128xbf16> -> vector<2x256xbf16>
    %cst_52 = arith.constant dense<0.000000e+00> : vector<2x512xf32>
    %200 = tpu.matmul %199, %48, %cst_52 {dimension_numbers = #tpu.dot_dimension_numbers<[1], [0], [0], [1], [0, 0, 1, 1], [], []>} : vector<2x256xbf16>, vector<256x512xbf16>, vector<2x512xf32> -> vector<2x512xf32>
    %201 = vector.broadcast %52 : vector<1x512xf32> to vector<2x512xf32>
    %202 = arith.addf %200, %201 : vector<2x512xf32>
    %203 = arith.negf %202 : vector<2x512xf32>
    %204 = math.exp %203 : vector<2x512xf32>
    %cst_53 = arith.constant 1.000000e+00 : f32
    %205 = vector.broadcast %cst_53 : f32 to vector<2x512xf32>
    %206 = arith.addf %205, %204 : vector<2x512xf32>
    %207 = arith.divf %205, %206 : vector<2x512xf32>
    %208 = vector.extract_strided_slice %207 {offsets = [0, 0], sizes = [2, 128], strides = [1, 1]} : vector<2x512xf32> to vector<2x128xf32>
    %209 = vector.extract_strided_slice %207 {offsets = [0, 128], sizes = [2, 128], strides = [1, 1]} : vector<2x512xf32> to vector<2x128xf32>
    %210 = vector.extract_strided_slice %207 {offsets = [0, 384], sizes = [2, 128], strides = [1, 1]} : vector<2x512xf32> to vector<2x128xf32>
    %211 = vector.extract_strided_slice %202 {offsets = [0, 256], sizes = [2, 128], strides = [1, 1]} : vector<2x512xf32> to vector<2x128xf32>
    %212 = math.tanh %211 : vector<2x128xf32>
    %213 = arith.mulf %209, %156 : vector<2x128xf32>
    %214 = arith.mulf %208, %212 : vector<2x128xf32>
    %215 = arith.addf %213, %214 : vector<2x128xf32>
    %216 = math.tanh %215 : vector<2x128xf32>
    %217 = arith.mulf %210, %216 : vector<2x128xf32>
    %218 = tpu.concatenate %179, %180 in 1 : vector<2x128xbf16>, vector<2x128xbf16> -> vector<2x256xbf16>
    %cst_54 = arith.constant dense<0.000000e+00> : vector<2x512xf32>
    %219 = tpu.matmul %218, %50, %cst_54 {dimension_numbers = #tpu.dot_dimension_numbers<[1], [0], [0], [1], [0, 0, 1, 1], [], []>} : vector<2x256xbf16>, vector<256x512xbf16>, vector<2x512xf32> -> vector<2x512xf32>
    %220 = vector.broadcast %54 : vector<1x512xf32> to vector<2x512xf32>
    %221 = arith.addf %219, %220 : vector<2x512xf32>
    %222 = arith.negf %221 : vector<2x512xf32>
    %223 = math.exp %222 : vector<2x512xf32>
    %cst_55 = arith.constant 1.000000e+00 : f32
    %224 = vector.broadcast %cst_55 : f32 to vector<2x512xf32>
    %225 = arith.addf %224, %223 : vector<2x512xf32>
    %226 = arith.divf %224, %225 : vector<2x512xf32>
    %227 = vector.extract_strided_slice %226 {offsets = [0, 0], sizes = [2, 128], strides = [1, 1]} : vector<2x512xf32> to vector<2x128xf32>
    %228 = vector.extract_strided_slice %226 {offsets = [0, 128], sizes = [2, 128], strides = [1, 1]} : vector<2x512xf32> to vector<2x128xf32>
    %229 = vector.extract_strided_slice %226 {offsets = [0, 384], sizes = [2, 128], strides = [1, 1]} : vector<2x512xf32> to vector<2x128xf32>
    %230 = vector.extract_strided_slice %221 {offsets = [0, 256], sizes = [2, 128], strides = [1, 1]} : vector<2x512xf32> to vector<2x128xf32>
    %231 = math.tanh %230 : vector<2x128xf32>
    %232 = arith.mulf %228, %175 : vector<2x128xf32>
    %233 = arith.mulf %227, %231 : vector<2x128xf32>
    %234 = arith.addf %232, %233 : vector<2x128xf32>
    %235 = math.tanh %234 : vector<2x128xf32>
    %236 = arith.mulf %229, %235 : vector<2x128xf32>
    %237 = arith.truncf %198 : vector<2x128xf32> to vector<2x128xbf16>
    %238 = arith.truncf %217 : vector<2x128xf32> to vector<2x128xbf16>
    %239 = arith.truncf %236 : vector<2x128xf32> to vector<2x128xbf16>
    %240 = vector.extract_strided_slice %45 {offsets = [8, 0], sizes = [2, 512], strides = [1, 1]} : vector<20x512xf32> to vector<2x512xf32>
    %cst_56 = arith.constant dense<0.000000e+00> : vector<2x512xf32>
    %241 = tpu.matmul %237, %46, %cst_56 {dimension_numbers = #tpu.dot_dimension_numbers<[1], [0], [0], [1], [0, 0, 1, 1], [], []>} : vector<2x128xbf16>, vector<128x512xbf16>, vector<2x512xf32> -> vector<2x512xf32>
    %242 = arith.addf %240, %241 : vector<2x512xf32>
    %243 = arith.negf %242 : vector<2x512xf32>
    %244 = math.exp %243 : vector<2x512xf32>
    %cst_57 = arith.constant 1.000000e+00 : f32
    %245 = vector.broadcast %cst_57 : f32 to vector<2x512xf32>
    %246 = arith.addf %245, %244 : vector<2x512xf32>
    %247 = arith.divf %245, %246 : vector<2x512xf32>
    %248 = vector.extract_strided_slice %247 {offsets = [0, 0], sizes = [2, 128], strides = [1, 1]} : vector<2x512xf32> to vector<2x128xf32>
    %249 = vector.extract_strided_slice %247 {offsets = [0, 128], sizes = [2, 128], strides = [1, 1]} : vector<2x512xf32> to vector<2x128xf32>
    %250 = vector.extract_strided_slice %247 {offsets = [0, 384], sizes = [2, 128], strides = [1, 1]} : vector<2x512xf32> to vector<2x128xf32>
    %251 = vector.extract_strided_slice %242 {offsets = [0, 256], sizes = [2, 128], strides = [1, 1]} : vector<2x512xf32> to vector<2x128xf32>
    %252 = math.tanh %251 : vector<2x128xf32>
    %253 = arith.mulf %249, %196 : vector<2x128xf32>
    %254 = arith.mulf %248, %252 : vector<2x128xf32>
    %255 = arith.addf %253, %254 : vector<2x128xf32>
    %256 = math.tanh %255 : vector<2x128xf32>
    %257 = arith.mulf %250, %256 : vector<2x128xf32>
    %258 = tpu.concatenate %237, %238 in 1 : vector<2x128xbf16>, vector<2x128xbf16> -> vector<2x256xbf16>
    %cst_58 = arith.constant dense<0.000000e+00> : vector<2x512xf32>
    %259 = tpu.matmul %258, %48, %cst_58 {dimension_numbers = #tpu.dot_dimension_numbers<[1], [0], [0], [1], [0, 0, 1, 1], [], []>} : vector<2x256xbf16>, vector<256x512xbf16>, vector<2x512xf32> -> vector<2x512xf32>
    %260 = vector.broadcast %52 : vector<1x512xf32> to vector<2x512xf32>
    %261 = arith.addf %259, %260 : vector<2x512xf32>
    %262 = arith.negf %261 : vector<2x512xf32>
    %263 = math.exp %262 : vector<2x512xf32>
    %cst_59 = arith.constant 1.000000e+00 : f32
    %264 = vector.broadcast %cst_59 : f32 to vector<2x512xf32>
    %265 = arith.addf %264, %263 : vector<2x512xf32>
    %266 = arith.divf %264, %265 : vector<2x512xf32>
    %267 = vector.extract_strided_slice %266 {offsets = [0, 0], sizes = [2, 128], strides = [1, 1]} : vector<2x512xf32> to vector<2x128xf32>
    %268 = vector.extract_strided_slice %266 {offsets = [0, 128], sizes = [2, 128], strides = [1, 1]} : vector<2x512xf32> to vector<2x128xf32>
    %269 = vector.extract_strided_slice %266 {offsets = [0, 384], sizes = [2, 128], strides = [1, 1]} : vector<2x512xf32> to vector<2x128xf32>
    %270 = vector.extract_strided_slice %261 {offsets = [0, 256], sizes = [2, 128], strides = [1, 1]} : vector<2x512xf32> to vector<2x128xf32>
    %271 = math.tanh %270 : vector<2x128xf32>
    %272 = arith.mulf %268, %215 : vector<2x128xf32>
    %273 = arith.mulf %267, %271 : vector<2x128xf32>
    %274 = arith.addf %272, %273 : vector<2x128xf32>
    %275 = math.tanh %274 : vector<2x128xf32>
    %276 = arith.mulf %269, %275 : vector<2x128xf32>
    %277 = tpu.concatenate %238, %239 in 1 : vector<2x128xbf16>, vector<2x128xbf16> -> vector<2x256xbf16>
    %cst_60 = arith.constant dense<0.000000e+00> : vector<2x512xf32>
    %278 = tpu.matmul %277, %50, %cst_60 {dimension_numbers = #tpu.dot_dimension_numbers<[1], [0], [0], [1], [0, 0, 1, 1], [], []>} : vector<2x256xbf16>, vector<256x512xbf16>, vector<2x512xf32> -> vector<2x512xf32>
    %279 = vector.broadcast %54 : vector<1x512xf32> to vector<2x512xf32>
    %280 = arith.addf %278, %279 : vector<2x512xf32>
    %281 = arith.negf %280 : vector<2x512xf32>
    %282 = math.exp %281 : vector<2x512xf32>
    %cst_61 = arith.constant 1.000000e+00 : f32
    %283 = vector.broadcast %cst_61 : f32 to vector<2x512xf32>
    %284 = arith.addf %283, %282 : vector<2x512xf32>
    %285 = arith.divf %283, %284 : vector<2x512xf32>
    %286 = vector.extract_strided_slice %285 {offsets = [0, 0], sizes = [2, 128], strides = [1, 1]} : vector<2x512xf32> to vector<2x128xf32>
    %287 = vector.extract_strided_slice %285 {offsets = [0, 128], sizes = [2, 128], strides = [1, 1]} : vector<2x512xf32> to vector<2x128xf32>
    %288 = vector.extract_strided_slice %285 {offsets = [0, 384], sizes = [2, 128], strides = [1, 1]} : vector<2x512xf32> to vector<2x128xf32>
    %289 = vector.extract_strided_slice %280 {offsets = [0, 256], sizes = [2, 128], strides = [1, 1]} : vector<2x512xf32> to vector<2x128xf32>
    %290 = math.tanh %289 : vector<2x128xf32>
    %291 = arith.mulf %287, %234 : vector<2x128xf32>
    %292 = arith.mulf %286, %290 : vector<2x128xf32>
    %293 = arith.addf %291, %292 : vector<2x128xf32>
    %294 = math.tanh %293 : vector<2x128xf32>
    %295 = arith.mulf %288, %294 : vector<2x128xf32>
    %296 = arith.truncf %257 : vector<2x128xf32> to vector<2x128xbf16>
    %297 = arith.truncf %276 : vector<2x128xf32> to vector<2x128xbf16>
    %298 = arith.truncf %295 : vector<2x128xf32> to vector<2x128xbf16>
    %299 = vector.extract_strided_slice %45 {offsets = [10, 0], sizes = [2, 512], strides = [1, 1]} : vector<20x512xf32> to vector<2x512xf32>
    %cst_62 = arith.constant dense<0.000000e+00> : vector<2x512xf32>
    %300 = tpu.matmul %296, %46, %cst_62 {dimension_numbers = #tpu.dot_dimension_numbers<[1], [0], [0], [1], [0, 0, 1, 1], [], []>} : vector<2x128xbf16>, vector<128x512xbf16>, vector<2x512xf32> -> vector<2x512xf32>
    %301 = arith.addf %299, %300 : vector<2x512xf32>
    %302 = arith.negf %301 : vector<2x512xf32>
    %303 = math.exp %302 : vector<2x512xf32>
    %cst_63 = arith.constant 1.000000e+00 : f32
    %304 = vector.broadcast %cst_63 : f32 to vector<2x512xf32>
    %305 = arith.addf %304, %303 : vector<2x512xf32>
    %306 = arith.divf %304, %305 : vector<2x512xf32>
    %307 = vector.extract_strided_slice %306 {offsets = [0, 0], sizes = [2, 128], strides = [1, 1]} : vector<2x512xf32> to vector<2x128xf32>
    %308 = vector.extract_strided_slice %306 {offsets = [0, 128], sizes = [2, 128], strides = [1, 1]} : vector<2x512xf32> to vector<2x128xf32>
    %309 = vector.extract_strided_slice %306 {offsets = [0, 384], sizes = [2, 128], strides = [1, 1]} : vector<2x512xf32> to vector<2x128xf32>
    %310 = vector.extract_strided_slice %301 {offsets = [0, 256], sizes = [2, 128], strides = [1, 1]} : vector<2x512xf32> to vector<2x128xf32>
    %311 = math.tanh %310 : vector<2x128xf32>
    %312 = arith.mulf %308, %255 : vector<2x128xf32>
    %313 = arith.mulf %307, %311 : vector<2x128xf32>
    %314 = arith.addf %312, %313 : vector<2x128xf32>
    %315 = math.tanh %314 : vector<2x128xf32>
    %316 = arith.mulf %309, %315 : vector<2x128xf32>
    %317 = tpu.concatenate %296, %297 in 1 : vector<2x128xbf16>, vector<2x128xbf16> -> vector<2x256xbf16>
    %cst_64 = arith.constant dense<0.000000e+00> : vector<2x512xf32>
    %318 = tpu.matmul %317, %48, %cst_64 {dimension_numbers = #tpu.dot_dimension_numbers<[1], [0], [0], [1], [0, 0, 1, 1], [], []>} : vector<2x256xbf16>, vector<256x512xbf16>, vector<2x512xf32> -> vector<2x512xf32>
    %319 = vector.broadcast %52 : vector<1x512xf32> to vector<2x512xf32>
    %320 = arith.addf %318, %319 : vector<2x512xf32>
    %321 = arith.negf %320 : vector<2x512xf32>
    %322 = math.exp %321 : vector<2x512xf32>
    %cst_65 = arith.constant 1.000000e+00 : f32
    %323 = vector.broadcast %cst_65 : f32 to vector<2x512xf32>
    %324 = arith.addf %323, %322 : vector<2x512xf32>
    %325 = arith.divf %323, %324 : vector<2x512xf32>
    %326 = vector.extract_strided_slice %325 {offsets = [0, 0], sizes = [2, 128], strides = [1, 1]} : vector<2x512xf32> to vector<2x128xf32>
    %327 = vector.extract_strided_slice %325 {offsets = [0, 128], sizes = [2, 128], strides = [1, 1]} : vector<2x512xf32> to vector<2x128xf32>
    %328 = vector.extract_strided_slice %325 {offsets = [0, 384], sizes = [2, 128], strides = [1, 1]} : vector<2x512xf32> to vector<2x128xf32>
    %329 = vector.extract_strided_slice %320 {offsets = [0, 256], sizes = [2, 128], strides = [1, 1]} : vector<2x512xf32> to vector<2x128xf32>
    %330 = math.tanh %329 : vector<2x128xf32>
    %331 = arith.mulf %327, %274 : vector<2x128xf32>
    %332 = arith.mulf %326, %330 : vector<2x128xf32>
    %333 = arith.addf %331, %332 : vector<2x128xf32>
    %334 = math.tanh %333 : vector<2x128xf32>
    %335 = arith.mulf %328, %334 : vector<2x128xf32>
    %336 = tpu.concatenate %297, %298 in 1 : vector<2x128xbf16>, vector<2x128xbf16> -> vector<2x256xbf16>
    %cst_66 = arith.constant dense<0.000000e+00> : vector<2x512xf32>
    %337 = tpu.matmul %336, %50, %cst_66 {dimension_numbers = #tpu.dot_dimension_numbers<[1], [0], [0], [1], [0, 0, 1, 1], [], []>} : vector<2x256xbf16>, vector<256x512xbf16>, vector<2x512xf32> -> vector<2x512xf32>
    %338 = vector.broadcast %54 : vector<1x512xf32> to vector<2x512xf32>
    %339 = arith.addf %337, %338 : vector<2x512xf32>
    %340 = arith.negf %339 : vector<2x512xf32>
    %341 = math.exp %340 : vector<2x512xf32>
    %cst_67 = arith.constant 1.000000e+00 : f32
    %342 = vector.broadcast %cst_67 : f32 to vector<2x512xf32>
    %343 = arith.addf %342, %341 : vector<2x512xf32>
    %344 = arith.divf %342, %343 : vector<2x512xf32>
    %345 = vector.extract_strided_slice %344 {offsets = [0, 0], sizes = [2, 128], strides = [1, 1]} : vector<2x512xf32> to vector<2x128xf32>
    %346 = vector.extract_strided_slice %344 {offsets = [0, 128], sizes = [2, 128], strides = [1, 1]} : vector<2x512xf32> to vector<2x128xf32>
    %347 = vector.extract_strided_slice %344 {offsets = [0, 384], sizes = [2, 128], strides = [1, 1]} : vector<2x512xf32> to vector<2x128xf32>
    %348 = vector.extract_strided_slice %339 {offsets = [0, 256], sizes = [2, 128], strides = [1, 1]} : vector<2x512xf32> to vector<2x128xf32>
    %349 = math.tanh %348 : vector<2x128xf32>
    %350 = arith.mulf %346, %293 : vector<2x128xf32>
    %351 = arith.mulf %345, %349 : vector<2x128xf32>
    %352 = arith.addf %350, %351 : vector<2x128xf32>
    %353 = math.tanh %352 : vector<2x128xf32>
    %354 = arith.mulf %347, %353 : vector<2x128xf32>
    %355 = arith.truncf %316 : vector<2x128xf32> to vector<2x128xbf16>
    %356 = arith.truncf %335 : vector<2x128xf32> to vector<2x128xbf16>
    %357 = arith.truncf %354 : vector<2x128xf32> to vector<2x128xbf16>
    %358 = vector.extract_strided_slice %45 {offsets = [12, 0], sizes = [2, 512], strides = [1, 1]} : vector<20x512xf32> to vector<2x512xf32>
    %cst_68 = arith.constant dense<0.000000e+00> : vector<2x512xf32>
    %359 = tpu.matmul %355, %46, %cst_68 {dimension_numbers = #tpu.dot_dimension_numbers<[1], [0], [0], [1], [0, 0, 1, 1], [], []>} : vector<2x128xbf16>, vector<128x512xbf16>, vector<2x512xf32> -> vector<2x512xf32>
    %360 = arith.addf %358, %359 : vector<2x512xf32>
    %361 = arith.negf %360 : vector<2x512xf32>
    %362 = math.exp %361 : vector<2x512xf32>
    %cst_69 = arith.constant 1.000000e+00 : f32
    %363 = vector.broadcast %cst_69 : f32 to vector<2x512xf32>
    %364 = arith.addf %363, %362 : vector<2x512xf32>
    %365 = arith.divf %363, %364 : vector<2x512xf32>
    %366 = vector.extract_strided_slice %365 {offsets = [0, 0], sizes = [2, 128], strides = [1, 1]} : vector<2x512xf32> to vector<2x128xf32>
    %367 = vector.extract_strided_slice %365 {offsets = [0, 128], sizes = [2, 128], strides = [1, 1]} : vector<2x512xf32> to vector<2x128xf32>
    %368 = vector.extract_strided_slice %365 {offsets = [0, 384], sizes = [2, 128], strides = [1, 1]} : vector<2x512xf32> to vector<2x128xf32>
    %369 = vector.extract_strided_slice %360 {offsets = [0, 256], sizes = [2, 128], strides = [1, 1]} : vector<2x512xf32> to vector<2x128xf32>
    %370 = math.tanh %369 : vector<2x128xf32>
    %371 = arith.mulf %367, %314 : vector<2x128xf32>
    %372 = arith.mulf %366, %370 : vector<2x128xf32>
    %373 = arith.addf %371, %372 : vector<2x128xf32>
    %374 = math.tanh %373 : vector<2x128xf32>
    %375 = arith.mulf %368, %374 : vector<2x128xf32>
    %376 = tpu.concatenate %355, %356 in 1 : vector<2x128xbf16>, vector<2x128xbf16> -> vector<2x256xbf16>
    %cst_70 = arith.constant dense<0.000000e+00> : vector<2x512xf32>
    %377 = tpu.matmul %376, %48, %cst_70 {dimension_numbers = #tpu.dot_dimension_numbers<[1], [0], [0], [1], [0, 0, 1, 1], [], []>} : vector<2x256xbf16>, vector<256x512xbf16>, vector<2x512xf32> -> vector<2x512xf32>
    %378 = vector.broadcast %52 : vector<1x512xf32> to vector<2x512xf32>
    %379 = arith.addf %377, %378 : vector<2x512xf32>
    %380 = arith.negf %379 : vector<2x512xf32>
    %381 = math.exp %380 : vector<2x512xf32>
    %cst_71 = arith.constant 1.000000e+00 : f32
    %382 = vector.broadcast %cst_71 : f32 to vector<2x512xf32>
    %383 = arith.addf %382, %381 : vector<2x512xf32>
    %384 = arith.divf %382, %383 : vector<2x512xf32>
    %385 = vector.extract_strided_slice %384 {offsets = [0, 0], sizes = [2, 128], strides = [1, 1]} : vector<2x512xf32> to vector<2x128xf32>
    %386 = vector.extract_strided_slice %384 {offsets = [0, 128], sizes = [2, 128], strides = [1, 1]} : vector<2x512xf32> to vector<2x128xf32>
    %387 = vector.extract_strided_slice %384 {offsets = [0, 384], sizes = [2, 128], strides = [1, 1]} : vector<2x512xf32> to vector<2x128xf32>
    %388 = vector.extract_strided_slice %379 {offsets = [0, 256], sizes = [2, 128], strides = [1, 1]} : vector<2x512xf32> to vector<2x128xf32>
    %389 = math.tanh %388 : vector<2x128xf32>
    %390 = arith.mulf %386, %333 : vector<2x128xf32>
    %391 = arith.mulf %385, %389 : vector<2x128xf32>
    %392 = arith.addf %390, %391 : vector<2x128xf32>
    %393 = math.tanh %392 : vector<2x128xf32>
    %394 = arith.mulf %387, %393 : vector<2x128xf32>
    %395 = tpu.concatenate %356, %357 in 1 : vector<2x128xbf16>, vector<2x128xbf16> -> vector<2x256xbf16>
    %cst_72 = arith.constant dense<0.000000e+00> : vector<2x512xf32>
    %396 = tpu.matmul %395, %50, %cst_72 {dimension_numbers = #tpu.dot_dimension_numbers<[1], [0], [0], [1], [0, 0, 1, 1], [], []>} : vector<2x256xbf16>, vector<256x512xbf16>, vector<2x512xf32> -> vector<2x512xf32>
    %397 = vector.broadcast %54 : vector<1x512xf32> to vector<2x512xf32>
    %398 = arith.addf %396, %397 : vector<2x512xf32>
    %399 = arith.negf %398 : vector<2x512xf32>
    %400 = math.exp %399 : vector<2x512xf32>
    %cst_73 = arith.constant 1.000000e+00 : f32
    %401 = vector.broadcast %cst_73 : f32 to vector<2x512xf32>
    %402 = arith.addf %401, %400 : vector<2x512xf32>
    %403 = arith.divf %401, %402 : vector<2x512xf32>
    %404 = vector.extract_strided_slice %403 {offsets = [0, 0], sizes = [2, 128], strides = [1, 1]} : vector<2x512xf32> to vector<2x128xf32>
    %405 = vector.extract_strided_slice %403 {offsets = [0, 128], sizes = [2, 128], strides = [1, 1]} : vector<2x512xf32> to vector<2x128xf32>
    %406 = vector.extract_strided_slice %403 {offsets = [0, 384], sizes = [2, 128], strides = [1, 1]} : vector<2x512xf32> to vector<2x128xf32>
    %407 = vector.extract_strided_slice %398 {offsets = [0, 256], sizes = [2, 128], strides = [1, 1]} : vector<2x512xf32> to vector<2x128xf32>
    %408 = math.tanh %407 : vector<2x128xf32>
    %409 = arith.mulf %405, %352 : vector<2x128xf32>
    %410 = arith.mulf %404, %408 : vector<2x128xf32>
    %411 = arith.addf %409, %410 : vector<2x128xf32>
    %412 = math.tanh %411 : vector<2x128xf32>
    %413 = arith.mulf %406, %412 : vector<2x128xf32>
    %414 = arith.truncf %375 : vector<2x128xf32> to vector<2x128xbf16>
    %415 = arith.truncf %394 : vector<2x128xf32> to vector<2x128xbf16>
    %416 = arith.truncf %413 : vector<2x128xf32> to vector<2x128xbf16>
    %417 = vector.extract_strided_slice %45 {offsets = [14, 0], sizes = [2, 512], strides = [1, 1]} : vector<20x512xf32> to vector<2x512xf32>
    %cst_74 = arith.constant dense<0.000000e+00> : vector<2x512xf32>
    %418 = tpu.matmul %414, %46, %cst_74 {dimension_numbers = #tpu.dot_dimension_numbers<[1], [0], [0], [1], [0, 0, 1, 1], [], []>} : vector<2x128xbf16>, vector<128x512xbf16>, vector<2x512xf32> -> vector<2x512xf32>
    %419 = arith.addf %417, %418 : vector<2x512xf32>
    %420 = arith.negf %419 : vector<2x512xf32>
    %421 = math.exp %420 : vector<2x512xf32>
    %cst_75 = arith.constant 1.000000e+00 : f32
    %422 = vector.broadcast %cst_75 : f32 to vector<2x512xf32>
    %423 = arith.addf %422, %421 : vector<2x512xf32>
    %424 = arith.divf %422, %423 : vector<2x512xf32>
    %425 = vector.extract_strided_slice %424 {offsets = [0, 0], sizes = [2, 128], strides = [1, 1]} : vector<2x512xf32> to vector<2x128xf32>
    %426 = vector.extract_strided_slice %424 {offsets = [0, 128], sizes = [2, 128], strides = [1, 1]} : vector<2x512xf32> to vector<2x128xf32>
    %427 = vector.extract_strided_slice %424 {offsets = [0, 384], sizes = [2, 128], strides = [1, 1]} : vector<2x512xf32> to vector<2x128xf32>
    %428 = vector.extract_strided_slice %419 {offsets = [0, 256], sizes = [2, 128], strides = [1, 1]} : vector<2x512xf32> to vector<2x128xf32>
    %429 = math.tanh %428 : vector<2x128xf32>
    %430 = arith.mulf %426, %373 : vector<2x128xf32>
    %431 = arith.mulf %425, %429 : vector<2x128xf32>
    %432 = arith.addf %430, %431 : vector<2x128xf32>
    %433 = math.tanh %432 : vector<2x128xf32>
    %434 = arith.mulf %427, %433 : vector<2x128xf32>
    %435 = tpu.concatenate %414, %415 in 1 : vector<2x128xbf16>, vector<2x128xbf16> -> vector<2x256xbf16>
    %cst_76 = arith.constant dense<0.000000e+00> : vector<2x512xf32>
    %436 = tpu.matmul %435, %48, %cst_76 {dimension_numbers = #tpu.dot_dimension_numbers<[1], [0], [0], [1], [0, 0, 1, 1], [], []>} : vector<2x256xbf16>, vector<256x512xbf16>, vector<2x512xf32> -> vector<2x512xf32>
    %437 = vector.broadcast %52 : vector<1x512xf32> to vector<2x512xf32>
    %438 = arith.addf %436, %437 : vector<2x512xf32>
    %439 = arith.negf %438 : vector<2x512xf32>
    %440 = math.exp %439 : vector<2x512xf32>
    %cst_77 = arith.constant 1.000000e+00 : f32
    %441 = vector.broadcast %cst_77 : f32 to vector<2x512xf32>
    %442 = arith.addf %441, %440 : vector<2x512xf32>
    %443 = arith.divf %441, %442 : vector<2x512xf32>
    %444 = vector.extract_strided_slice %443 {offsets = [0, 0], sizes = [2, 128], strides = [1, 1]} : vector<2x512xf32> to vector<2x128xf32>
    %445 = vector.extract_strided_slice %443 {offsets = [0, 128], sizes = [2, 128], strides = [1, 1]} : vector<2x512xf32> to vector<2x128xf32>
    %446 = vector.extract_strided_slice %443 {offsets = [0, 384], sizes = [2, 128], strides = [1, 1]} : vector<2x512xf32> to vector<2x128xf32>
    %447 = vector.extract_strided_slice %438 {offsets = [0, 256], sizes = [2, 128], strides = [1, 1]} : vector<2x512xf32> to vector<2x128xf32>
    %448 = math.tanh %447 : vector<2x128xf32>
    %449 = arith.mulf %445, %392 : vector<2x128xf32>
    %450 = arith.mulf %444, %448 : vector<2x128xf32>
    %451 = arith.addf %449, %450 : vector<2x128xf32>
    %452 = math.tanh %451 : vector<2x128xf32>
    %453 = arith.mulf %446, %452 : vector<2x128xf32>
    %454 = tpu.concatenate %415, %416 in 1 : vector<2x128xbf16>, vector<2x128xbf16> -> vector<2x256xbf16>
    %cst_78 = arith.constant dense<0.000000e+00> : vector<2x512xf32>
    %455 = tpu.matmul %454, %50, %cst_78 {dimension_numbers = #tpu.dot_dimension_numbers<[1], [0], [0], [1], [0, 0, 1, 1], [], []>} : vector<2x256xbf16>, vector<256x512xbf16>, vector<2x512xf32> -> vector<2x512xf32>
    %456 = vector.broadcast %54 : vector<1x512xf32> to vector<2x512xf32>
    %457 = arith.addf %455, %456 : vector<2x512xf32>
    %458 = arith.negf %457 : vector<2x512xf32>
    %459 = math.exp %458 : vector<2x512xf32>
    %cst_79 = arith.constant 1.000000e+00 : f32
    %460 = vector.broadcast %cst_79 : f32 to vector<2x512xf32>
    %461 = arith.addf %460, %459 : vector<2x512xf32>
    %462 = arith.divf %460, %461 : vector<2x512xf32>
    %463 = vector.extract_strided_slice %462 {offsets = [0, 0], sizes = [2, 128], strides = [1, 1]} : vector<2x512xf32> to vector<2x128xf32>
    %464 = vector.extract_strided_slice %462 {offsets = [0, 128], sizes = [2, 128], strides = [1, 1]} : vector<2x512xf32> to vector<2x128xf32>
    %465 = vector.extract_strided_slice %462 {offsets = [0, 384], sizes = [2, 128], strides = [1, 1]} : vector<2x512xf32> to vector<2x128xf32>
    %466 = vector.extract_strided_slice %457 {offsets = [0, 256], sizes = [2, 128], strides = [1, 1]} : vector<2x512xf32> to vector<2x128xf32>
    %467 = math.tanh %466 : vector<2x128xf32>
    %468 = arith.mulf %464, %411 : vector<2x128xf32>
    %469 = arith.mulf %463, %467 : vector<2x128xf32>
    %470 = arith.addf %468, %469 : vector<2x128xf32>
    %471 = math.tanh %470 : vector<2x128xf32>
    %472 = arith.mulf %465, %471 : vector<2x128xf32>
    %473 = arith.truncf %434 : vector<2x128xf32> to vector<2x128xbf16>
    %474 = arith.truncf %453 : vector<2x128xf32> to vector<2x128xbf16>
    %475 = arith.truncf %472 : vector<2x128xf32> to vector<2x128xbf16>
    %476 = vector.extract_strided_slice %45 {offsets = [16, 0], sizes = [2, 512], strides = [1, 1]} : vector<20x512xf32> to vector<2x512xf32>
    %cst_80 = arith.constant dense<0.000000e+00> : vector<2x512xf32>
    %477 = tpu.matmul %473, %46, %cst_80 {dimension_numbers = #tpu.dot_dimension_numbers<[1], [0], [0], [1], [0, 0, 1, 1], [], []>} : vector<2x128xbf16>, vector<128x512xbf16>, vector<2x512xf32> -> vector<2x512xf32>
    %478 = arith.addf %476, %477 : vector<2x512xf32>
    %479 = arith.negf %478 : vector<2x512xf32>
    %480 = math.exp %479 : vector<2x512xf32>
    %cst_81 = arith.constant 1.000000e+00 : f32
    %481 = vector.broadcast %cst_81 : f32 to vector<2x512xf32>
    %482 = arith.addf %481, %480 : vector<2x512xf32>
    %483 = arith.divf %481, %482 : vector<2x512xf32>
    %484 = vector.extract_strided_slice %483 {offsets = [0, 0], sizes = [2, 128], strides = [1, 1]} : vector<2x512xf32> to vector<2x128xf32>
    %485 = vector.extract_strided_slice %483 {offsets = [0, 128], sizes = [2, 128], strides = [1, 1]} : vector<2x512xf32> to vector<2x128xf32>
    %486 = vector.extract_strided_slice %483 {offsets = [0, 384], sizes = [2, 128], strides = [1, 1]} : vector<2x512xf32> to vector<2x128xf32>
    %487 = vector.extract_strided_slice %478 {offsets = [0, 256], sizes = [2, 128], strides = [1, 1]} : vector<2x512xf32> to vector<2x128xf32>
    %488 = math.tanh %487 : vector<2x128xf32>
    %489 = arith.mulf %485, %432 : vector<2x128xf32>
    %490 = arith.mulf %484, %488 : vector<2x128xf32>
    %491 = arith.addf %489, %490 : vector<2x128xf32>
    %492 = math.tanh %491 : vector<2x128xf32>
    %493 = arith.mulf %486, %492 : vector<2x128xf32>
    %494 = tpu.concatenate %473, %474 in 1 : vector<2x128xbf16>, vector<2x128xbf16> -> vector<2x256xbf16>
    %cst_82 = arith.constant dense<0.000000e+00> : vector<2x512xf32>
    %495 = tpu.matmul %494, %48, %cst_82 {dimension_numbers = #tpu.dot_dimension_numbers<[1], [0], [0], [1], [0, 0, 1, 1], [], []>} : vector<2x256xbf16>, vector<256x512xbf16>, vector<2x512xf32> -> vector<2x512xf32>
    %496 = vector.broadcast %52 : vector<1x512xf32> to vector<2x512xf32>
    %497 = arith.addf %495, %496 : vector<2x512xf32>
    %498 = arith.negf %497 : vector<2x512xf32>
    %499 = math.exp %498 : vector<2x512xf32>
    %cst_83 = arith.constant 1.000000e+00 : f32
    %500 = vector.broadcast %cst_83 : f32 to vector<2x512xf32>
    %501 = arith.addf %500, %499 : vector<2x512xf32>
    %502 = arith.divf %500, %501 : vector<2x512xf32>
    %503 = vector.extract_strided_slice %502 {offsets = [0, 0], sizes = [2, 128], strides = [1, 1]} : vector<2x512xf32> to vector<2x128xf32>
    %504 = vector.extract_strided_slice %502 {offsets = [0, 128], sizes = [2, 128], strides = [1, 1]} : vector<2x512xf32> to vector<2x128xf32>
    %505 = vector.extract_strided_slice %502 {offsets = [0, 384], sizes = [2, 128], strides = [1, 1]} : vector<2x512xf32> to vector<2x128xf32>
    %506 = vector.extract_strided_slice %497 {offsets = [0, 256], sizes = [2, 128], strides = [1, 1]} : vector<2x512xf32> to vector<2x128xf32>
    %507 = math.tanh %506 : vector<2x128xf32>
    %508 = arith.mulf %504, %451 : vector<2x128xf32>
    %509 = arith.mulf %503, %507 : vector<2x128xf32>
    %510 = arith.addf %508, %509 : vector<2x128xf32>
    %511 = math.tanh %510 : vector<2x128xf32>
    %512 = arith.mulf %505, %511 : vector<2x128xf32>
    %513 = tpu.concatenate %474, %475 in 1 : vector<2x128xbf16>, vector<2x128xbf16> -> vector<2x256xbf16>
    %cst_84 = arith.constant dense<0.000000e+00> : vector<2x512xf32>
    %514 = tpu.matmul %513, %50, %cst_84 {dimension_numbers = #tpu.dot_dimension_numbers<[1], [0], [0], [1], [0, 0, 1, 1], [], []>} : vector<2x256xbf16>, vector<256x512xbf16>, vector<2x512xf32> -> vector<2x512xf32>
    %515 = vector.broadcast %54 : vector<1x512xf32> to vector<2x512xf32>
    %516 = arith.addf %514, %515 : vector<2x512xf32>
    %517 = arith.negf %516 : vector<2x512xf32>
    %518 = math.exp %517 : vector<2x512xf32>
    %cst_85 = arith.constant 1.000000e+00 : f32
    %519 = vector.broadcast %cst_85 : f32 to vector<2x512xf32>
    %520 = arith.addf %519, %518 : vector<2x512xf32>
    %521 = arith.divf %519, %520 : vector<2x512xf32>
    %522 = vector.extract_strided_slice %521 {offsets = [0, 0], sizes = [2, 128], strides = [1, 1]} : vector<2x512xf32> to vector<2x128xf32>
    %523 = vector.extract_strided_slice %521 {offsets = [0, 128], sizes = [2, 128], strides = [1, 1]} : vector<2x512xf32> to vector<2x128xf32>
    %524 = vector.extract_strided_slice %521 {offsets = [0, 384], sizes = [2, 128], strides = [1, 1]} : vector<2x512xf32> to vector<2x128xf32>
    %525 = vector.extract_strided_slice %516 {offsets = [0, 256], sizes = [2, 128], strides = [1, 1]} : vector<2x512xf32> to vector<2x128xf32>
    %526 = math.tanh %525 : vector<2x128xf32>
    %527 = arith.mulf %523, %470 : vector<2x128xf32>
    %528 = arith.mulf %522, %526 : vector<2x128xf32>
    %529 = arith.addf %527, %528 : vector<2x128xf32>
    %530 = math.tanh %529 : vector<2x128xf32>
    %531 = arith.mulf %524, %530 : vector<2x128xf32>
    %532 = arith.truncf %493 : vector<2x128xf32> to vector<2x128xbf16>
    %533 = arith.truncf %512 : vector<2x128xf32> to vector<2x128xbf16>
    %534 = arith.truncf %531 : vector<2x128xf32> to vector<2x128xbf16>
    %535 = vector.extract_strided_slice %45 {offsets = [18, 0], sizes = [2, 512], strides = [1, 1]} : vector<20x512xf32> to vector<2x512xf32>
    %cst_86 = arith.constant dense<0.000000e+00> : vector<2x512xf32>
    %536 = tpu.matmul %532, %46, %cst_86 {dimension_numbers = #tpu.dot_dimension_numbers<[1], [0], [0], [1], [0, 0, 1, 1], [], []>} : vector<2x128xbf16>, vector<128x512xbf16>, vector<2x512xf32> -> vector<2x512xf32>
    %537 = arith.addf %535, %536 : vector<2x512xf32>
    %538 = arith.negf %537 : vector<2x512xf32>
    %539 = math.exp %538 : vector<2x512xf32>
    %cst_87 = arith.constant 1.000000e+00 : f32
    %540 = vector.broadcast %cst_87 : f32 to vector<2x512xf32>
    %541 = arith.addf %540, %539 : vector<2x512xf32>
    %542 = arith.divf %540, %541 : vector<2x512xf32>
    %543 = vector.extract_strided_slice %542 {offsets = [0, 0], sizes = [2, 128], strides = [1, 1]} : vector<2x512xf32> to vector<2x128xf32>
    %544 = vector.extract_strided_slice %542 {offsets = [0, 128], sizes = [2, 128], strides = [1, 1]} : vector<2x512xf32> to vector<2x128xf32>
    %545 = vector.extract_strided_slice %542 {offsets = [0, 384], sizes = [2, 128], strides = [1, 1]} : vector<2x512xf32> to vector<2x128xf32>
    %546 = vector.extract_strided_slice %537 {offsets = [0, 256], sizes = [2, 128], strides = [1, 1]} : vector<2x512xf32> to vector<2x128xf32>
    %547 = math.tanh %546 : vector<2x128xf32>
    %548 = arith.mulf %544, %491 : vector<2x128xf32>
    %549 = arith.mulf %543, %547 : vector<2x128xf32>
    %550 = arith.addf %548, %549 : vector<2x128xf32>
    %551 = math.tanh %550 : vector<2x128xf32>
    %552 = arith.mulf %545, %551 : vector<2x128xf32>
    %553 = tpu.concatenate %532, %533 in 1 : vector<2x128xbf16>, vector<2x128xbf16> -> vector<2x256xbf16>
    %cst_88 = arith.constant dense<0.000000e+00> : vector<2x512xf32>
    %554 = tpu.matmul %553, %48, %cst_88 {dimension_numbers = #tpu.dot_dimension_numbers<[1], [0], [0], [1], [0, 0, 1, 1], [], []>} : vector<2x256xbf16>, vector<256x512xbf16>, vector<2x512xf32> -> vector<2x512xf32>
    %555 = vector.broadcast %52 : vector<1x512xf32> to vector<2x512xf32>
    %556 = arith.addf %554, %555 : vector<2x512xf32>
    %557 = arith.negf %556 : vector<2x512xf32>
    %558 = math.exp %557 : vector<2x512xf32>
    %cst_89 = arith.constant 1.000000e+00 : f32
    %559 = vector.broadcast %cst_89 : f32 to vector<2x512xf32>
    %560 = arith.addf %559, %558 : vector<2x512xf32>
    %561 = arith.divf %559, %560 : vector<2x512xf32>
    %562 = vector.extract_strided_slice %561 {offsets = [0, 0], sizes = [2, 128], strides = [1, 1]} : vector<2x512xf32> to vector<2x128xf32>
    %563 = vector.extract_strided_slice %561 {offsets = [0, 128], sizes = [2, 128], strides = [1, 1]} : vector<2x512xf32> to vector<2x128xf32>
    %564 = vector.extract_strided_slice %561 {offsets = [0, 384], sizes = [2, 128], strides = [1, 1]} : vector<2x512xf32> to vector<2x128xf32>
    %565 = vector.extract_strided_slice %556 {offsets = [0, 256], sizes = [2, 128], strides = [1, 1]} : vector<2x512xf32> to vector<2x128xf32>
    %566 = math.tanh %565 : vector<2x128xf32>
    %567 = arith.mulf %563, %510 : vector<2x128xf32>
    %568 = arith.mulf %562, %566 : vector<2x128xf32>
    %569 = arith.addf %567, %568 : vector<2x128xf32>
    %570 = math.tanh %569 : vector<2x128xf32>
    %571 = arith.mulf %564, %570 : vector<2x128xf32>
    %572 = tpu.concatenate %533, %534 in 1 : vector<2x128xbf16>, vector<2x128xbf16> -> vector<2x256xbf16>
    %cst_90 = arith.constant dense<0.000000e+00> : vector<2x512xf32>
    %573 = tpu.matmul %572, %50, %cst_90 {dimension_numbers = #tpu.dot_dimension_numbers<[1], [0], [0], [1], [0, 0, 1, 1], [], []>} : vector<2x256xbf16>, vector<256x512xbf16>, vector<2x512xf32> -> vector<2x512xf32>
    %574 = vector.broadcast %54 : vector<1x512xf32> to vector<2x512xf32>
    %575 = arith.addf %573, %574 : vector<2x512xf32>
    %576 = arith.negf %575 : vector<2x512xf32>
    %577 = math.exp %576 : vector<2x512xf32>
    %cst_91 = arith.constant 1.000000e+00 : f32
    %578 = vector.broadcast %cst_91 : f32 to vector<2x512xf32>
    %579 = arith.addf %578, %577 : vector<2x512xf32>
    %580 = arith.divf %578, %579 : vector<2x512xf32>
    %581 = vector.extract_strided_slice %580 {offsets = [0, 0], sizes = [2, 128], strides = [1, 1]} : vector<2x512xf32> to vector<2x128xf32>
    %582 = vector.extract_strided_slice %580 {offsets = [0, 128], sizes = [2, 128], strides = [1, 1]} : vector<2x512xf32> to vector<2x128xf32>
    %583 = vector.extract_strided_slice %580 {offsets = [0, 384], sizes = [2, 128], strides = [1, 1]} : vector<2x512xf32> to vector<2x128xf32>
    %584 = vector.extract_strided_slice %575 {offsets = [0, 256], sizes = [2, 128], strides = [1, 1]} : vector<2x512xf32> to vector<2x128xf32>
    %585 = math.tanh %584 : vector<2x128xf32>
    %586 = arith.mulf %582, %529 : vector<2x128xf32>
    %587 = arith.mulf %581, %585 : vector<2x128xf32>
    %588 = arith.addf %586, %587 : vector<2x128xf32>
    %589 = math.tanh %588 : vector<2x128xf32>
    %590 = arith.mulf %583, %589 : vector<2x128xf32>
    %591 = arith.truncf %552 : vector<2x128xf32> to vector<2x128xbf16>
    %592 = arith.truncf %571 : vector<2x128xf32> to vector<2x128xbf16>
    %593 = arith.truncf %590 : vector<2x128xf32> to vector<2x128xbf16>
    %594 = tpu.concatenate %591, %592 in 1 : vector<2x128xbf16>, vector<2x128xbf16> -> vector<2x256xbf16>
    %cst_92 = arith.constant dense<0.000000e+00> : vector<2x512xf32>
    %595 = tpu.matmul %594, %48, %cst_92 {dimension_numbers = #tpu.dot_dimension_numbers<[1], [0], [0], [1], [0, 0, 1, 1], [], []>} : vector<2x256xbf16>, vector<256x512xbf16>, vector<2x512xf32> -> vector<2x512xf32>
    %596 = vector.broadcast %52 : vector<1x512xf32> to vector<2x512xf32>
    %597 = arith.addf %595, %596 : vector<2x512xf32>
    %598 = arith.negf %597 : vector<2x512xf32>
    %599 = math.exp %598 : vector<2x512xf32>
    %cst_93 = arith.constant 1.000000e+00 : f32
    %600 = vector.broadcast %cst_93 : f32 to vector<2x512xf32>
    %601 = arith.addf %600, %599 : vector<2x512xf32>
    %602 = arith.divf %600, %601 : vector<2x512xf32>
    %603 = vector.extract_strided_slice %602 {offsets = [0, 0], sizes = [2, 128], strides = [1, 1]} : vector<2x512xf32> to vector<2x128xf32>
    %604 = vector.extract_strided_slice %602 {offsets = [0, 128], sizes = [2, 128], strides = [1, 1]} : vector<2x512xf32> to vector<2x128xf32>
    %605 = vector.extract_strided_slice %602 {offsets = [0, 384], sizes = [2, 128], strides = [1, 1]} : vector<2x512xf32> to vector<2x128xf32>
    %606 = vector.extract_strided_slice %597 {offsets = [0, 256], sizes = [2, 128], strides = [1, 1]} : vector<2x512xf32> to vector<2x128xf32>
    %607 = math.tanh %606 : vector<2x128xf32>
    %608 = arith.mulf %604, %569 : vector<2x128xf32>
    %609 = arith.mulf %603, %607 : vector<2x128xf32>
    %610 = arith.addf %608, %609 : vector<2x128xf32>
    %611 = math.tanh %610 : vector<2x128xf32>
    %612 = arith.mulf %605, %611 : vector<2x128xf32>
    %613 = tpu.concatenate %592, %593 in 1 : vector<2x128xbf16>, vector<2x128xbf16> -> vector<2x256xbf16>
    %cst_94 = arith.constant dense<0.000000e+00> : vector<2x512xf32>
    %614 = tpu.matmul %613, %50, %cst_94 {dimension_numbers = #tpu.dot_dimension_numbers<[1], [0], [0], [1], [0, 0, 1, 1], [], []>} : vector<2x256xbf16>, vector<256x512xbf16>, vector<2x512xf32> -> vector<2x512xf32>
    %615 = vector.broadcast %54 : vector<1x512xf32> to vector<2x512xf32>
    %616 = arith.addf %614, %615 : vector<2x512xf32>
    %617 = arith.negf %616 : vector<2x512xf32>
    %618 = math.exp %617 : vector<2x512xf32>
    %cst_95 = arith.constant 1.000000e+00 : f32
    %619 = vector.broadcast %cst_95 : f32 to vector<2x512xf32>
    %620 = arith.addf %619, %618 : vector<2x512xf32>
    %621 = arith.divf %619, %620 : vector<2x512xf32>
    %622 = vector.extract_strided_slice %621 {offsets = [0, 0], sizes = [2, 128], strides = [1, 1]} : vector<2x512xf32> to vector<2x128xf32>
    %623 = vector.extract_strided_slice %621 {offsets = [0, 128], sizes = [2, 128], strides = [1, 1]} : vector<2x512xf32> to vector<2x128xf32>
    %624 = vector.extract_strided_slice %621 {offsets = [0, 384], sizes = [2, 128], strides = [1, 1]} : vector<2x512xf32> to vector<2x128xf32>
    %625 = vector.extract_strided_slice %616 {offsets = [0, 256], sizes = [2, 128], strides = [1, 1]} : vector<2x512xf32> to vector<2x128xf32>
    %626 = math.tanh %625 : vector<2x128xf32>
    %627 = arith.mulf %623, %588 : vector<2x128xf32>
    %628 = arith.mulf %622, %626 : vector<2x128xf32>
    %629 = arith.addf %627, %628 : vector<2x128xf32>
    %630 = math.tanh %629 : vector<2x128xf32>
    %631 = arith.mulf %624, %630 : vector<2x128xf32>
    %632 = arith.truncf %612 : vector<2x128xf32> to vector<2x128xbf16>
    %633 = arith.truncf %631 : vector<2x128xf32> to vector<2x128xbf16>
    %634 = tpu.concatenate %632, %633 in 1 : vector<2x128xbf16>, vector<2x128xbf16> -> vector<2x256xbf16>
    %cst_96 = arith.constant dense<0.000000e+00> : vector<2x512xf32>
    %635 = tpu.matmul %634, %50, %cst_96 {dimension_numbers = #tpu.dot_dimension_numbers<[1], [0], [0], [1], [0, 0, 1, 1], [], []>} : vector<2x256xbf16>, vector<256x512xbf16>, vector<2x512xf32> -> vector<2x512xf32>
    %636 = vector.broadcast %54 : vector<1x512xf32> to vector<2x512xf32>
    %637 = arith.addf %635, %636 : vector<2x512xf32>
    %638 = arith.negf %637 : vector<2x512xf32>
    %639 = math.exp %638 : vector<2x512xf32>
    %cst_97 = arith.constant 1.000000e+00 : f32
    %640 = vector.broadcast %cst_97 : f32 to vector<2x512xf32>
    %641 = arith.addf %640, %639 : vector<2x512xf32>
    %642 = arith.divf %640, %641 : vector<2x512xf32>
    %643 = vector.extract_strided_slice %642 {offsets = [0, 0], sizes = [2, 128], strides = [1, 1]} : vector<2x512xf32> to vector<2x128xf32>
    %644 = vector.extract_strided_slice %642 {offsets = [0, 128], sizes = [2, 128], strides = [1, 1]} : vector<2x512xf32> to vector<2x128xf32>
    %645 = vector.extract_strided_slice %642 {offsets = [0, 384], sizes = [2, 128], strides = [1, 1]} : vector<2x512xf32> to vector<2x128xf32>
    %646 = vector.extract_strided_slice %637 {offsets = [0, 256], sizes = [2, 128], strides = [1, 1]} : vector<2x512xf32> to vector<2x128xf32>
    %647 = math.tanh %646 : vector<2x128xf32>
    %648 = arith.mulf %644, %629 : vector<2x128xf32>
    %649 = arith.mulf %643, %647 : vector<2x128xf32>
    %650 = arith.addf %648, %649 : vector<2x128xf32>
    %651 = math.tanh %650 : vector<2x128xf32>
    %652 = arith.mulf %645, %651 : vector<2x128xf32>
    %c0_98 = arith.constant 0 : index
    %c0_99 = arith.constant 0 : index
    %653 = vector.load %arg10[%c0_98, %c0_99] : memref<1x128xf32, #tpu.memory_space<vmem>>, vector<1x128xf32>
    %654 = vector.broadcast %653 : vector<1x128xf32> to vector<2x128xf32>
    %655 = arith.mulf %652, %654 : vector<2x128xf32>
    %cst_100 = arith.constant dense<0.000000e+00> : vector<2xf32>
    %656 = vector.multi_reduction <add>, %655, %cst_100 [1] : vector<2x128xf32> to vector<2xf32>
    %657 = vector.shape_cast %656 : vector<2xf32> to vector<2x1xf32>
    %c0_101 = arith.constant 0 : index
    %c0_102 = arith.constant 0 : index
    %658 = vector.load %arg11[%c0_101, %c0_102] : memref<1x1xf32, #tpu.memory_space<vmem>>, vector<1x1xf32>
    %659 = vector.broadcast %658 : vector<1x1xf32> to vector<2x1xf32>
    %660 = arith.addf %657, %659 : vector<2x1xf32>
    %c0_103 = arith.constant 0 : index
    %c0_104 = arith.constant 0 : index
    %661 = vector.load %arg12[%c0_103, %c0_104] : memref<2x1xf32, #tpu.memory_space<vmem>>, vector<2x1xf32>
    tpu.vector_store %arg12[%c0_103, %c0_104], %660 {strides = array<i32>} : memref<2x1xf32, #tpu.memory_space<vmem>>, vector<2x1xf32>,
    return
  }
  func.func @transform_0(%arg0: i32) -> (i32, i32) {
    %c0_i32 = arith.constant 0 : i32
    %c0_i32_0 = arith.constant 0 : i32
    %c0_i32_1 = arith.constant 0 : i32
    return %c0_i32, %c0_i32_0 : i32, i32
  }
  func.func @transform_1(%arg0: i32) -> (i32, i32) {
    %c0_i32 = arith.constant 0 : i32
    %c0_i32_0 = arith.constant 0 : i32
    %c0_i32_1 = arith.constant 0 : i32
    return %c0_i32, %c0_i32_0 : i32, i32
  }
  func.func @transform_2(%arg0: i32) -> (i32, i32) {
    %c0_i32 = arith.constant 0 : i32
    %c0_i32_0 = arith.constant 0 : i32
    %c0_i32_1 = arith.constant 0 : i32
    return %c0_i32, %c0_i32_0 : i32, i32
  }
  func.func @transform_3(%arg0: i32) -> (i32, i32) {
    %c0_i32 = arith.constant 0 : i32
    %c0_i32_0 = arith.constant 0 : i32
    %c0_i32_1 = arith.constant 0 : i32
    return %c0_i32, %c0_i32_0 : i32, i32
  }
  func.func @transform_4(%arg0: i32) -> (i32, i32) {
    %c0_i32 = arith.constant 0 : i32
    %c0_i32_0 = arith.constant 0 : i32
    %c0_i32_1 = arith.constant 0 : i32
    return %c0_i32, %c0_i32_0 : i32, i32
  }
  func.func @transform_5(%arg0: i32) -> (i32, i32) {
    %c0_i32 = arith.constant 0 : i32
    %c0_i32_0 = arith.constant 0 : i32
    %c0_i32_1 = arith.constant 0 : i32
    return %c0_i32, %c0_i32_0 : i32, i32
  }
  func.func @transform_6(%arg0: i32) -> (i32, i32) {
    %c0_i32 = arith.constant 0 : i32
    %c0_i32_0 = arith.constant 0 : i32
    %c0_i32_1 = arith.constant 0 : i32
    return %c0_i32, %c0_i32_0 : i32, i32
  }
  func.func @transform_7(%arg0: i32) -> (i32, i32, i32) {
    %c0_i32 = arith.constant 0 : i32
    %c0_i32_0 = arith.constant 0 : i32
    %c0_i32_1 = arith.constant 0 : i32
    %c0_i32_2 = arith.constant 0 : i32
    return %c0_i32, %c0_i32_0, %c0_i32_1 : i32, i32, i32
  }
  func.func @transform_8(%arg0: i32) -> (i32, i32, i32) {
    %c0_i32 = arith.constant 0 : i32
    %c0_i32_0 = arith.constant 0 : i32
    %c0_i32_1 = arith.constant 0 : i32
    %c0_i32_2 = arith.constant 0 : i32
    return %c0_i32, %c0_i32_0, %c0_i32_1 : i32, i32, i32
  }
  func.func @transform_9(%arg0: i32) -> (i32, i32) {
    %c0_i32 = arith.constant 0 : i32
    %c0_i32_0 = arith.constant 0 : i32
    %c0_i32_1 = arith.constant 0 : i32
    return %c0_i32, %c0_i32_0 : i32, i32
  }
  func.func @transform_10(%arg0: i32) -> (i32, i32) {
    %c0_i32 = arith.constant 0 : i32
    %c0_i32_0 = arith.constant 0 : i32
    %c0_i32_1 = arith.constant 0 : i32
    return %c0_i32, %c0_i32_0 : i32, i32
  }
  func.func @transform_11(%arg0: i32) -> (i32, i32) {
    %c0_i32 = arith.constant 0 : i32
    %c0_i32_0 = arith.constant 0 : i32
    %c0_i32_1 = arith.constant 0 : i32
    return %c0_i32, %c0_i32_0 : i32, i32
  }
}

</mosaic_0001>

<llo_original>
// kernel: tpu_custom_call.1
$region0: #{tpu_custom_call.1}
  #allocation0 [shape = 'u32[]', space=smem, size = 0x4, offset = 0x4, fixed_abs, tag = 'smem constant byte address 0x4 - core index']
  #allocation1 [shape = 'u32[144,128]{1,0:T(1,128)}', space=vmem, size = 0x12000, scoped, tag = 'internal scratch']
  #allocation2 [shape = 'f32[1,1]{1,0:T(1,128)S(1)}', space=vmem, size = 0x200, scoped, tag = 'scoped memory for tpu_custom_call.1']
  #allocation3 [shape = 'f32[1,1]{1,0:T(1,128)S(1)}', space=vmem, size = 0x200, scoped, tag = 'scoped memory for tpu_custom_call.1']
  #allocation4 [shape = 'f32[1,1]{1,0:T(1,128)S(1)}', space=vmem, size = 0x200, scoped, tag = 'scoped memory for tpu_custom_call.1']
  #allocation5 [shape = 'f32[1,1]{1,0:T(1,128)S(1)}', space=vmem, size = 0x200, scoped, tag = 'scoped memory for tpu_custom_call.1']
  %s0 = inlined_call_operand.vmem [shape: f32[20,4], index: 0, kind: input, shape index: {}]
  %s1 = inlined_call_operand.vmem [shape: f32[1,4], index: 1, kind: input, shape index: {}]
  %s2 = inlined_call_operand.<no memory space> [shape: f32[1,1], index: 2, kind: input, shape index: {}]
  %s3 = inlined_call_operand.<no memory space> [shape: f32[1,1], index: 3, kind: input, shape index: {}]
  %s4 = inlined_call_operand.<no memory space> [shape: f32[1,1], index: 4, kind: input, shape index: {}]
  %s5 = inlined_call_operand.vmem [shape: f32[1,512], index: 5, kind: input, shape index: {}]
  %s6 = inlined_call_operand.hbm [shape: bf16[128,512], index: 6, kind: input, shape index: {}]
  %s7 = inlined_call_operand.hbm [shape: bf16[2,256,512], index: 7, kind: input, shape index: {}]
  %s8 = inlined_call_operand.vmem [shape: f32[3,1,512], index: 8, kind: input, shape index: {}]
  %s9 = inlined_call_operand.vmem [shape: f32[1,128], index: 9, kind: input, shape index: {}]
  %s10 = inlined_call_operand.<no memory space> [shape: f32[1,1], index: 10, kind: input, shape index: {}]
  %s11 = inlined_call_operand.vmem [shape: f32[2,1], index: 11, kind: output, shape index: {}]
  %s12 = sld [smem:[#allocation0]]
  $region62: #{tpu_custom_call.1} parent=0
    _
  %s14 = ssub.s32 1, %s12
  %s15 = scalar_select 0, %s14, %s12
  %v16 = vstv %s2
  %17 = vst [vmem:[#allocation2] sm:$0x1] %v16
  %v18 = vstv %s3
  %19 = vst [vmem:[#allocation3] sm:$0x1] %v18
  %v20 = vstv %s4
  %21 = vst [vmem:[#allocation4] sm:$0x1] %v20
  %v22 = vstv %s10
  %23 = vst [vmem:[#allocation5] sm:$0x1] %v22
  $region1: #{tpu_custom_call.1} parent=0
    #allocation6 [shape = 'u8[131072]{0}', space=vmem, size = 0x20000, scoped, tag = 'input window, operand 6, single buffered']
    #allocation7 [shape = 's32[1]{0}', space=sflag, size = 0x4, scoped, tag = 'scoped memory for tpu_custom_call.1']
    #allocation8 [shape = 'u8[524288]{0}', space=vmem, size = 0x80000, scoped, tag = 'input window, operand 7, single buffered']
    #allocation9 [shape = 's32[1]{0}', space=sflag, size = 0x4, scoped, tag = 'scoped memory for tpu_custom_call.1']
    %24 = vsyncpa [#allocation7], 0
    %25 = vsyncpa [#allocation9], 0
    // Predicated region
    $region2: #{tpu_custom_call.1} parent=1 // pred_check
      _
    $region3: #{tpu_custom_call.1} parent=1 // pred_check_branch
      %27 = sbr.rel (0) target = $region5
    $region4: #{tpu_custom_call.1} parent=1 // pred_region
      _
    $region5: #{tpu_custom_call.1} parent=1 // pred_fallthru
      _
    // Predicated region
    $region6: #{tpu_custom_call.1} parent=1 // pred_check
      _
    $region7: #{tpu_custom_call.1} parent=1 // pred_check_branch
      %29 = sbr.rel (0) target = $region9
    $region8: #{tpu_custom_call.1} parent=1 // pred_region
      _
    $region9: #{tpu_custom_call.1} parent=1 // pred_fallthru
      _
    // Predicated region
    $region10: #{tpu_custom_call.1} parent=1 // pred_check
      _
    $region11: #{tpu_custom_call.1} parent=1 // pred_check_branch
      %31 = sbr.rel (0) target = $region13
    $region12: #{tpu_custom_call.1} parent=1 // pred_region
      _
    $region13: #{tpu_custom_call.1} parent=1 // pred_fallthru
      _
    // Predicated region
    $region14: #{tpu_custom_call.1} parent=1 // pred_check
      _
    $region15: #{tpu_custom_call.1} parent=1 // pred_check_branch
      %33 = sbr.rel (0) target = $region17
    $region16: #{tpu_custom_call.1} parent=1 // pred_region
      _
    $region17: #{tpu_custom_call.1} parent=1 // pred_fallthru
      _
    // Predicated region
    $region18: #{tpu_custom_call.1} parent=1 // pred_check
      _
    $region19: #{tpu_custom_call.1} parent=1 // pred_check_branch
      %35 = sbr.rel (0) target = $region21
    $region20: #{tpu_custom_call.1} parent=1 // pred_region
      _
    $region21: #{tpu_custom_call.1} parent=1 // pred_fallthru
      _
    // Predicated region
    $region22: #{tpu_custom_call.1} parent=1 // pred_check
      _
    $region23: #{tpu_custom_call.1} parent=1 // pred_check_branch
      %37 = sbr.rel (0) target = $region25
    $region24: #{tpu_custom_call.1} parent=1 // pred_region
      _
    $region25: #{tpu_custom_call.1} parent=1 // pred_fallthru
      _
    // Predicated region
    $region26: #{tpu_custom_call.1} parent=1 // pred_check
      _
    $region27: #{tpu_custom_call.1} parent=1 // pred_check_branch
      %39 = sbr.rel (0) target = $region29
    $region28: #{tpu_custom_call.1} parent=1 // pred_region
      %s41 = ssub.s32 4096, 4096
      %42 = vsyncadd [#allocation7], %s41
      %s43 = sshll.u32 [#allocation6], 4
      %s44 = int_to_ptr.vmem [resolvable:$true] %s43
      %49 = dma.hbm_to_vmem [thread:$0]  %s6, 4096, %s44, [#allocation7], 256, 256, 16
    $region29: #{tpu_custom_call.1} parent=1 // pred_fallthru
      _
    // Predicated region
    $region30: #{tpu_custom_call.1} parent=1 // pred_check
      _
    $region31: #{tpu_custom_call.1} parent=1 // pred_check_branch
      %51 = sbr.rel (0) target = $region33
    $region32: #{tpu_custom_call.1} parent=1 // pred_region
      %s53 = ssub.s32 16384, 16384
      %54 = vsyncadd [#allocation9], %s53
      %s55 = sshll.u32 [#allocation8], 4
      %s56 = int_to_ptr.vmem [resolvable:$true] %s55
      %61 = dma.hbm_to_vmem [thread:$0]  %s7, 16384, %s56, [#allocation9], 256, 256, 16
    $region33: #{tpu_custom_call.1} parent=1 // pred_fallthru
      _
    // Predicated region
    $region34: #{tpu_custom_call.1} parent=1 // pred_check
      _
    $region35: #{tpu_custom_call.1} parent=1 // pred_check_branch
      %63 = sbr.rel (0) target = $region37
    $region36: #{tpu_custom_call.1} parent=1 // pred_region
      _
    $region37: #{tpu_custom_call.1} parent=1 // pred_fallthru
      _
    // Predicated region
    $region38: #{tpu_custom_call.1} parent=1 // pred_check
      _
    $region39: #{tpu_custom_call.1} parent=1 // pred_check_branch
      %65 = sbr.rel (0) target = $region41
    $region40: #{tpu_custom_call.1} parent=1 // pred_region
      _
    $region41: #{tpu_custom_call.1} parent=1 // pred_fallthru
      _
    // Predicated region
    $region42: #{tpu_custom_call.1} parent=1 // pred_check
      _
    $region43: #{tpu_custom_call.1} parent=1 // pred_check_branch
      %67 = sbr.rel (0) target = $region45
    $region44: #{tpu_custom_call.1} parent=1 // pred_region
      _
    $region45: #{tpu_custom_call.1} parent=1 // pred_fallthru
      _
    // Predicated region
    $region46: #{tpu_custom_call.1} parent=1 // pred_check
      _
    $region47: #{tpu_custom_call.1} parent=1 // pred_check_branch
      %69 = sbr.rel (0) target = $region49
    $region48: #{tpu_custom_call.1} parent=1 // pred_region
      %70 = dma.done [#allocation7], 4096
    $region49: #{tpu_custom_call.1} parent=1 // pred_fallthru
      _
    // Predicated region
    $region50: #{tpu_custom_call.1} parent=1 // pred_check
      _
    $region51: #{tpu_custom_call.1} parent=1 // pred_check_branch
      %72 = sbr.rel (0) target = $region53
    $region52: #{tpu_custom_call.1} parent=1 // pred_region
      %73 = dma.done [#allocation9], 16384
    $region53: #{tpu_custom_call.1} parent=1 // pred_fallthru
      _
    %v75 = vld [vmem:[%s0] sm:$0xff]
    %v76 = vld [vmem:[%s0 + $0x8] sm:$0xff]
    %v77 = vld [vmem:[%s0 + $0x10] sm:$0xf]
    %v78 = vld [vmem:[%s1] sm:$0x1]
    %v80 = vlaneseq
    %v81 = vshrl.u32 %v80, 7
    %v82 = vsub.s32 0, %v81
    %v83 = vrot.slane %v78, %v82
    %v85 = vmul.f32 %v75, %v83
    %v86 = vmul.f32 %v76, %v83
    %v87 = vmul.f32 %v77, %v83
    %vm88 = vcmask 31744
    %v89 = vsel %vm88, %v85, 0.0
    %90 = vadd.xlane.f32.xlu0 %v89
    %v91 = vpop.xlane.xlu0 %90
    %v92 = vsel %vm88, %v86, 0.0
    %93 = vadd.xlane.f32.xlu0 %v92
    %v94 = vpop.xlane.xlu0 %93
    %vm95 = vcmask 27648
    %v96 = vsel %vm95, %v87, 0.0
    %97 = vadd.xlane.f32.xlu0 %v96
    %v98 = vpop.xlane.xlu0 %97
    %v99 = vld [vmem:[#allocation2] sm:$0x1]
    %v101 = vlaneseq
    %v102 = vshrl.u32 %v101, 7
    %v103 = vsub.s32 0, %v102
    %v104 = vrot.slane %v99, %v103
    %v106 = vadd.f32 %v91, %v104
    %v107 = vadd.f32 %v94, %v104
    %v108 = vadd.f32 %v98, %v104
    %vm109 = vcmask 7168
    %v110 = vsel %vm109, %v106, 0.0
    %v111 = vsel %vm109, %v107, 0.0
    %v112 = vadd.f32 %v110, %v111
    %vm113 = vcmask 3072
    %v114 = vsel %vm113, %v108, 0.0
    %v115 = vadd.f32 %v112, %v114
    %v116 = vrot.slane %v115, 4
    %v117 = vadd.f32 %v115, %v116
    %v118 = vrot.slane %v117, 2
    %v119 = vadd.f32 %v117, %v118
    %v120 = vrot.slane %v119, 1
    %v121 = vadd.f32 %v119, %v120
    %v122 = vrcp.pop 20.0
    %v123 = vmul.f32 %v121, %v122
    %v124 = vsub.f32 %v106, %v123
    %v125 = vsub.f32 %v107, %v123
    %v126 = vsub.f32 %v108, %v123
    %v127 = vmul.f32 %v124, %v124
    %v128 = vmul.f32 %v125, %v125
    %v129 = vmul.f32 %v126, %v126
    %v130 = vsel %vm109, %v127, 0.0
    %v131 = vsel %vm109, %v128, 0.0
    %v132 = vadd.f32 %v130, %v131
    %v133 = vsel %vm113, %v129, 0.0
    %v134 = vadd.f32 %v132, %v133
    %v135 = vrot.slane %v134, 4
    %v136 = vadd.f32 %v134, %v135
    %v137 = vrot.slane %v136, 2
    %v138 = vadd.f32 %v136, %v137
    %v139 = vrot.slane %v138, 1
    %v140 = vadd.f32 %v138, %v139
    %v141 = vmul.f32 %v140, %v122
    %v142 = vadd.f32 %v141, 1e-05
    %v143 = vrsqrt.pop %v142
    %v144 = vmul.f32 %v124, %v143
    %v145 = vmul.f32 %v125, %v143
    %v146 = vmul.f32 %v126, %v143
    %v147 = vld [vmem:[#allocation3] sm:$0x1]
    %v149 = vlaneseq
    %v150 = vshrl.u32 %v149, 7
    %v151 = vsub.s32 0, %v150
    %v152 = vrot.slane %v147, %v151
    %v154 = vmul.f32 %v144, %v152
    %v155 = vmul.f32 %v145, %v152
    %v156 = vmul.f32 %v146, %v152
    %v157 = vld [vmem:[#allocation4] sm:$0x1]
    %v159 = vlaneseq
    %v160 = vshrl.u32 %v159, 7
    %v161 = vsub.s32 0, %v160
    %v162 = vrot.slane %v157, %v161
    %v164 = vadd.f32 %v154, %v162
    %v165 = vadd.f32 %v155, %v162
    %v166 = vadd.f32 %v156, %v162
    %v167 = vxor.u32 %v164, 2147483648
    %v168 = vxor.u32 %v165, 2147483648
    %v169 = vxor.u32 %v166, 2147483648
    %v170 = vmul.f32 %v167, 1.442695
    %v171 = vpow.pop %v170
    %v172 = vmul.f32 %v168, 1.442695
    %v173 = vpow.pop %v172
    %v174 = vmul.f32 %v169, 1.442695
    %v175 = vpow.pop %v174
    %v176 = vadd.f32 %v171, 1.0
    %v177 = vadd.f32 %v173, 1.0
    %v178 = vadd.f32 %v175, 1.0
    %v179 = vrcp.pop %v176
    %v180 = vmul.f32 1.0, %v179
    %v181 = vrcp.pop %v177
    %v182 = vmul.f32 1.0, %v181
    %v183 = vrcp.pop %v178
    %v184 = vmul.f32 1.0, %v183
    %v185 = vld [vmem:[%s5] sm:$0xf]
    %187 = vset.pattern.permute.xlu0 0
    %188 = vperm.xlu0 %187, %v180
    %v189 = vpop.permute.xlu0 %188
    %192 = vset.pattern.permute.xlu0 0
    %193 = vperm.xlu0 %192, %v182
    %v194 = vpop.permute.xlu0 %193
    %197 = vset.pattern.permute.xlu0 0
    %198 = vperm.xlu0 %197, %v184
    %v199 = vpop.permute.xlu0 %198
    %v202 = vlaneseq
    %v203 = vshrl.u32 %v202, 7
    %v204 = vsub.s32 0, %v203
    %v205 = vrot.slane %v185, %v204
    %v206 = vlaneseq
    %v207 = vshrl.u32 %v206, 7
    %v208 = vsub.s32 1, %v207
    %v209 = vrot.slane %v185, %v208
    %v210 = vlaneseq
    %v211 = vshrl.u32 %v210, 7
    %v212 = vsub.s32 2, %v211
    %v213 = vrot.slane %v185, %v212
    %v214 = vlaneseq
    %v215 = vshrl.u32 %v214, 7
    %v216 = vsub.s32 3, %v215
    %v217 = vrot.slane %v185, %v216
    %v222 = vmul.f32 %v189, %v205
    %v223 = vmul.f32 %v189, %v209
    %v224 = vmul.f32 %v189, %v213
    %v225 = vmul.f32 %v189, %v217
    %v226 = vmul.f32 %v194, %v205
    %v227 = vmul.f32 %v194, %v209
    %v228 = vmul.f32 %v194, %v213
    %v229 = vmul.f32 %v194, %v217
    %v230 = vmul.f32 %v199, %v205
    %v231 = vmul.f32 %v199, %v209
    %v232 = vmul.f32 %v199, %v213
    %v233 = vmul.f32 %v199, %v217
    %v234 = vld [vmem:[%s8] sm:$0xf]
    %v236 = vlaneseq
    %v237 = vshrl.u32 %v236, 7
    %v238 = vsub.s32 0, %v237
    %v239 = vrot.slane %v234, %v238
    %v240 = vlaneseq
    %v241 = vshrl.u32 %v240, 7
    %v242 = vsub.s32 1, %v241
    %v243 = vrot.slane %v234, %v242
    %v244 = vlaneseq
    %v245 = vshrl.u32 %v244, 7
    %v246 = vsub.s32 2, %v245
    %v247 = vrot.slane %v234, %v246
    %v248 = vlaneseq
    %v249 = vshrl.u32 %v248, 7
    %v250 = vsub.s32 3, %v249
    %v251 = vrot.slane %v234, %v250
    %v256 = vadd.f32 %v222, %v239
    %v257 = vadd.f32 %v223, %v243
    %v258 = vadd.f32 %v224, %v247
    %v259 = vadd.f32 %v225, %v251
    %v260 = vadd.f32 %v226, %v239
    %v261 = vadd.f32 %v227, %v243
    %v262 = vadd.f32 %v228, %v247
    %v263 = vadd.f32 %v229, %v251
    %v264 = vadd.f32 %v230, %v239
    %v265 = vadd.f32 %v231, %v243
    %v266 = vadd.f32 %v232, %v247
    %v267 = vadd.f32 %v233, %v251
    %v268 = vld [vmem:[#allocation6] sm:$0xff]
    %v269 = vld [vmem:[#allocation6 + $0x8] sm:$0xff]
    %v270 = vld [vmem:[#allocation6 + $0x10] sm:$0xff]
    %v271 = vld [vmem:[#allocation6 + $0x18] sm:$0xff]
    %v272 = vld [vmem:[#allocation6 + $0x20] sm:$0xff]
    %v273 = vld [vmem:[#allocation6 + $0x28] sm:$0xff]
    %v274 = vld [vmem:[#allocation6 + $0x30] sm:$0xff]
    %v275 = vld [vmem:[#allocation6 + $0x38] sm:$0xff]
    %v276 = vld [vmem:[#allocation6 + $0x40] sm:$0xff]
    %v277 = vld [vmem:[#allocation6 + $0x48] sm:$0xff]
    %v278 = vld [vmem:[#allocation6 + $0x50] sm:$0xff]
    %v279 = vld [vmem:[#allocation6 + $0x58] sm:$0xff]
    %v280 = vld [vmem:[#allocation6 + $0x60] sm:$0xff]
    %v281 = vld [vmem:[#allocation6 + $0x68] sm:$0xff]
    %v282 = vld [vmem:[#allocation6 + $0x70] sm:$0xff]
    %v283 = vld [vmem:[#allocation6 + $0x78] sm:$0xff]
    %v284 = vld [vmem:[#allocation6 + $0x80] sm:$0xff]
    %v285 = vld [vmem:[#allocation6 + $0x88] sm:$0xff]
    %v286 = vld [vmem:[#allocation6 + $0x90] sm:$0xff]
    %v287 = vld [vmem:[#allocation6 + $0x98] sm:$0xff]
    %v288 = vld [vmem:[#allocation6 + $0xa0] sm:$0xff]
    %v289 = vld [vmem:[#allocation6 + $0xa8] sm:$0xff]
    %v290 = vld [vmem:[#allocation6 + $0xb0] sm:$0xff]
    %v291 = vld [vmem:[#allocation6 + $0xb8] sm:$0xff]
    %v292 = vld [vmem:[#allocation6 + $0xc0] sm:$0xff]
    %v293 = vld [vmem:[#allocation6 + $0xc8] sm:$0xff]
    %v294 = vld [vmem:[#allocation6 + $0xd0] sm:$0xff]
    %v295 = vld [vmem:[#allocation6 + $0xd8] sm:$0xff]
    %v296 = vld [vmem:[#allocation6 + $0xe0] sm:$0xff]
    %v297 = vld [vmem:[#allocation6 + $0xe8] sm:$0xff]
    %v298 = vld [vmem:[#allocation6 + $0xf0] sm:$0xff]
    %v299 = vld [vmem:[#allocation6 + $0xf8] sm:$0xff]
    %v300 = vld [vmem:[#allocation8] sm:$0xff]
    %v301 = vld [vmem:[#allocation8 + $0x8] sm:$0xff]
    %v302 = vld [vmem:[#allocation8 + $0x10] sm:$0xff]
    %v303 = vld [vmem:[#allocation8 + $0x18] sm:$0xff]
    %v304 = vld [vmem:[#allocation8 + $0x20] sm:$0xff]
    %v305 = vld [vmem:[#allocation8 + $0x28] sm:$0xff]
    %v306 = vld [vmem:[#allocation8 + $0x30] sm:$0xff]
    %v307 = vld [vmem:[#allocation8 + $0x38] sm:$0xff]
    %v308 = vld [vmem:[#allocation8 + $0x40] sm:$0xff]
    %v309 = vld [vmem:[#allocation8 + $0x48] sm:$0xff]
    %v310 = vld [vmem:[#allocation8 + $0x50] sm:$0xff]
    %v311 = vld [vmem:[#allocation8 + $0x58] sm:$0xff]
    %v312 = vld [vmem:[#allocation8 + $0x60] sm:$0xff]
    %v313 = vld [vmem:[#allocation8 + $0x68] sm:$0xff]
    %v314 = vld [vmem:[#allocation8 + $0x70] sm:$0xff]
    %v315 = vld [vmem:[#allocation8 + $0x78] sm:$0xff]
    %v316 = vld [vmem:[#allocation8 + $0x80] sm:$0xff]
    %v317 = vld [vmem:[#allocation8 + $0x88] sm:$0xff]
    %v318 = vld [vmem:[#allocation8 + $0x90] sm:$0xff]
    %v319 = vld [vmem:[#allocation8 + $0x98] sm:$0xff]
    %v320 = vld [vmem:[#allocation8 + $0xa0] sm:$0xff]
    %v321 = vld [vmem:[#allocation8 + $0xa8] sm:$0xff]
    %v322 = vld [vmem:[#allocation8 + $0xb0] sm:$0xff]
    %v323 = vld [vmem:[#allocation8 + $0xb8] sm:$0xff]
    %v324 = vld [vmem:[#allocation8 + $0xc0] sm:$0xff]
    %v325 = vld [vmem:[#allocation8 + $0xc8] sm:$0xff]
    %v326 = vld [vmem:[#allocation8 + $0xd0] sm:$0xff]
    %v327 = vld [vmem:[#allocation8 + $0xd8] sm:$0xff]
    %v328 = vld [vmem:[#allocation8 + $0xe0] sm:$0xff]
    %v329 = vld [vmem:[#allocation8 + $0xe8] sm:$0xff]
    %v330 = vld [vmem:[#allocation8 + $0xf0] sm:$0xff]
    %v331 = vld [vmem:[#allocation8 + $0xf8] sm:$0xff]
    %v332 = vld [vmem:[#allocation8 + $0x100] sm:$0xff]
    %v333 = vld [vmem:[#allocation8 + $0x108] sm:$0xff]
    %v334 = vld [vmem:[#allocation8 + $0x110] sm:$0xff]
    %v335 = vld [vmem:[#allocation8 + $0x118] sm:$0xff]
    %v336 = vld [vmem:[#allocation8 + $0x120] sm:$0xff]
    %v337 = vld [vmem:[#allocation8 + $0x128] sm:$0xff]
    %v338 = vld [vmem:[#allocation8 + $0x130] sm:$0xff]
    %v339 = vld [vmem:[#allocation8 + $0x138] sm:$0xff]
    %v340 = vld [vmem:[#allocation8 + $0x140] sm:$0xff]
    %v341 = vld [vmem:[#allocation8 + $0x148] sm:$0xff]
    %v342 = vld [vmem:[#allocation8 + $0x150] sm:$0xff]
    %v343 = vld [vmem:[#allocation8 + $0x158] sm:$0xff]
    %v344 = vld [vmem:[#allocation8 + $0x160] sm:$0xff]
    %v345 = vld [vmem:[#allocation8 + $0x168] sm:$0xff]
    %v346 = vld [vmem:[#allocation8 + $0x170] sm:$0xff]
    %v347 = vld [vmem:[#allocation8 + $0x178] sm:$0xff]
    %v348 = vld [vmem:[#allocation8 + $0x180] sm:$0xff]
    %v349 = vld [vmem:[#allocation8 + $0x188] sm:$0xff]
    %v350 = vld [vmem:[#allocation8 + $0x190] sm:$0xff]
    %v351 = vld [vmem:[#allocation8 + $0x198] sm:$0xff]
    %v352 = vld [vmem:[#allocation8 + $0x1a0] sm:$0xff]
    %v353 = vld [vmem:[#allocation8 + $0x1a8] sm:$0xff]
    %v354 = vld [vmem:[#allocation8 + $0x1b0] sm:$0xff]
    %v355 = vld [vmem:[#allocation8 + $0x1b8] sm:$0xff]
    %v356 = vld [vmem:[#allocation8 + $0x1c0] sm:$0xff]
    %v357 = vld [vmem:[#allocation8 + $0x1c8] sm:$0xff]
    %v358 = vld [vmem:[#allocation8 + $0x1d0] sm:$0xff]
    %v359 = vld [vmem:[#allocation8 + $0x1d8] sm:$0xff]
    %v360 = vld [vmem:[#allocation8 + $0x1e0] sm:$0xff]
    %v361 = vld [vmem:[#allocation8 + $0x1e8] sm:$0xff]
    %v362 = vld [vmem:[#allocation8 + $0x1f0] sm:$0xff]
    %v363 = vld [vmem:[#allocation8 + $0x1f8] sm:$0xff]
    %s364 = scalar_lea.vmem [#allocation8], 512
    %v365 = vld [vmem:[%s364] sm:$0xff]
    %v366 = vld [vmem:[%s364 + $0x8] sm:$0xff]
    %v367 = vld [vmem:[%s364 + $0x10] sm:$0xff]
    %v368 = vld [vmem:[%s364 + $0x18] sm:$0xff]
    %v369 = vld [vmem:[%s364 + $0x20] sm:$0xff]
    %v370 = vld [vmem:[%s364 + $0x28] sm:$0xff]
    %v371 = vld [vmem:[%s364 + $0x30] sm:$0xff]
    %v372 = vld [vmem:[%s364 + $0x38] sm:$0xff]
    %v373 = vld [vmem:[%s364 + $0x40] sm:$0xff]
    %v374 = vld [vmem:[%s364 + $0x48] sm:$0xff]
    %v375 = vld [vmem:[%s364 + $0x50] sm:$0xff]
    %v376 = vld [vmem:[%s364 + $0x58] sm:$0xff]
    %v377 = vld [vmem:[%s364 + $0x60] sm:$0xff]
    %v378 = vld [vmem:[%s364 + $0x68] sm:$0xff]
    %v379 = vld [vmem:[%s364 + $0x70] sm:$0xff]
    %v380 = vld [vmem:[%s364 + $0x78] sm:$0xff]
    %v381 = vld [vmem:[%s364 + $0x80] sm:$0xff]
    %v382 = vld [vmem:[%s364 + $0x88] sm:$0xff]
    %v383 = vld [vmem:[%s364 + $0x90] sm:$0xff]
    %v384 = vld [vmem:[%s364 + $0x98] sm:$0xff]
    %v385 = vld [vmem:[%s364 + $0xa0] sm:$0xff]
    %v386 = vld [vmem:[%s364 + $0xa8] sm:$0xff]
    %v387 = vld [vmem:[%s364 + $0xb0] sm:$0xff]
    %v388 = vld [vmem:[%s364 + $0xb8] sm:$0xff]
    %v389 = vld [vmem:[%s364 + $0xc0] sm:$0xff]
    %v390 = vld [vmem:[%s364 + $0xc8] sm:$0xff]
    %v391 = vld [vmem:[%s364 + $0xd0] sm:$0xff]
    %v392 = vld [vmem:[%s364 + $0xd8] sm:$0xff]
    %v393 = vld [vmem:[%s364 + $0xe0] sm:$0xff]
    %v394 = vld [vmem:[%s364 + $0xe8] sm:$0xff]
    %v395 = vld [vmem:[%s364 + $0xf0] sm:$0xff]
    %v396 = vld [vmem:[%s364 + $0xf8] sm:$0xff]
    %v397 = vld [vmem:[%s364 + $0x100] sm:$0xff]
    %v398 = vld [vmem:[%s364 + $0x108] sm:$0xff]
    %v399 = vld [vmem:[%s364 + $0x110] sm:$0xff]
    %v400 = vld [vmem:[%s364 + $0x118] sm:$0xff]
    %v401 = vld [vmem:[%s364 + $0x120] sm:$0xff]
    %v402 = vld [vmem:[%s364 + $0x128] sm:$0xff]
    %v403 = vld [vmem:[%s364 + $0x130] sm:$0xff]
    %v404 = vld [vmem:[%s364 + $0x138] sm:$0xff]
    %v405 = vld [vmem:[%s364 + $0x140] sm:$0xff]
    %v406 = vld [vmem:[%s364 + $0x148] sm:$0xff]
    %v407 = vld [vmem:[%s364 + $0x150] sm:$0xff]
    %v408 = vld [vmem:[%s364 + $0x158] sm:$0xff]
    %v409 = vld [vmem:[%s364 + $0x160] sm:$0xff]
    %v410 = vld [vmem:[%s364 + $0x168] sm:$0xff]
    %v411 = vld [vmem:[%s364 + $0x170] sm:$0xff]
    %v412 = vld [vmem:[%s364 + $0x178] sm:$0xff]
    %v413 = vld [vmem:[%s364 + $0x180] sm:$0xff]
    %v414 = vld [vmem:[%s364 + $0x188] sm:$0xff]
    %v415 = vld [vmem:[%s364 + $0x190] sm:$0xff]
    %v416 = vld [vmem:[%s364 + $0x198] sm:$0xff]
    %v417 = vld [vmem:[%s364 + $0x1a0] sm:$0xff]
    %v418 = vld [vmem:[%s364 + $0x1a8] sm:$0xff]
    %v419 = vld [vmem:[%s364 + $0x1b0] sm:$0xff]
    %v420 = vld [vmem:[%s364 + $0x1b8] sm:$0xff]
    %v421 = vld [vmem:[%s364 + $0x1c0] sm:$0xff]
    %v422 = vld [vmem:[%s364 + $0x1c8] sm:$0xff]
    %v423 = vld [vmem:[%s364 + $0x1d0] sm:$0xff]
    %v424 = vld [vmem:[%s364 + $0x1d8] sm:$0xff]
    %v425 = vld [vmem:[%s364 + $0x1e0] sm:$0xff]
    %v426 = vld [vmem:[%s364 + $0x1e8] sm:$0xff]
    %v427 = vld [vmem:[%s364 + $0x1f0] sm:$0xff]
    %v428 = vld [vmem:[%s364 + $0x1f8] sm:$0xff]
    %s429 = scalar_lea.vmem %s8, 4
    %v430 = vld [vmem:[%s429] sm:$0xf]
    %s431 = scalar_lea.vmem %s8, 8
    %v432 = vld [vmem:[%s431] sm:$0xf]
    %v465 = vunpack.c.l.b16 %v268
    %v466 = vunpack.c.h.b16 %v268
    %v467 = vunpack.c.l.b16 %v269
    %v468 = vunpack.c.h.b16 %v269
    %v469 = vunpack.c.l.b16 %v270
    %v470 = vunpack.c.h.b16 %v270
    %v471 = vunpack.c.l.b16 %v271
    %v472 = vunpack.c.h.b16 %v271
    %v473 = vunpack.c.l.b16 %v272
    %v474 = vunpack.c.h.b16 %v272
    %v475 = vunpack.c.l.b16 %v273
    %v476 = vunpack.c.h.b16 %v273
    %v477 = vunpack.c.l.b16 %v274
    %v478 = vunpack.c.h.b16 %v274
    %v479 = vunpack.c.l.b16 %v275
    %v480 = vunpack.c.h.b16 %v275
    %v481 = vunpack.c.l.b16 %v276
    %v482 = vunpack.c.h.b16 %v276
    %v483 = vunpack.c.l.b16 %v277
    %v484 = vunpack.c.h.b16 %v277
    %v485 = vunpack.c.l.b16 %v278
    %v486 = vunpack.c.h.b16 %v278
    %v487 = vunpack.c.l.b16 %v279
    %v488 = vunpack.c.h.b16 %v279
    %v489 = vunpack.c.l.b16 %v280
    %v490 = vunpack.c.h.b16 %v280
    %v491 = vunpack.c.l.b16 %v281
    %v492 = vunpack.c.h.b16 %v281
    %v493 = vunpack.c.l.b16 %v282
    %v494 = vunpack.c.h.b16 %v282
    %v495 = vunpack.c.l.b16 %v283
    %v496 = vunpack.c.h.b16 %v283
    %v497 = vunpack.c.l.b16 %v284
    %v498 = vunpack.c.h.b16 %v284
    %v499 = vunpack.c.l.b16 %v285
    %v500 = vunpack.c.h.b16 %v285
    %v501 = vunpack.c.l.b16 %v286
    %v502 = vunpack.c.h.b16 %v286
    %v503 = vunpack.c.l.b16 %v287
    %v504 = vunpack.c.h.b16 %v287
    %v505 = vunpack.c.l.b16 %v288
    %v506 = vunpack.c.h.b16 %v288
    %v507 = vunpack.c.l.b16 %v289
    %v508 = vunpack.c.h.b16 %v289
    %v509 = vunpack.c.l.b16 %v290
    %v510 = vunpack.c.h.b16 %v290
    %v511 = vunpack.c.l.b16 %v291
    %v512 = vunpack.c.h.b16 %v291
    %v513 = vunpack.c.l.b16 %v292
    %v514 = vunpack.c.h.b16 %v292
    %v515 = vunpack.c.l.b16 %v293
    %v516 = vunpack.c.h.b16 %v293
    %v517 = vunpack.c.l.b16 %v294
    %v518 = vunpack.c.h.b16 %v294
    %v519 = vunpack.c.l.b16 %v295
    %v520 = vunpack.c.h.b16 %v295
    %v521 = vunpack.c.l.b16 %v296
    %v522 = vunpack.c.h.b16 %v296
    %v523 = vunpack.c.l.b16 %v297
    %v524 = vunpack.c.h.b16 %v297
    %v525 = vunpack.c.l.b16 %v298
    %v526 = vunpack.c.h.b16 %v298
    %v527 = vunpack.c.l.b16 %v299
    %v528 = vunpack.c.h.b16 %v299
    %v529 = vpack.c.b16 %v469, %v465
    %v530 = vpack.c.b16 %v470, %v466
    %v531 = vpack.c.b16 %v471, %v467
    %v532 = vpack.c.b16 %v472, %v468
    %v533 = vpack.c.b16 %v477, %v473
    %v534 = vpack.c.b16 %v478, %v474
    %v535 = vpack.c.b16 %v479, %v475
    %v536 = vpack.c.b16 %v480, %v476
    %v537 = vpack.c.b16 %v485, %v481
    %v538 = vpack.c.b16 %v486, %v482
    %v539 = vpack.c.b16 %v487, %v483
    %v540 = vpack.c.b16 %v488, %v484
    %v541 = vpack.c.b16 %v493, %v489
    %v542 = vpack.c.b16 %v494, %v490
    %v543 = vpack.c.b16 %v495, %v491
    %v544 = vpack.c.b16 %v496, %v492
    %v545 = vpack.c.b16 %v501, %v497
    %v546 = vpack.c.b16 %v502, %v498
    %v547 = vpack.c.b16 %v503, %v499
    %v548 = vpack.c.b16 %v504, %v500
    %v549 = vpack.c.b16 %v509, %v505
    %v550 = vpack.c.b16 %v510, %v506
    %v551 = vpack.c.b16 %v511, %v507
    %v552 = vpack.c.b16 %v512, %v508
    %v553 = vpack.c.b16 %v517, %v513
    %v554 = vpack.c.b16 %v518, %v514
    %v555 = vpack.c.b16 %v519, %v515
    %v556 = vpack.c.b16 %v520, %v516
    %v557 = vpack.c.b16 %v525, %v521
    %v558 = vpack.c.b16 %v526, %v522
    %v559 = vpack.c.b16 %v527, %v523
    %v560 = vpack.c.b16 %v528, %v524
    %593 = vmatprep.subr.bf16.mxu0 %v558
    %594 = vmatpush1.bf16.msra.mxu0 %v557
    %595 = vmatprep.subr.bf16.mxu0 %v554
    %596 = vmatpush1.bf16.msra.mxu0 %v553
    %597 = vmatprep.subr.bf16.mxu0 %v550
    %598 = vmatpush1.bf16.msra.mxu0 %v549
    %599 = vmatprep.subr.bf16.mxu0 %v546
    %600 = vmatpush1.bf16.msra.mxu0 %v545
    %601 = vmatprep.subr.bf16.mxu0 %v542
    %602 = vmatpush1.bf16.msra.mxu0 %v541
    %603 = vmatprep.subr.bf16.mxu0 %v538
    %604 = vmatpush1.bf16.msra.mxu0 %v537
    %605 = vmatprep.subr.bf16.mxu0 %v534
    %606 = vmatpush1.bf16.msra.mxu0 %v533
    %607 = vmatprep.subr.bf16.mxu0 %v530
    %608 = vmatpush1.bf16.msra.mxu0 %v529
    %609 = vmatprep.subr.bf16.mxu0 0
    %610 = vmatpush2.bf16.msra.mxu0 0
    %611 = vmatprep.subr.bf16.mxu0 0
    %612 = vmatpush2.bf16.msra.mxu0 0
    %613 = vmatprep.subr.bf16.mxu0 0
    %614 = vmatpush2.bf16.msra.mxu0 0
    %615 = vmatprep.subr.bf16.mxu0 0
    %616 = vmatpush2.bf16.msra.mxu0 0
    %617 = vmatprep.subr.bf16.mxu0 0
    %618 = vmatpush2.bf16.msra.mxu0 0
    %619 = vmatprep.subr.bf16.mxu0 0
    %620 = vmatpush2.bf16.msra.mxu0 0
    %621 = vmatprep.subr.bf16.mxu0 0
    %622 = vmatpush2.bf16.msra.mxu0 0
    %623 = vmatprep.subr.bf16.mxu0 0
    %624 = vmatpush2.bf16.msra.mxu0 0
    %625 = vmatprep.mubr.bf16.mxu0 0
    %626 = vmatmul.mubr.bf16.gmra.mxu0 0
    %v627 = vpop.f32.mrf.mxu0
    %v628 = vadd.f32 0.0, %v627
    %v629 = vpop.f32.mrf.mxu0
    %v630 = vadd.f32 0.0, %v629
    %v631 = vpop.f32.mrf.mxu0
    %v632 = vpop.f32.mrf.mxu0
    %633 = vdwg.mxu0
    %634 = vmatprep.subr.bf16.mxu0 %v560
    %635 = vmatpush1.bf16.msra.mxu0 %v559
    %636 = vmatprep.subr.bf16.mxu0 %v556
    %637 = vmatpush1.bf16.msra.mxu0 %v555
    %638 = vmatprep.subr.bf16.mxu0 %v552
    %639 = vmatpush1.bf16.msra.mxu0 %v551
    %640 = vmatprep.subr.bf16.mxu0 %v548
    %641 = vmatpush1.bf16.msra.mxu0 %v547
    %642 = vmatprep.subr.bf16.mxu0 %v544
    %643 = vmatpush1.bf16.msra.mxu0 %v543
    %644 = vmatprep.subr.bf16.mxu0 %v540
    %645 = vmatpush1.bf16.msra.mxu0 %v539
    %646 = vmatprep.subr.bf16.mxu0 %v536
    %647 = vmatpush1.bf16.msra.mxu0 %v535
    %648 = vmatprep.subr.bf16.mxu0 %v532
    %649 = vmatpush1.bf16.msra.mxu0 %v531
    %650 = vmatprep.subr.bf16.mxu0 0
    %651 = vmatpush2.bf16.msra.mxu0 0
    %652 = vmatprep.subr.bf16.mxu0 0
    %653 = vmatpush2.bf16.msra.mxu0 0
    %654 = vmatprep.subr.bf16.mxu0 0
    %655 = vmatpush2.bf16.msra.mxu0 0
    %656 = vmatprep.subr.bf16.mxu0 0
    %657 = vmatpush2.bf16.msra.mxu0 0
    %658 = vmatprep.subr.bf16.mxu0 0
    %659 = vmatpush2.bf16.msra.mxu0 0
    %660 = vmatprep.subr.bf16.mxu0 0
    %661 = vmatpush2.bf16.msra.mxu0 0
    %662 = vmatprep.subr.bf16.mxu0 0
    %663 = vmatpush2.bf16.msra.mxu0 0
    %664 = vmatprep.subr.bf16.mxu0 0
    %665 = vmatpush2.bf16.msra.mxu0 0
    %666 = vmatprep.mubr.bf16.mxu0 0
    %667 = vmatmul.mubr.bf16.gmra.mxu0 0
    %v668 = vpop.f32.mrf.mxu0
    %v669 = vadd.f32 0.0, %v668
    %v670 = vpop.f32.mrf.mxu0
    %v671 = vadd.f32 0.0, %v670
    %v672 = vpop.f32.mrf.mxu0
    %v673 = vpop.f32.mrf.mxu0
    %674 = vdwg.mxu0
    %v675 = vadd.f32 %v256, %v628
    %v676 = vadd.f32 %v257, %v630
    %v677 = vadd.f32 %v258, %v669
    %v678 = vadd.f32 %v259, %v671
    %v679 = vxor.u32 %v675, 2147483648
    %v680 = vxor.u32 %v676, 2147483648
    %v681 = vxor.u32 %v678, 2147483648
    %v682 = vmul.f32 %v679, 1.442695
    %v683 = vpow.pop %v682
    %v684 = vmul.f32 %v680, 1.442695
    %v685 = vpow.pop %v684
    %v686 = vmul.f32 %v681, 1.442695
    %v687 = vpow.pop %v686
    %v688 = vadd.f32 %v683, 1.0
    %v689 = vadd.f32 %v685, 1.0
    %v690 = vadd.f32 %v687, 1.0
    %v691 = vrcp.pop %v688
    %v692 = vmul.f32 1.0, %v691
    %v693 = vrcp.pop %v689
    %v694 = vmul.f32 1.0, %v693
    %v695 = vrcp.pop %v690
    %v696 = vmul.f32 1.0, %v695
    %v697 = vtanh.pop %v677
    %v698 = vmul.f32 %v694, 0.0
    %v699 = vmul.f32 %v692, %v697
    %v700 = vadd.f32 %v698, %v699
    %v701 = vtanh.pop %v700
    %v702 = vmul.f32 %v696, %v701
    %v703 = vpack.c.bf16 %v702, %v702
    %704 = vmatprep.subr.bf16.mxu0 %v558
    %705 = vmatpush1.bf16.msra.mxu0 %v557
    %706 = vmatprep.subr.bf16.mxu0 %v554
    %707 = vmatpush1.bf16.msra.mxu0 %v553
    %708 = vmatprep.subr.bf16.mxu0 %v550
    %709 = vmatpush1.bf16.msra.mxu0 %v549
    %710 = vmatprep.subr.bf16.mxu0 %v546
    %711 = vmatpush1.bf16.msra.mxu0 %v545
    %712 = vmatprep.subr.bf16.mxu0 %v542
    %713 = vmatpush1.bf16.msra.mxu0 %v541
    %714 = vmatprep.subr.bf16.mxu0 %v538
    %715 = vmatpush1.bf16.msra.mxu0 %v537
    %716 = vmatprep.subr.bf16.mxu0 %v534
    %717 = vmatpush1.bf16.msra.mxu0 %v533
    %718 = vmatprep.subr.bf16.mxu0 %v530
    %719 = vmatpush1.bf16.msra.mxu0 %v529
    %720 = vmatprep.subr.bf16.mxu0 0
    %721 = vmatpush2.bf16.msra.mxu0 0
    %722 = vmatprep.subr.bf16.mxu0 0
    %723 = vmatpush2.bf16.msra.mxu0 0
    %724 = vmatprep.subr.bf16.mxu0 0
    %725 = vmatpush2.bf16.msra.mxu0 0
    %726 = vmatprep.subr.bf16.mxu0 0
    %727 = vmatpush2.bf16.msra.mxu0 0
    %728 = vmatprep.subr.bf16.mxu0 0
    %729 = vmatpush2.bf16.msra.mxu0 0
    %730 = vmatprep.subr.bf16.mxu0 0
    %731 = vmatpush2.bf16.msra.mxu0 0
    %732 = vmatprep.subr.bf16.mxu0 0
    %733 = vmatpush2.bf16.msra.mxu0 0
    %734 = vmatprep.subr.bf16.mxu0 0
    %735 = vmatpush2.bf16.msra.mxu0 0
    %736 = vmatprep.mubr.bf16.mxu0 0
    %737 = vmatmul.mubr.bf16.gmra.mxu0 %v703
    %v738 = vpop.f32.mrf.mxu0
    %v739 = vadd.f32 0.0, %v738
    %v740 = vpop.f32.mrf.mxu0
    %v741 = vadd.f32 0.0, %v740
    %v742 = vpop.f32.mrf.mxu0
    %v743 = vpop.f32.mrf.mxu0
    %744 = vdwg.mxu0
    %745 = vmatprep.subr.bf16.mxu0 %v560
    %746 = vmatpush1.bf16.msra.mxu0 %v559
    %747 = vmatprep.subr.bf16.mxu0 %v556
    %748 = vmatpush1.bf16.msra.mxu0 %v555
    %749 = vmatprep.subr.bf16.mxu0 %v552
    %750 = vmatpush1.bf16.msra.mxu0 %v551
    %751 = vmatprep.subr.bf16.mxu0 %v548
    %752 = vmatpush1.bf16.msra.mxu0 %v547
    %753 = vmatprep.subr.bf16.mxu0 %v544
    %754 = vmatpush1.bf16.msra.mxu0 %v543
    %755 = vmatprep.subr.bf16.mxu0 %v540
    %756 = vmatpush1.bf16.msra.mxu0 %v539
    %757 = vmatprep.subr.bf16.mxu0 %v536
    %758 = vmatpush1.bf16.msra.mxu0 %v535
    %759 = vmatprep.subr.bf16.mxu0 %v532
    %760 = vmatpush1.bf16.msra.mxu0 %v531
    %761 = vmatprep.subr.bf16.mxu0 0
    %762 = vmatpush2.bf16.msra.mxu0 0
    %763 = vmatprep.subr.bf16.mxu0 0
    %764 = vmatpush2.bf16.msra.mxu0 0
    %765 = vmatprep.subr.bf16.mxu0 0
    %766 = vmatpush2.bf16.msra.mxu0 0
    %767 = vmatprep.subr.bf16.mxu0 0
    %768 = vmatpush2.bf16.msra.mxu0 0
    %769 = vmatprep.subr.bf16.mxu0 0
    %770 = vmatpush2.bf16.msra.mxu0 0
    %771 = vmatprep.subr.bf16.mxu0 0
    %772 = vmatpush2.bf16.msra.mxu0 0
    %773 = vmatprep.subr.bf16.mxu0 0
    %774 = vmatpush2.bf16.msra.mxu0 0
    %775 = vmatprep.subr.bf16.mxu0 0
    %776 = vmatpush2.bf16.msra.mxu0 0
    %777 = vmatprep.mubr.bf16.mxu0 0
    %778 = vmatmul.mubr.bf16.gmra.mxu0 %v703
    %v779 = vpop.f32.mrf.mxu0
    %v780 = vadd.f32 0.0, %v779
    %v781 = vpop.f32.mrf.mxu0
    %v782 = vadd.f32 0.0, %v781
    %v783 = vpop.f32.mrf.mxu0
    %v784 = vpop.f32.mrf.mxu0
    %785 = vdwg.mxu0
    %v790 = vrot.slane %v739, 6
    %v791 = vrot.slane %v741, 6
    %v792 = vrot.slane %v780, 6
    %v793 = vrot.slane %v782, 6
    %v798 = vadd.f32 %v256, %v790
    %v799 = vadd.f32 %v257, %v791
    %v800 = vadd.f32 %v258, %v792
    %v801 = vadd.f32 %v259, %v793
    %v802 = vxor.u32 %v798, 2147483648
    %v803 = vxor.u32 %v799, 2147483648
    %v804 = vxor.u32 %v801, 2147483648
    %v805 = vmul.f32 %v802, 1.442695
    %v806 = vpow.pop %v805
    %v807 = vmul.f32 %v803, 1.442695
    %v808 = vpow.pop %v807
    %v809 = vmul.f32 %v804, 1.442695
    %v810 = vpow.pop %v809
    %v811 = vadd.f32 %v806, 1.0
    %v812 = vadd.f32 %v808, 1.0
    %v813 = vadd.f32 %v810, 1.0
    %v814 = vrcp.pop %v811
    %v815 = vmul.f32 1.0, %v814
    %v816 = vrcp.pop %v812
    %v817 = vmul.f32 1.0, %v816
    %v818 = vrcp.pop %v813
    %v819 = vmul.f32 1.0, %v818
    %v820 = vtanh.pop %v800
    %v822 = vrot.slane %v700, 6
    %v824 = vmul.f32 %v817, %v822
    %v825 = vmul.f32 %v815, %v820
    %v826 = vadd.f32 %v824, %v825
    %v827 = vtanh.pop %v826
    %v828 = vmul.f32 %v819, %v827
    %v830 = vlaneseq
    %v831 = vshrl.u32 %v830, 7
    %v832 = vsub.s32 0, %v831
    %v833 = vrot.slane %v430, %v832
    %v834 = vlaneseq
    %v835 = vshrl.u32 %v834, 7
    %v836 = vsub.s32 1, %v835
    %v837 = vrot.slane %v430, %v836
    %v838 = vlaneseq
    %v839 = vshrl.u32 %v838, 7
    %v840 = vsub.s32 2, %v839
    %v841 = vrot.slane %v430, %v840
    %v842 = vlaneseq
    %v843 = vshrl.u32 %v842, 7
    %v844 = vsub.s32 3, %v843
    %v845 = vrot.slane %v430, %v844
    %v914 = vunpack.c.l.b16 %v300
    %v915 = vunpack.c.h.b16 %v300
    %v916 = vunpack.c.l.b16 %v301
    %v917 = vunpack.c.h.b16 %v301
    %v918 = vunpack.c.l.b16 %v302
    %v919 = vunpack.c.h.b16 %v302
    %v920 = vunpack.c.l.b16 %v303
    %v921 = vunpack.c.h.b16 %v303
    %v922 = vunpack.c.l.b16 %v304
    %v923 = vunpack.c.h.b16 %v304
    %v924 = vunpack.c.l.b16 %v305
    %v925 = vunpack.c.h.b16 %v305
    %v926 = vunpack.c.l.b16 %v306
    %v927 = vunpack.c.h.b16 %v306
    %v928 = vunpack.c.l.b16 %v307
    %v929 = vunpack.c.h.b16 %v307
    %v930 = vunpack.c.l.b16 %v308
    %v931 = vunpack.c.h.b16 %v308
    %v932 = vunpack.c.l.b16 %v309
    %v933 = vunpack.c.h.b16 %v309
    %v934 = vunpack.c.l.b16 %v310
    %v935 = vunpack.c.h.b16 %v310
    %v936 = vunpack.c.l.b16 %v311
    %v937 = vunpack.c.h.b16 %v311
    %v938 = vunpack.c.l.b16 %v312
    %v939 = vunpack.c.h.b16 %v312
    %v940 = vunpack.c.l.b16 %v313
    %v941 = vunpack.c.h.b16 %v313
    %v942 = vunpack.c.l.b16 %v314
    %v943 = vunpack.c.h.b16 %v314
    %v944 = vunpack.c.l.b16 %v315
    %v945 = vunpack.c.h.b16 %v315
    %v946 = vunpack.c.l.b16 %v316
    %v947 = vunpack.c.h.b16 %v316
    %v948 = vunpack.c.l.b16 %v317
    %v949 = vunpack.c.h.b16 %v317
    %v950 = vunpack.c.l.b16 %v318
    %v951 = vunpack.c.h.b16 %v318
    %v952 = vunpack.c.l.b16 %v319
    %v953 = vunpack.c.h.b16 %v319
    %v954 = vunpack.c.l.b16 %v320
    %v955 = vunpack.c.h.b16 %v320
    %v956 = vunpack.c.l.b16 %v321
    %v957 = vunpack.c.h.b16 %v321
    %v958 = vunpack.c.l.b16 %v322
    %v959 = vunpack.c.h.b16 %v322
    %v960 = vunpack.c.l.b16 %v323
    %v961 = vunpack.c.h.b16 %v323
    %v962 = vunpack.c.l.b16 %v324
    %v963 = vunpack.c.h.b16 %v324
    %v964 = vunpack.c.l.b16 %v325
    %v965 = vunpack.c.h.b16 %v325
    %v966 = vunpack.c.l.b16 %v326
    %v967 = vunpack.c.h.b16 %v326
    %v968 = vunpack.c.l.b16 %v327
    %v969 = vunpack.c.h.b16 %v327
    %v970 = vunpack.c.l.b16 %v328
    %v971 = vunpack.c.h.b16 %v328
    %v972 = vunpack.c.l.b16 %v329
    %v973 = vunpack.c.h.b16 %v329
    %v974 = vunpack.c.l.b16 %v330
    %v975 = vunpack.c.h.b16 %v330
    %v976 = vunpack.c.l.b16 %v331
    %v977 = vunpack.c.h.b16 %v331
    %v978 = vunpack.c.l.b16 %v332
    %v979 = vunpack.c.h.b16 %v332
    %v980 = vunpack.c.l.b16 %v333
    %v981 = vunpack.c.h.b16 %v333
    %v982 = vunpack.c.l.b16 %v334
    %v983 = vunpack.c.h.b16 %v334
    %v984 = vunpack.c.l.b16 %v335
    %v985 = vunpack.c.h.b16 %v335
    %v986 = vunpack.c.l.b16 %v336
    %v987 = vunpack.c.h.b16 %v336
    %v988 = vunpack.c.l.b16 %v337
    %v989 = vunpack.c.h.b16 %v337
    %v990 = vunpack.c.l.b16 %v338
    %v991 = vunpack.c.h.b16 %v338
    %v992 = vunpack.c.l.b16 %v339
    %v993 = vunpack.c.h.b16 %v339
    %v994 = vunpack.c.l.b16 %v340
    %v995 = vunpack.c.h.b16 %v340
    %v996 = vunpack.c.l.b16 %v341
    %v997 = vunpack.c.h.b16 %v341
    %v998 = vunpack.c.l.b16 %v342
    %v999 = vunpack.c.h.b16 %v342
    %v1000 = vunpack.c.l.b16 %v343
    %v1001 = vunpack.c.h.b16 %v343
    %v1002 = vunpack.c.l.b16 %v344
    %v1003 = vunpack.c.h.b16 %v344
    %v1004 = vunpack.c.l.b16 %v345
    %v1005 = vunpack.c.h.b16 %v345
    %v1006 = vunpack.c.l.b16 %v346
    %v1007 = vunpack.c.h.b16 %v346
    %v1008 = vunpack.c.l.b16 %v347
    %v1009 = vunpack.c.h.b16 %v347
    %v1010 = vunpack.c.l.b16 %v348
    %v1011 = vunpack.c.h.b16 %v348
    %v1012 = vunpack.c.l.b16 %v349
    %v1013 = vunpack.c.h.b16 %v349
    %v1014 = vunpack.c.l.b16 %v350
    %v1015 = vunpack.c.h.b16 %v350
    %v1016 = vunpack.c.l.b16 %v351
    %v1017 = vunpack.c.h.b16 %v351
    %v1018 = vunpack.c.l.b16 %v352
    %v1019 = vunpack.c.h.b16 %v352
    %v1020 = vunpack.c.l.b16 %v353
    %v1021 = vunpack.c.h.b16 %v353
    %v1022 = vunpack.c.l.b16 %v354
    %v1023 = vunpack.c.h.b16 %v354
    %v1024 = vunpack.c.l.b16 %v355
    %v1025 = vunpack.c.h.b16 %v355
    %v1026 = vunpack.c.l.b16 %v356
    %v1027 = vunpack.c.h.b16 %v356
    %v1028 = vunpack.c.l.b16 %v357
    %v1029 = vunpack.c.h.b16 %v357
    %v1030 = vunpack.c.l.b16 %v358
    %v1031 = vunpack.c.h.b16 %v358
    %v1032 = vunpack.c.l.b16 %v359
    %v1033 = vunpack.c.h.b16 %v359
    %v1034 = vunpack.c.l.b16 %v360
    %v1035 = vunpack.c.h.b16 %v360
    %v1036 = vunpack.c.l.b16 %v361
    %v1037 = vunpack.c.h.b16 %v361
    %v1038 = vunpack.c.l.b16 %v362
    %v1039 = vunpack.c.h.b16 %v362
    %v1040 = vunpack.c.l.b16 %v363
    %v1041 = vunpack.c.h.b16 %v363
    %v1042 = vpack.c.b16 %v918, %v914
    %v1043 = vpack.c.b16 %v919, %v915
    %v1044 = vpack.c.b16 %v920, %v916
    %v1045 = vpack.c.b16 %v921, %v917
    %v1046 = vpack.c.b16 %v926, %v922
    %v1047 = vpack.c.b16 %v927, %v923
    %v1048 = vpack.c.b16 %v928, %v924
    %v1049 = vpack.c.b16 %v929, %v925
    %v1050 = vpack.c.b16 %v934, %v930
    %v1051 = vpack.c.b16 %v935, %v931
    %v1052 = vpack.c.b16 %v936, %v932
    %v1053 = vpack.c.b16 %v937, %v933
    %v1054 = vpack.c.b16 %v942, %v938
    %v1055 = vpack.c.b16 %v943, %v939
    %v1056 = vpack.c.b16 %v944, %v940
    %v1057 = vpack.c.b16 %v945, %v941
    %v1058 = vpack.c.b16 %v950, %v946
    %v1059 = vpack.c.b16 %v951, %v947
    %v1060 = vpack.c.b16 %v952, %v948
    %v1061 = vpack.c.b16 %v953, %v949
    %v1062 = vpack.c.b16 %v958, %v954
    %v1063 = vpack.c.b16 %v959, %v955
    %v1064 = vpack.c.b16 %v960, %v956
    %v1065 = vpack.c.b16 %v961, %v957
    %v1066 = vpack.c.b16 %v966, %v962
    %v1067 = vpack.c.b16 %v967, %v963
    %v1068 = vpack.c.b16 %v968, %v964
    %v1069 = vpack.c.b16 %v969, %v965
    %v1070 = vpack.c.b16 %v974, %v970
    %v1071 = vpack.c.b16 %v975, %v971
    %v1072 = vpack.c.b16 %v976, %v972
    %v1073 = vpack.c.b16 %v977, %v973
    %v1074 = vpack.c.b16 %v982, %v978
    %v1075 = vpack.c.b16 %v983, %v979
    %v1076 = vpack.c.b16 %v984, %v980
    %v1077 = vpack.c.b16 %v985, %v981
    %v1078 = vpack.c.b16 %v990, %v986
    %v1079 = vpack.c.b16 %v991, %v987
    %v1080 = vpack.c.b16 %v992, %v988
    %v1081 = vpack.c.b16 %v993, %v989
    %v1082 = vpack.c.b16 %v998, %v994
    %v1083 = vpack.c.b16 %v999, %v995
    %v1084 = vpack.c.b16 %v1000, %v996
    %v1085 = vpack.c.b16 %v1001, %v997
    %v1086 = vpack.c.b16 %v1006, %v1002
    %v1087 = vpack.c.b16 %v1007, %v1003
    %v1088 = vpack.c.b16 %v1008, %v1004
    %v1089 = vpack.c.b16 %v1009, %v1005
    %v1090 = vpack.c.b16 %v1014, %v1010
    %v1091 = vpack.c.b16 %v1015, %v1011
    %v1092 = vpack.c.b16 %v1016, %v1012
    %v1093 = vpack.c.b16 %v1017, %v1013
    %v1094 = vpack.c.b16 %v1022, %v1018
    %v1095 = vpack.c.b16 %v1023, %v1019
    %v1096 = vpack.c.b16 %v1024, %v1020
    %v1097 = vpack.c.b16 %v1025, %v1021
    %v1098 = vpack.c.b16 %v1030, %v1026
    %v1099 = vpack.c.b16 %v1031, %v1027
    %v1100 = vpack.c.b16 %v1032, %v1028
    %v1101 = vpack.c.b16 %v1033, %v1029
    %v1102 = vpack.c.b16 %v1038, %v1034
    %v1103 = vpack.c.b16 %v1039, %v1035
    %v1104 = vpack.c.b16 %v1040, %v1036
    %v1105 = vpack.c.b16 %v1041, %v1037
    %1170 = vmatprep.subr.bf16.mxu0 %v1071
    %1171 = vmatpush1.bf16.msra.mxu0 %v1070
    %1172 = vmatprep.subr.bf16.mxu0 %v1067
    %1173 = vmatpush1.bf16.msra.mxu0 %v1066
    %1174 = vmatprep.subr.bf16.mxu0 %v1063
    %1175 = vmatpush1.bf16.msra.mxu0 %v1062
    %1176 = vmatprep.subr.bf16.mxu0 %v1059
    %1177 = vmatpush1.bf16.msra.mxu0 %v1058
    %1178 = vmatprep.subr.bf16.mxu0 %v1055
    %1179 = vmatpush1.bf16.msra.mxu0 %v1054
    %1180 = vmatprep.subr.bf16.mxu0 %v1051
    %1181 = vmatpush1.bf16.msra.mxu0 %v1050
    %1182 = vmatprep.subr.bf16.mxu0 %v1047
    %1183 = vmatpush1.bf16.msra.mxu0 %v1046
    %1184 = vmatprep.subr.bf16.mxu0 %v1043
    %1185 = vmatpush1.bf16.msra.mxu0 %v1042
    %1186 = vmatprep.subr.bf16.mxu0 %v1103
    %1187 = vmatpush2.bf16.msra.mxu0 %v1102
    %1188 = vmatprep.subr.bf16.mxu0 %v1099
    %1189 = vmatpush2.bf16.msra.mxu0 %v1098
    %1190 = vmatprep.subr.bf16.mxu0 %v1095
    %1191 = vmatpush2.bf16.msra.mxu0 %v1094
    %1192 = vmatprep.subr.bf16.mxu0 %v1091
    %1193 = vmatpush2.bf16.msra.mxu0 %v1090
    %1194 = vmatprep.subr.bf16.mxu0 %v1087
    %1195 = vmatpush2.bf16.msra.mxu0 %v1086
    %1196 = vmatprep.subr.bf16.mxu0 %v1083
    %1197 = vmatpush2.bf16.msra.mxu0 %v1082
    %1198 = vmatprep.subr.bf16.mxu0 %v1079
    %1199 = vmatpush2.bf16.msra.mxu0 %v1078
    %1200 = vmatprep.subr.bf16.mxu0 %v1075
    %1201 = vmatpush2.bf16.msra.mxu0 %v1074
    %1202 = vmatprep.mubr.bf16.mxu0 0
    %1203 = vmatmul.mubr.bf16.gmra.mxu0 %v703
    %v1204 = vpop.f32.mrf.mxu0
    %v1205 = vadd.f32 %v833, %v1204
    %v1206 = vpop.f32.mrf.mxu0
    %v1207 = vadd.f32 %v837, %v1206
    %v1208 = vpop.f32.mrf.mxu0
    %v1209 = vpop.f32.mrf.mxu0
    %1210 = vdwg.mxu0
    %1211 = vmatprep.subr.bf16.mxu0 %v1073
    %1212 = vmatpush1.bf16.msra.mxu0 %v1072
    %1213 = vmatprep.subr.bf16.mxu0 %v1069
    %1214 = vmatpush1.bf16.msra.mxu0 %v1068
    %1215 = vmatprep.subr.bf16.mxu0 %v1065
    %1216 = vmatpush1.bf16.msra.mxu0 %v1064
    %1217 = vmatprep.subr.bf16.mxu0 %v1061
    %1218 = vmatpush1.bf16.msra.mxu0 %v1060
    %1219 = vmatprep.subr.bf16.mxu0 %v1057
    %1220 = vmatpush1.bf16.msra.mxu0 %v1056
    %1221 = vmatprep.subr.bf16.mxu0 %v1053
    %1222 = vmatpush1.bf16.msra.mxu0 %v1052
    %1223 = vmatprep.subr.bf16.mxu0 %v1049
    %1224 = vmatpush1.bf16.msra.mxu0 %v1048
    %1225 = vmatprep.subr.bf16.mxu0 %v1045
    %1226 = vmatpush1.bf16.msra.mxu0 %v1044
    %1227 = vmatprep.subr.bf16.mxu0 %v1105
    %1228 = vmatpush2.bf16.msra.mxu0 %v1104
    %1229 = vmatprep.subr.bf16.mxu0 %v1101
    %1230 = vmatpush2.bf16.msra.mxu0 %v1100
    %1231 = vmatprep.subr.bf16.mxu0 %v1097
    %1232 = vmatpush2.bf16.msra.mxu0 %v1096
    %1233 = vmatprep.subr.bf16.mxu0 %v1093
    %1234 = vmatpush2.bf16.msra.mxu0 %v1092
    %1235 = vmatprep.subr.bf16.mxu0 %v1089
    %1236 = vmatpush2.bf16.msra.mxu0 %v1088
    %1237 = vmatprep.subr.bf16.mxu0 %v1085
    %1238 = vmatpush2.bf16.msra.mxu0 %v1084
    %1239 = vmatprep.subr.bf16.mxu0 %v1081
    %1240 = vmatpush2.bf16.msra.mxu0 %v1080
    %1241 = vmatprep.subr.bf16.mxu0 %v1077
    %1242 = vmatpush2.bf16.msra.mxu0 %v1076
    %1243 = vmatprep.mubr.bf16.mxu0 0
    %1244 = vmatmul.mubr.bf16.gmra.mxu0 %v703
    %v1245 = vpop.f32.mrf.mxu0
    %v1246 = vadd.f32 %v841, %v1245
    %v1247 = vpop.f32.mrf.mxu0
    %v1248 = vadd.f32 %v845, %v1247
    %v1249 = vpop.f32.mrf.mxu0
    %v1250 = vpop.f32.mrf.mxu0
    %1251 = vdwg.mxu0
    %v1252 = vxor.u32 %v1205, 2147483648
    %v1253 = vxor.u32 %v1207, 2147483648
    %v1254 = vxor.u32 %v1248, 2147483648
    %v1255 = vmul.f32 %v1252, 1.442695
    %v1256 = vpow.pop %v1255
    %v1257 = vmul.f32 %v1253, 1.442695
    %v1258 = vpow.pop %v1257
    %v1259 = vmul.f32 %v1254, 1.442695
    %v1260 = vpow.pop %v1259
    %v1261 = vadd.f32 %v1256, 1.0
    %v1262 = vadd.f32 %v1258, 1.0
    %v1263 = vadd.f32 %v1260, 1.0
    %v1264 = vrcp.pop %v1261
    %v1265 = vmul.f32 1.0, %v1264
    %v1266 = vrcp.pop %v1262
    %v1267 = vmul.f32 1.0, %v1266
    %v1268 = vrcp.pop %v1263
    %v1269 = vmul.f32 1.0, %v1268
    %v1270 = vtanh.pop %v1246
    %v1271 = vmul.f32 %v1267, 0.0
    %v1272 = vmul.f32 %v1265, %v1270
    %v1273 = vadd.f32 %v1271, %v1272
    %v1274 = vtanh.pop %v1273
    %v1275 = vmul.f32 %v1269, %v1274
    %v1276 = vpack.c.bf16 %v828, %v828
    %v1277 = vpack.c.bf16 %v1275, %v1275
    %v1279 = vrot.slane %v1276, 1
    %1281 = vmatprep.subr.bf16.mxu0 %v558
    %1282 = vmatpush1.bf16.msra.mxu0 %v557
    %1283 = vmatprep.subr.bf16.mxu0 %v554
    %1284 = vmatpush1.bf16.msra.mxu0 %v553
    %1285 = vmatprep.subr.bf16.mxu0 %v550
    %1286 = vmatpush1.bf16.msra.mxu0 %v549
    %1287 = vmatprep.subr.bf16.mxu0 %v546
    %1288 = vmatpush1.bf16.msra.mxu0 %v545
    %1289 = vmatprep.subr.bf16.mxu0 %v542
    %1290 = vmatpush1.bf16.msra.mxu0 %v541
    %1291 = vmatprep.subr.bf16.mxu0 %v538
    %1292 = vmatpush1.bf16.msra.mxu0 %v537
    %1293 = vmatprep.subr.bf16.mxu0 %v534
    %1294 = vmatpush1.bf16.msra.mxu0 %v533
    %1295 = vmatprep.subr.bf16.mxu0 %v530
    %1296 = vmatpush1.bf16.msra.mxu0 %v529
    %1297 = vmatprep.subr.bf16.mxu0 0
    %1298 = vmatpush2.bf16.msra.mxu0 0
    %1299 = vmatprep.subr.bf16.mxu0 0
    %1300 = vmatpush2.bf16.msra.mxu0 0
    %1301 = vmatprep.subr.bf16.mxu0 0
    %1302 = vmatpush2.bf16.msra.mxu0 0
    %1303 = vmatprep.subr.bf16.mxu0 0
    %1304 = vmatpush2.bf16.msra.mxu0 0
    %1305 = vmatprep.subr.bf16.mxu0 0
    %1306 = vmatpush2.bf16.msra.mxu0 0
    %1307 = vmatprep.subr.bf16.mxu0 0
    %1308 = vmatpush2.bf16.msra.mxu0 0
    %1309 = vmatprep.subr.bf16.mxu0 0
    %1310 = vmatpush2.bf16.msra.mxu0 0
    %1311 = vmatprep.subr.bf16.mxu0 0
    %1312 = vmatpush2.bf16.msra.mxu0 0
    %1313 = vmatprep.mubr.bf16.mxu0 0
    %1314 = vmatmul.mubr.bf16.gmra.mxu0 %v1279
    %v1315 = vpop.f32.mrf.mxu0
    %v1316 = vadd.f32 0.0, %v1315
    %v1317 = vpop.f32.mrf.mxu0
    %v1318 = vadd.f32 0.0, %v1317
    %v1319 = vpop.f32.mrf.mxu0
    %v1320 = vpop.f32.mrf.mxu0
    %1321 = vdwg.mxu0
    %1322 = vmatprep.subr.bf16.mxu0 %v560
    %1323 = vmatpush1.bf16.msra.mxu0 %v559
    %1324 = vmatprep.subr.bf16.mxu0 %v556
    %1325 = vmatpush1.bf16.msra.mxu0 %v555
    %1326 = vmatprep.subr.bf16.mxu0 %v552
    %1327 = vmatpush1.bf16.msra.mxu0 %v551
    %1328 = vmatprep.subr.bf16.mxu0 %v548
    %1329 = vmatpush1.bf16.msra.mxu0 %v547
    %1330 = vmatprep.subr.bf16.mxu0 %v544
    %1331 = vmatpush1.bf16.msra.mxu0 %v543
    %1332 = vmatprep.subr.bf16.mxu0 %v540
    %1333 = vmatpush1.bf16.msra.mxu0 %v539
    %1334 = vmatprep.subr.bf16.mxu0 %v536
    %1335 = vmatpush1.bf16.msra.mxu0 %v535
    %1336 = vmatprep.subr.bf16.mxu0 %v532
    %1337 = vmatpush1.bf16.msra.mxu0 %v531
    %1338 = vmatprep.subr.bf16.mxu0 0
    %1339 = vmatpush2.bf16.msra.mxu0 0
    %1340 = vmatprep.subr.bf16.mxu0 0
    %1341 = vmatpush2.bf16.msra.mxu0 0
    %1342 = vmatprep.subr.bf16.mxu0 0
    %1343 = vmatpush2.bf16.msra.mxu0 0
    %1344 = vmatprep.subr.bf16.mxu0 0
    %1345 = vmatpush2.bf16.msra.mxu0 0
    %1346 = vmatprep.subr.bf16.mxu0 0
    %1347 = vmatpush2.bf16.msra.mxu0 0
    %1348 = vmatprep.subr.bf16.mxu0 0
    %1349 = vmatpush2.bf16.msra.mxu0 0
    %1350 = vmatprep.subr.bf16.mxu0 0
    %1351 = vmatpush2.bf16.msra.mxu0 0
    %1352 = vmatprep.subr.bf16.mxu0 0
    %1353 = vmatpush2.bf16.msra.mxu0 0
    %1354 = vmatprep.mubr.bf16.mxu0 0
    %1355 = vmatmul.mubr.bf16.gmra.mxu0 %v1279
    %v1356 = vpop.f32.mrf.mxu0
    %v1357 = vadd.f32 0.0, %v1356
    %v1358 = vpop.f32.mrf.mxu0
    %v1359 = vadd.f32 0.0, %v1358
    %v1360 = vpop.f32.mrf.mxu0
    %v1361 = vpop.f32.mrf.mxu0
    %1362 = vdwg.mxu0
    %v1367 = vrot.slane %v1316, 4
    %v1368 = vrot.slane %v1318, 4
    %v1369 = vrot.slane %v1357, 4
    %v1370 = vrot.slane %v1359, 4
    %v1375 = vadd.f32 %v256, %v1367
    %v1376 = vadd.f32 %v257, %v1368
    %v1377 = vadd.f32 %v258, %v1369
    %v1378 = vadd.f32 %v259, %v1370
    %v1379 = vxor.u32 %v1375, 2147483648
    %v1380 = vxor.u32 %v1376, 2147483648
    %v1381 = vxor.u32 %v1378, 2147483648
    %v1382 = vmul.f32 %v1379, 1.442695
    %v1383 = vpow.pop %v1382
    %v1384 = vmul.f32 %v1380, 1.442695
    %v1385 = vpow.pop %v1384
    %v1386 = vmul.f32 %v1381, 1.442695
    %v1387 = vpow.pop %v1386
    %v1388 = vadd.f32 %v1383, 1.0
    %v1389 = vadd.f32 %v1385, 1.0
    %v1390 = vadd.f32 %v1387, 1.0
    %v1391 = vrcp.pop %v1388
    %v1392 = vmul.f32 1.0, %v1391
    %v1393 = vrcp.pop %v1389
    %v1394 = vmul.f32 1.0, %v1393
    %v1395 = vrcp.pop %v1390
    %v1396 = vmul.f32 1.0, %v1395
    %v1397 = vtanh.pop %v1377
    %v1399 = vrot.slane %v826, 6
    %v1401 = vmul.f32 %v1394, %v1399
    %v1402 = vmul.f32 %v1392, %v1397
    %v1403 = vadd.f32 %v1401, %v1402
    %v1404 = vtanh.pop %v1403
    %v1405 = vmul.f32 %v1396, %v1404
    %v1407 = vrot.slane %v1277, 7
    %v1408 = vrot.slane %v1407, 1
    %1410 = vmatprep.subr.bf16.mxu0 %v1071
    %1411 = vmatpush1.bf16.msra.mxu0 %v1070
    %1412 = vmatprep.subr.bf16.mxu0 %v1067
    %1413 = vmatpush1.bf16.msra.mxu0 %v1066
    %1414 = vmatprep.subr.bf16.mxu0 %v1063
    %1415 = vmatpush1.bf16.msra.mxu0 %v1062
    %1416 = vmatprep.subr.bf16.mxu0 %v1059
    %1417 = vmatpush1.bf16.msra.mxu0 %v1058
    %1418 = vmatprep.subr.bf16.mxu0 %v1055
    %1419 = vmatpush1.bf16.msra.mxu0 %v1054
    %1420 = vmatprep.subr.bf16.mxu0 %v1051
    %1421 = vmatpush1.bf16.msra.mxu0 %v1050
    %1422 = vmatprep.subr.bf16.mxu0 %v1047
    %1423 = vmatpush1.bf16.msra.mxu0 %v1046
    %1424 = vmatprep.subr.bf16.mxu0 %v1043
    %1425 = vmatpush1.bf16.msra.mxu0 %v1042
    %1426 = vmatprep.subr.bf16.mxu0 %v1103
    %1427 = vmatpush2.bf16.msra.mxu0 %v1102
    %1428 = vmatprep.subr.bf16.mxu0 %v1099
    %1429 = vmatpush2.bf16.msra.mxu0 %v1098
    %1430 = vmatprep.subr.bf16.mxu0 %v1095
    %1431 = vmatpush2.bf16.msra.mxu0 %v1094
    %1432 = vmatprep.subr.bf16.mxu0 %v1091
    %1433 = vmatpush2.bf16.msra.mxu0 %v1090
    %1434 = vmatprep.subr.bf16.mxu0 %v1087
    %1435 = vmatpush2.bf16.msra.mxu0 %v1086
    %1436 = vmatprep.subr.bf16.mxu0 %v1083
    %1437 = vmatpush2.bf16.msra.mxu0 %v1082
    %1438 = vmatprep.subr.bf16.mxu0 %v1079
    %1439 = vmatpush2.bf16.msra.mxu0 %v1078
    %1440 = vmatprep.subr.bf16.mxu0 %v1075
    %1441 = vmatpush2.bf16.msra.mxu0 %v1074
    %1442 = vmatprep.mubr.bf16.mxu0 %v1408
    %1443 = vmatmul.mubr.bf16.gmra.mxu0 %v1279
    %v1444 = vpop.f32.mrf.mxu0
    %v1445 = vadd.f32 %v833, %v1444
    %v1446 = vpop.f32.mrf.mxu0
    %v1447 = vadd.f32 %v837, %v1446
    %v1448 = vpop.f32.mrf.mxu0
    %v1449 = vpop.f32.mrf.mxu0
    %1450 = vdwg.mxu0
    %1451 = vmatprep.subr.bf16.mxu0 %v1073
    %1452 = vmatpush1.bf16.msra.mxu0 %v1072
    %1453 = vmatprep.subr.bf16.mxu0 %v1069
    %1454 = vmatpush1.bf16.msra.mxu0 %v1068
    %1455 = vmatprep.subr.bf16.mxu0 %v1065
    %1456 = vmatpush1.bf16.msra.mxu0 %v1064
    %1457 = vmatprep.subr.bf16.mxu0 %v1061
    %1458 = vmatpush1.bf16.msra.mxu0 %v1060
    %1459 = vmatprep.subr.bf16.mxu0 %v1057
    %1460 = vmatpush1.bf16.msra.mxu0 %v1056
    %1461 = vmatprep.subr.bf16.mxu0 %v1053
    %1462 = vmatpush1.bf16.msra.mxu0 %v1052
    %1463 = vmatprep.subr.bf16.mxu0 %v1049
    %1464 = vmatpush1.bf16.msra.mxu0 %v1048
    %1465 = vmatprep.subr.bf16.mxu0 %v1045
    %1466 = vmatpush1.bf16.msra.mxu0 %v1044
    %1467 = vmatprep.subr.bf16.mxu0 %v1105
    %1468 = vmatpush2.bf16.msra.mxu0 %v1104
    %1469 = vmatprep.subr.bf16.mxu0 %v1101
    %1470 = vmatpush2.bf16.msra.mxu0 %v1100
    %1471 = vmatprep.subr.bf16.mxu0 %v1097
    %1472 = vmatpush2.bf16.msra.mxu0 %v1096
    %1473 = vmatprep.subr.bf16.mxu0 %v1093
    %1474 = vmatpush2.bf16.msra.mxu0 %v1092
    %1475 = vmatprep.subr.bf16.mxu0 %v1089
    %1476 = vmatpush2.bf16.msra.mxu0 %v1088
    %1477 = vmatprep.subr.bf16.mxu0 %v1085
    %1478 = vmatpush2.bf16.msra.mxu0 %v1084
    %1479 = vmatprep.subr.bf16.mxu0 %v1081
    %1480 = vmatpush2.bf16.msra.mxu0 %v1080
    %1481 = vmatprep.subr.bf16.mxu0 %v1077
    %1482 = vmatpush2.bf16.msra.mxu0 %v1076
    %1483 = vmatprep.mubr.bf16.mxu0 %v1408
    %1484 = vmatmul.mubr.bf16.gmra.mxu0 %v1279
    %v1485 = vpop.f32.mrf.mxu0
    %v1486 = vadd.f32 %v841, %v1485
    %v1487 = vpop.f32.mrf.mxu0
    %v1488 = vadd.f32 %v845, %v1487
    %v1489 = vpop.f32.mrf.mxu0
    %v1490 = vpop.f32.mrf.mxu0
    %1491 = vdwg.mxu0
    %v1492 = vxor.u32 %v1445, 2147483648
    %v1493 = vxor.u32 %v1447, 2147483648
    %v1494 = vxor.u32 %v1488, 2147483648
    %v1495 = vmul.f32 %v1492, 1.442695
    %v1496 = vpow.pop %v1495
    %v1497 = vmul.f32 %v1493, 1.442695
    %v1498 = vpow.pop %v1497
    %v1499 = vmul.f32 %v1494, 1.442695
    %v1500 = vpow.pop %v1499
    %v1501 = vadd.f32 %v1496, 1.0
    %v1502 = vadd.f32 %v1498, 1.0
    %v1503 = vadd.f32 %v1500, 1.0
    %v1504 = vrcp.pop %v1501
    %v1505 = vmul.f32 1.0, %v1504
    %v1506 = vrcp.pop %v1502
    %v1507 = vmul.f32 1.0, %v1506
    %v1508 = vrcp.pop %v1503
    %v1509 = vmul.f32 1.0, %v1508
    %v1510 = vtanh.pop %v1486
    %v1511 = vmul.f32 %v1507, %v1273
    %v1512 = vmul.f32 %v1505, %v1510
    %v1513 = vadd.f32 %v1511, %v1512
    %v1514 = vtanh.pop %v1513
    %v1515 = vmul.f32 %v1509, %v1514
    %v1517 = vlaneseq
    %v1518 = vshrl.u32 %v1517, 7
    %v1519 = vsub.s32 0, %v1518
    %v1520 = vrot.slane %v432, %v1519
    %v1521 = vlaneseq
    %v1522 = vshrl.u32 %v1521, 7
    %v1523 = vsub.s32 1, %v1522
    %v1524 = vrot.slane %v432, %v1523
    %v1525 = vlaneseq
    %v1526 = vshrl.u32 %v1525, 7
    %v1527 = vsub.s32 2, %v1526
    %v1528 = vrot.slane %v432, %v1527
    %v1529 = vlaneseq
    %v1530 = vshrl.u32 %v1529, 7
    %v1531 = vsub.s32 3, %v1530
    %v1532 = vrot.slane %v432, %v1531
    %v1601 = vunpack.c.l.b16 %v365
    %v1602 = vunpack.c.h.b16 %v365
    %v1603 = vunpack.c.l.b16 %v366
    %v1604 = vunpack.c.h.b16 %v366
    %v1605 = vunpack.c.l.b16 %v367
    %v1606 = vunpack.c.h.b16 %v367
    %v1607 = vunpack.c.l.b16 %v368
    %v1608 = vunpack.c.h.b16 %v368
    %v1609 = vunpack.c.l.b16 %v369
    %v1610 = vunpack.c.h.b16 %v369
    %v1611 = vunpack.c.l.b16 %v370
    %v1612 = vunpack.c.h.b16 %v370
    %v1613 = vunpack.c.l.b16 %v371
    %v1614 = vunpack.c.h.b16 %v371
    %v1615 = vunpack.c.l.b16 %v372
    %v1616 = vunpack.c.h.b16 %v372
    %v1617 = vunpack.c.l.b16 %v373
    %v1618 = vunpack.c.h.b16 %v373
    %v1619 = vunpack.c.l.b16 %v374
    %v1620 = vunpack.c.h.b16 %v374
    %v1621 = vunpack.c.l.b16 %v375
    %v1622 = vunpack.c.h.b16 %v375
    %v1623 = vunpack.c.l.b16 %v376
    %v1624 = vunpack.c.h.b16 %v376
    %v1625 = vunpack.c.l.b16 %v377
    %v1626 = vunpack.c.h.b16 %v377
    %v1627 = vunpack.c.l.b16 %v378
    %v1628 = vunpack.c.h.b16 %v378
    %v1629 = vunpack.c.l.b16 %v379
    %v1630 = vunpack.c.h.b16 %v379
    %v1631 = vunpack.c.l.b16 %v380
    %v1632 = vunpack.c.h.b16 %v380
    %v1633 = vunpack.c.l.b16 %v381
    %v1634 = vunpack.c.h.b16 %v381
    %v1635 = vunpack.c.l.b16 %v382
    %v1636 = vunpack.c.h.b16 %v382
    %v1637 = vunpack.c.l.b16 %v383
    %v1638 = vunpack.c.h.b16 %v383
    %v1639 = vunpack.c.l.b16 %v384
    %v1640 = vunpack.c.h.b16 %v384
    %v1641 = vunpack.c.l.b16 %v385
    %v1642 = vunpack.c.h.b16 %v385
    %v1643 = vunpack.c.l.b16 %v386
    %v1644 = vunpack.c.h.b16 %v386
    %v1645 = vunpack.c.l.b16 %v387
    %v1646 = vunpack.c.h.b16 %v387
    %v1647 = vunpack.c.l.b16 %v388
    %v1648 = vunpack.c.h.b16 %v388
    %v1649 = vunpack.c.l.b16 %v389
    %v1650 = vunpack.c.h.b16 %v389
    %v1651 = vunpack.c.l.b16 %v390
    %v1652 = vunpack.c.h.b16 %v390
    %v1653 = vunpack.c.l.b16 %v391
    %v1654 = vunpack.c.h.b16 %v391
    %v1655 = vunpack.c.l.b16 %v392
    %v1656 = vunpack.c.h.b16 %v392
    %v1657 = vunpack.c.l.b16 %v393
    %v1658 = vunpack.c.h.b16 %v393
    %v1659 = vunpack.c.l.b16 %v394
    %v1660 = vunpack.c.h.b16 %v394
    %v1661 = vunpack.c.l.b16 %v395
    %v1662 = vunpack.c.h.b16 %v395
    %v1663 = vunpack.c.l.b16 %v396
    %v1664 = vunpack.c.h.b16 %v396
    %v1665 = vunpack.c.l.b16 %v397
    %v1666 = vunpack.c.h.b16 %v397
    %v1667 = vunpack.c.l.b16 %v398
    %v1668 = vunpack.c.h.b16 %v398
    %v1669 = vunpack.c.l.b16 %v399
    %v1670 = vunpack.c.h.b16 %v399
    %v1671 = vunpack.c.l.b16 %v400
    %v1672 = vunpack.c.h.b16 %v400
    %v1673 = vunpack.c.l.b16 %v401
    %v1674 = vunpack.c.h.b16 %v401
    %v1675 = vunpack.c.l.b16 %v402
    %v1676 = vunpack.c.h.b16 %v402
    %v1677 = vunpack.c.l.b16 %v403
    %v1678 = vunpack.c.h.b16 %v403
    %v1679 = vunpack.c.l.b16 %v404
    %v1680 = vunpack.c.h.b16 %v404
    %v1681 = vunpack.c.l.b16 %v405
    %v1682 = vunpack.c.h.b16 %v405
    %v1683 = vunpack.c.l.b16 %v406
    %v1684 = vunpack.c.h.b16 %v406
    %v1685 = vunpack.c.l.b16 %v407
    %v1686 = vunpack.c.h.b16 %v407
    %v1687 = vunpack.c.l.b16 %v408
    %v1688 = vunpack.c.h.b16 %v408
    %v1689 = vunpack.c.l.b16 %v409
    %v1690 = vunpack.c.h.b16 %v409
    %v1691 = vunpack.c.l.b16 %v410
    %v1692 = vunpack.c.h.b16 %v410
    %v1693 = vunpack.c.l.b16 %v411
    %v1694 = vunpack.c.h.b16 %v411
    %v1695 = vunpack.c.l.b16 %v412
    %v1696 = vunpack.c.h.b16 %v412
    %v1697 = vunpack.c.l.b16 %v413
    %v1698 = vunpack.c.h.b16 %v413
    %v1699 = vunpack.c.l.b16 %v414
    %v1700 = vunpack.c.h.b16 %v414
    %v1701 = vunpack.c.l.b16 %v415
    %v1702 = vunpack.c.h.b16 %v415
    %v1703 = vunpack.c.l.b16 %v416
    %v1704 = vunpack.c.h.b16 %v416
    %v1705 = vunpack.c.l.b16 %v417
    %v1706 = vunpack.c.h.b16 %v417
    %v1707 = vunpack.c.l.b16 %v418
    %v1708 = vunpack.c.h.b16 %v418
    %v1709 = vunpack.c.l.b16 %v419
    %v1710 = vunpack.c.h.b16 %v419
    %v1711 = vunpack.c.l.b16 %v420
    %v1712 = vunpack.c.h.b16 %v420
    %v1713 = vunpack.c.l.b16 %v421
    %v1714 = vunpack.c.h.b16 %v421
    %v1715 = vunpack.c.l.b16 %v422
    %v1716 = vunpack.c.h.b16 %v422
    %v1717 = vunpack.c.l.b16 %v423
    %v1718 = vunpack.c.h.b16 %v423
    %v1719 = vunpack.c.l.b16 %v424
    %v1720 = vunpack.c.h.b16 %v424
    %v1721 = vunpack.c.l.b16 %v425
    %v1722 = vunpack.c.h.b16 %v425
    %v1723 = vunpack.c.l.b16 %v426
    %v1724 = vunpack.c.h.b16 %v426
    %v1725 = vunpack.c.l.b16 %v427
    %v1726 = vunpack.c.h.b16 %v427
    %v1727 = vunpack.c.l.b16 %v428
    %v1728 = vunpack.c.h.b16 %v428
    %v1729 = vpack.c.b16 %v1605, %v1601
    %v1730 = vpack.c.b16 %v1606, %v1602
    %v1731 = vpack.c.b16 %v1607, %v1603
    %v1732 = vpack.c.b16 %v1608, %v1604
    %v1733 = vpack.c.b16 %v1613, %v1609
    %v1734 = vpack.c.b16 %v1614, %v1610
    %v1735 = vpack.c.b16 %v1615, %v1611
    %v1736 = vpack.c.b16 %v1616, %v1612
    %v1737 = vpack.c.b16 %v1621, %v1617
    %v1738 = vpack.c.b16 %v1622, %v1618
    %v1739 = vpack.c.b16 %v1623, %v1619
    %v1740 = vpack.c.b16 %v1624, %v1620
    %v1741 = vpack.c.b16 %v1629, %v1625
    %v1742 = vpack.c.b16 %v1630, %v1626
    %v1743 = vpack.c.b16 %v1631, %v1627
    %v1744 = vpack.c.b16 %v1632, %v1628
    %v1745 = vpack.c.b16 %v1637, %v1633
    %v1746 = vpack.c.b16 %v1638, %v1634
    %v1747 = vpack.c.b16 %v1639, %v1635
    %v1748 = vpack.c.b16 %v1640, %v1636
    %v1749 = vpack.c.b16 %v1645, %v1641
    %v1750 = vpack.c.b16 %v1646, %v1642
    %v1751 = vpack.c.b16 %v1647, %v1643
    %v1752 = vpack.c.b16 %v1648, %v1644
    %v1753 = vpack.c.b16 %v1653, %v1649
    %v1754 = vpack.c.b16 %v1654, %v1650
    %v1755 = vpack.c.b16 %v1655, %v1651
    %v1756 = vpack.c.b16 %v1656, %v1652
    %v1757 = vpack.c.b16 %v1661, %v1657
    %v1758 = vpack.c.b16 %v1662, %v1658
    %v1759 = vpack.c.b16 %v1663, %v1659
    %v1760 = vpack.c.b16 %v1664, %v1660
    %v1761 = vpack.c.b16 %v1669, %v1665
    %v1762 = vpack.c.b16 %v1670, %v1666
    %v1763 = vpack.c.b16 %v1671, %v1667
    %v1764 = vpack.c.b16 %v1672, %v1668
    %v1765 = vpack.c.b16 %v1677, %v1673
    %v1766 = vpack.c.b16 %v1678, %v1674
    %v1767 = vpack.c.b16 %v1679, %v1675
    %v1768 = vpack.c.b16 %v1680, %v1676
    %v1769 = vpack.c.b16 %v1685, %v1681
    %v1770 = vpack.c.b16 %v1686, %v1682
    %v1771 = vpack.c.b16 %v1687, %v1683
    %v1772 = vpack.c.b16 %v1688, %v1684
    %v1773 = vpack.c.b16 %v1693, %v1689
    %v1774 = vpack.c.b16 %v1694, %v1690
    %v1775 = vpack.c.b16 %v1695, %v1691
    %v1776 = vpack.c.b16 %v1696, %v1692
    %v1777 = vpack.c.b16 %v1701, %v1697
    %v1778 = vpack.c.b16 %v1702, %v1698
    %v1779 = vpack.c.b16 %v1703, %v1699
    %v1780 = vpack.c.b16 %v1704, %v1700
    %v1781 = vpack.c.b16 %v1709, %v1705
    %v1782 = vpack.c.b16 %v1710, %v1706
    %v1783 = vpack.c.b16 %v1711, %v1707
    %v1784 = vpack.c.b16 %v1712, %v1708
    %v1785 = vpack.c.b16 %v1717, %v1713
    %v1786 = vpack.c.b16 %v1718, %v1714
    %v1787 = vpack.c.b16 %v1719, %v1715
    %v1788 = vpack.c.b16 %v1720, %v1716
    %v1789 = vpack.c.b16 %v1725, %v1721
    %v1790 = vpack.c.b16 %v1726, %v1722
    %v1791 = vpack.c.b16 %v1727, %v1723
    %v1792 = vpack.c.b16 %v1728, %v1724
    %1857 = vmatprep.subr.bf16.mxu0 %v1758
    %1858 = vmatpush1.bf16.msra.mxu0 %v1757
    %1859 = vmatprep.subr.bf16.mxu0 %v1754
    %1860 = vmatpush1.bf16.msra.mxu0 %v1753
    %1861 = vmatprep.subr.bf16.mxu0 %v1750
    %1862 = vmatpush1.bf16.msra.mxu0 %v1749
    %1863 = vmatprep.subr.bf16.mxu0 %v1746
    %1864 = vmatpush1.bf16.msra.mxu0 %v1745
    %1865 = vmatprep.subr.bf16.mxu0 %v1742
    %1866 = vmatpush1.bf16.msra.mxu0 %v1741
    %1867 = vmatprep.subr.bf16.mxu0 %v1738
    %1868 = vmatpush1.bf16.msra.mxu0 %v1737
    %1869 = vmatprep.subr.bf16.mxu0 %v1734
    %1870 = vmatpush1.bf16.msra.mxu0 %v1733
    %1871 = vmatprep.subr.bf16.mxu0 %v1730
    %1872 = vmatpush1.bf16.msra.mxu0 %v1729
    %1873 = vmatprep.subr.bf16.mxu0 %v1790
    %1874 = vmatpush2.bf16.msra.mxu0 %v1789
    %1875 = vmatprep.subr.bf16.mxu0 %v1786
    %1876 = vmatpush2.bf16.msra.mxu0 %v1785
    %1877 = vmatprep.subr.bf16.mxu0 %v1782
    %1878 = vmatpush2.bf16.msra.mxu0 %v1781
    %1879 = vmatprep.subr.bf16.mxu0 %v1778
    %1880 = vmatpush2.bf16.msra.mxu0 %v1777
    %1881 = vmatprep.subr.bf16.mxu0 %v1774
    %1882 = vmatpush2.bf16.msra.mxu0 %v1773
    %1883 = vmatprep.subr.bf16.mxu0 %v1770
    %1884 = vmatpush2.bf16.msra.mxu0 %v1769
    %1885 = vmatprep.subr.bf16.mxu0 %v1766
    %1886 = vmatpush2.bf16.msra.mxu0 %v1765
    %1887 = vmatprep.subr.bf16.mxu0 %v1762
    %1888 = vmatpush2.bf16.msra.mxu0 %v1761
    %1889 = vmatprep.mubr.bf16.mxu0 0
    %1890 = vmatmul.mubr.bf16.gmra.mxu0 %v1277
    %v1891 = vpop.f32.mrf.mxu0
    %v1892 = vadd.f32 %v1520, %v1891
    %v1893 = vpop.f32.mrf.mxu0
    %v1894 = vadd.f32 %v1524, %v1893
    %v1895 = vpop.f32.mrf.mxu0
    %v1896 = vpop.f32.mrf.mxu0
    %1897 = vdwg.mxu0
    %1898 = vmatprep.subr.bf16.mxu0 %v1760
    %1899 = vmatpush1.bf16.msra.mxu0 %v1759
    %1900 = vmatprep.subr.bf16.mxu0 %v1756
    %1901 = vmatpush1.bf16.msra.mxu0 %v1755
    %1902 = vmatprep.subr.bf16.mxu0 %v1752
    %1903 = vmatpush1.bf16.msra.mxu0 %v1751
    %1904 = vmatprep.subr.bf16.mxu0 %v1748
    %1905 = vmatpush1.bf16.msra.mxu0 %v1747
    %1906 = vmatprep.subr.bf16.mxu0 %v1744
    %1907 = vmatpush1.bf16.msra.mxu0 %v1743
    %1908 = vmatprep.subr.bf16.mxu0 %v1740
    %1909 = vmatpush1.bf16.msra.mxu0 %v1739
    %1910 = vmatprep.subr.bf16.mxu0 %v1736
    %1911 = vmatpush1.bf16.msra.mxu0 %v1735
    %1912 = vmatprep.subr.bf16.mxu0 %v1732
    %1913 = vmatpush1.bf16.msra.mxu0 %v1731
    %1914 = vmatprep.subr.bf16.mxu0 %v1792
    %1915 = vmatpush2.bf16.msra.mxu0 %v1791
    %1916 = vmatprep.subr.bf16.mxu0 %v1788
    %1917 = vmatpush2.bf16.msra.mxu0 %v1787
    %1918 = vmatprep.subr.bf16.mxu0 %v1784
    %1919 = vmatpush2.bf16.msra.mxu0 %v1783
    %1920 = vmatprep.subr.bf16.mxu0 %v1780
    %1921 = vmatpush2.bf16.msra.mxu0 %v1779
    %1922 = vmatprep.subr.bf16.mxu0 %v1776
    %1923 = vmatpush2.bf16.msra.mxu0 %v1775
    %1924 = vmatprep.subr.bf16.mxu0 %v1772
    %1925 = vmatpush2.bf16.msra.mxu0 %v1771
    %1926 = vmatprep.subr.bf16.mxu0 %v1768
    %1927 = vmatpush2.bf16.msra.mxu0 %v1767
    %1928 = vmatprep.subr.bf16.mxu0 %v1764
    %1929 = vmatpush2.bf16.msra.mxu0 %v1763
    %1930 = vmatprep.mubr.bf16.mxu0 0
    %1931 = vmatmul.mubr.bf16.gmra.mxu0 %v1277
    %v1932 = vpop.f32.mrf.mxu0
    %v1933 = vadd.f32 %v1528, %v1932
    %v1934 = vpop.f32.mrf.mxu0
    %v1935 = vadd.f32 %v1532, %v1934
    %v1936 = vpop.f32.mrf.mxu0
    %v1937 = vpop.f32.mrf.mxu0
    %1938 = vdwg.mxu0
    %v1939 = vxor.u32 %v1892, 2147483648
    %v1940 = vxor.u32 %v1894, 2147483648
    %v1941 = vxor.u32 %v1935, 2147483648
    %v1942 = vmul.f32 %v1939, 1.442695
    %v1943 = vpow.pop %v1942
    %v1944 = vmul.f32 %v1940, 1.442695
    %v1945 = vpow.pop %v1944
    %v1946 = vmul.f32 %v1941, 1.442695
    %v1947 = vpow.pop %v1946
    %v1948 = vadd.f32 %v1943, 1.0
    %v1949 = vadd.f32 %v1945, 1.0
    %v1950 = vadd.f32 %v1947, 1.0
    %v1951 = vrcp.pop %v1948
    %v1952 = vmul.f32 1.0, %v1951
    %v1953 = vrcp.pop %v1949
    %v1954 = vmul.f32 1.0, %v1953
    %v1955 = vrcp.pop %v1950
    %v1956 = vmul.f32 1.0, %v1955
    %v1957 = vtanh.pop %v1933
    %v1958 = vmul.f32 %v1954, 0.0
    %v1959 = vmul.f32 %v1952, %v1957
    %v1960 = vadd.f32 %v1958, %v1959
    %v1961 = vtanh.pop %v1960
    %v1962 = vmul.f32 %v1956, %v1961
    %v1963 = vpack.c.bf16 %v1405, %v1405
    %v1964 = vpack.c.bf16 %v1515, %v1515
    %v1965 = vpack.c.bf16 %v1962, %v1962
    %v1967 = vrot.slane %v1963, 2
    %1969 = vmatprep.subr.bf16.mxu0 %v558
    %1970 = vmatpush1.bf16.msra.mxu0 %v557
    %1971 = vmatprep.subr.bf16.mxu0 %v554
    %1972 = vmatpush1.bf16.msra.mxu0 %v553
    %1973 = vmatprep.subr.bf16.mxu0 %v550
    %1974 = vmatpush1.bf16.msra.mxu0 %v549
    %1975 = vmatprep.subr.bf16.mxu0 %v546
    %1976 = vmatpush1.bf16.msra.mxu0 %v545
    %1977 = vmatprep.subr.bf16.mxu0 %v542
    %1978 = vmatpush1.bf16.msra.mxu0 %v541
    %1979 = vmatprep.subr.bf16.mxu0 %v538
    %1980 = vmatpush1.bf16.msra.mxu0 %v537
    %1981 = vmatprep.subr.bf16.mxu0 %v534
    %1982 = vmatpush1.bf16.msra.mxu0 %v533
    %1983 = vmatprep.subr.bf16.mxu0 %v530
    %1984 = vmatpush1.bf16.msra.mxu0 %v529
    %1985 = vmatprep.subr.bf16.mxu0 0
    %1986 = vmatpush2.bf16.msra.mxu0 0
    %1987 = vmatprep.subr.bf16.mxu0 0
    %1988 = vmatpush2.bf16.msra.mxu0 0
    %1989 = vmatprep.subr.bf16.mxu0 0
    %1990 = vmatpush2.bf16.msra.mxu0 0
    %1991 = vmatprep.subr.bf16.mxu0 0
    %1992 = vmatpush2.bf16.msra.mxu0 0
    %1993 = vmatprep.subr.bf16.mxu0 0
    %1994 = vmatpush2.bf16.msra.mxu0 0
    %1995 = vmatprep.subr.bf16.mxu0 0
    %1996 = vmatpush2.bf16.msra.mxu0 0
    %1997 = vmatprep.subr.bf16.mxu0 0
    %1998 = vmatpush2.bf16.msra.mxu0 0
    %1999 = vmatprep.subr.bf16.mxu0 0
    %2000 = vmatpush2.bf16.msra.mxu0 0
    %2001 = vmatprep.mubr.bf16.mxu0 0
    %2002 = vmatmul.mubr.bf16.gmra.mxu0 %v1967
    %v2003 = vpop.f32.mrf.mxu0
    %v2004 = vadd.f32 0.0, %v2003
    %v2005 = vpop.f32.mrf.mxu0
    %v2006 = vadd.f32 0.0, %v2005
    %v2007 = vpop.f32.mrf.mxu0
    %v2008 = vpop.f32.mrf.mxu0
    %2009 = vdwg.mxu0
    %2010 = vmatprep.subr.bf16.mxu0 %v560
    %2011 = vmatpush1.bf16.msra.mxu0 %v559
    %2012 = vmatprep.subr.bf16.mxu0 %v556
    %2013 = vmatpush1.bf16.msra.mxu0 %v555
    %2014 = vmatprep.subr.bf16.mxu0 %v552
    %2015 = vmatpush1.bf16.msra.mxu0 %v551
    %2016 = vmatprep.subr.bf16.mxu0 %v548
    %2017 = vmatpush1.bf16.msra.mxu0 %v547
    %2018 = vmatprep.subr.bf16.mxu0 %v544
    %2019 = vmatpush1.bf16.msra.mxu0 %v543
    %2020 = vmatprep.subr.bf16.mxu0 %v540
    %2021 = vmatpush1.bf16.msra.mxu0 %v539
    %2022 = vmatprep.subr.bf16.mxu0 %v536
    %2023 = vmatpush1.bf16.msra.mxu0 %v535
    %2024 = vmatprep.subr.bf16.mxu0 %v532
    %2025 = vmatpush1.bf16.msra.mxu0 %v531
    %2026 = vmatprep.subr.bf16.mxu0 0
    %2027 = vmatpush2.bf16.msra.mxu0 0
    %2028 = vmatprep.subr.bf16.mxu0 0
    %2029 = vmatpush2.bf16.msra.mxu0 0
    %2030 = vmatprep.subr.bf16.mxu0 0
    %2031 = vmatpush2.bf16.msra.mxu0 0
    %2032 = vmatprep.subr.bf16.mxu0 0
    %2033 = vmatpush2.bf16.msra.mxu0 0
    %2034 = vmatprep.subr.bf16.mxu0 0
    %2035 = vmatpush2.bf16.msra.mxu0 0
    %2036 = vmatprep.subr.bf16.mxu0 0
    %2037 = vmatpush2.bf16.msra.mxu0 0
    %2038 = vmatprep.subr.bf16.mxu0 0
    %2039 = vmatpush2.bf16.msra.mxu0 0
    %2040 = vmatprep.subr.bf16.mxu0 0
    %2041 = vmatpush2.bf16.msra.mxu0 0
    %2042 = vmatprep.mubr.bf16.mxu0 0
    %2043 = vmatmul.mubr.bf16.gmra.mxu0 %v1967
    %v2044 = vpop.f32.mrf.mxu0
    %v2045 = vadd.f32 0.0, %v2044
    %v2046 = vpop.f32.mrf.mxu0
    %v2047 = vadd.f32 0.0, %v2046
    %v2048 = vpop.f32.mrf.mxu0
    %v2049 = vpop.f32.mrf.mxu0
    %2050 = vdwg.mxu0
    %v2055 = vrot.slane %v2004, 2
    %v2056 = vrot.slane %v2006, 2
    %v2057 = vrot.slane %v2045, 2
    %v2058 = vrot.slane %v2047, 2
    %v2063 = vadd.f32 %v256, %v2055
    %v2064 = vadd.f32 %v257, %v2056
    %v2065 = vadd.f32 %v258, %v2057
    %v2066 = vadd.f32 %v259, %v2058
    %v2067 = vxor.u32 %v2063, 2147483648
    %v2068 = vxor.u32 %v2064, 2147483648
    %v2069 = vxor.u32 %v2066, 2147483648
    %v2070 = vmul.f32 %v2067, 1.442695
    %v2071 = vpow.pop %v2070
    %v2072 = vmul.f32 %v2068, 1.442695
    %v2073 = vpow.pop %v2072
    %v2074 = vmul.f32 %v2069, 1.442695
    %v2075 = vpow.pop %v2074
    %v2076 = vadd.f32 %v2071, 1.0
    %v2077 = vadd.f32 %v2073, 1.0
    %v2078 = vadd.f32 %v2075, 1.0
    %v2079 = vrcp.pop %v2076
    %v2080 = vmul.f32 1.0, %v2079
    %v2081 = vrcp.pop %v2077
    %v2082 = vmul.f32 1.0, %v2081
    %v2083 = vrcp.pop %v2078
    %v2084 = vmul.f32 1.0, %v2083
    %v2085 = vtanh.pop %v2065
    %v2087 = vrot.slane %v1403, 6
    %v2089 = vmul.f32 %v2082, %v2087
    %v2090 = vmul.f32 %v2080, %v2085
    %v2091 = vadd.f32 %v2089, %v2090
    %v2092 = vtanh.pop %v2091
    %v2093 = vmul.f32 %v2084, %v2092
    %v2095 = vrot.slane %v1964, 6
    %v2096 = vrot.slane %v2095, 2
    %2098 = vmatprep.subr.bf16.mxu0 %v1071
    %2099 = vmatpush1.bf16.msra.mxu0 %v1070
    %2100 = vmatprep.subr.bf16.mxu0 %v1067
    %2101 = vmatpush1.bf16.msra.mxu0 %v1066
    %2102 = vmatprep.subr.bf16.mxu0 %v1063
    %2103 = vmatpush1.bf16.msra.mxu0 %v1062
    %2104 = vmatprep.subr.bf16.mxu0 %v1059
    %2105 = vmatpush1.bf16.msra.mxu0 %v1058
    %2106 = vmatprep.subr.bf16.mxu0 %v1055
    %2107 = vmatpush1.bf16.msra.mxu0 %v1054
    %2108 = vmatprep.subr.bf16.mxu0 %v1051
    %2109 = vmatpush1.bf16.msra.mxu0 %v1050
    %2110 = vmatprep.subr.bf16.mxu0 %v1047
    %2111 = vmatpush1.bf16.msra.mxu0 %v1046
    %2112 = vmatprep.subr.bf16.mxu0 %v1043
    %2113 = vmatpush1.bf16.msra.mxu0 %v1042
    %2114 = vmatprep.subr.bf16.mxu0 %v1103
    %2115 = vmatpush2.bf16.msra.mxu0 %v1102
    %2116 = vmatprep.subr.bf16.mxu0 %v1099
    %2117 = vmatpush2.bf16.msra.mxu0 %v1098
    %2118 = vmatprep.subr.bf16.mxu0 %v1095
    %2119 = vmatpush2.bf16.msra.mxu0 %v1094
    %2120 = vmatprep.subr.bf16.mxu0 %v1091
    %2121 = vmatpush2.bf16.msra.mxu0 %v1090
    %2122 = vmatprep.subr.bf16.mxu0 %v1087
    %2123 = vmatpush2.bf16.msra.mxu0 %v1086
    %2124 = vmatprep.subr.bf16.mxu0 %v1083
    %2125 = vmatpush2.bf16.msra.mxu0 %v1082
    %2126 = vmatprep.subr.bf16.mxu0 %v1079
    %2127 = vmatpush2.bf16.msra.mxu0 %v1078
    %2128 = vmatprep.subr.bf16.mxu0 %v1075
    %2129 = vmatpush2.bf16.msra.mxu0 %v1074
    %2130 = vmatprep.mubr.bf16.mxu0 %v2096
    %2131 = vmatmul.mubr.bf16.gmra.mxu0 %v1967
    %v2132 = vpop.f32.mrf.mxu0
    %v2133 = vadd.f32 %v833, %v2132
    %v2134 = vpop.f32.mrf.mxu0
    %v2135 = vadd.f32 %v837, %v2134
    %v2136 = vpop.f32.mrf.mxu0
    %v2137 = vpop.f32.mrf.mxu0
    %2138 = vdwg.mxu0
    %2139 = vmatprep.subr.bf16.mxu0 %v1073
    %2140 = vmatpush1.bf16.msra.mxu0 %v1072
    %2141 = vmatprep.subr.bf16.mxu0 %v1069
    %2142 = vmatpush1.bf16.msra.mxu0 %v1068
    %2143 = vmatprep.subr.bf16.mxu0 %v1065
    %2144 = vmatpush1.bf16.msra.mxu0 %v1064
    %2145 = vmatprep.subr.bf16.mxu0 %v1061
    %2146 = vmatpush1.bf16.msra.mxu0 %v1060
    %2147 = vmatprep.subr.bf16.mxu0 %v1057
    %2148 = vmatpush1.bf16.msra.mxu0 %v1056
    %2149 = vmatprep.subr.bf16.mxu0 %v1053
    %2150 = vmatpush1.bf16.msra.mxu0 %v1052
    %2151 = vmatprep.subr.bf16.mxu0 %v1049
    %2152 = vmatpush1.bf16.msra.mxu0 %v1048
    %2153 = vmatprep.subr.bf16.mxu0 %v1045
    %2154 = vmatpush1.bf16.msra.mxu0 %v1044
    %2155 = vmatprep.subr.bf16.mxu0 %v1105
    %2156 = vmatpush2.bf16.msra.mxu0 %v1104
    %2157 = vmatprep.subr.bf16.mxu0 %v1101
    %2158 = vmatpush2.bf16.msra.mxu0 %v1100
    %2159 = vmatprep.subr.bf16.mxu0 %v1097
    %2160 = vmatpush2.bf16.msra.mxu0 %v1096
    %2161 = vmatprep.subr.bf16.mxu0 %v1093
    %2162 = vmatpush2.bf16.msra.mxu0 %v1092
    %2163 = vmatprep.subr.bf16.mxu0 %v1089
    %2164 = vmatpush2.bf16.msra.mxu0 %v1088
    %2165 = vmatprep.subr.bf16.mxu0 %v1085
    %2166 = vmatpush2.bf16.msra.mxu0 %v1084
    %2167 = vmatprep.subr.bf16.mxu0 %v1081
    %2168 = vmatpush2.bf16.msra.mxu0 %v1080
    %2169 = vmatprep.subr.bf16.mxu0 %v1077
    %2170 = vmatpush2.bf16.msra.mxu0 %v1076
    %2171 = vmatprep.mubr.bf16.mxu0 %v2096
    %2172 = vmatmul.mubr.bf16.gmra.mxu0 %v1967
    %v2173 = vpop.f32.mrf.mxu0
    %v2174 = vadd.f32 %v841, %v2173
    %v2175 = vpop.f32.mrf.mxu0
    %v2176 = vadd.f32 %v845, %v2175
    %v2177 = vpop.f32.mrf.mxu0
    %v2178 = vpop.f32.mrf.mxu0
    %2179 = vdwg.mxu0
    %v2180 = vxor.u32 %v2133, 2147483648
    %v2181 = vxor.u32 %v2135, 2147483648
    %v2182 = vxor.u32 %v2176, 2147483648
    %v2183 = vmul.f32 %v2180, 1.442695
    %v2184 = vpow.pop %v2183
    %v2185 = vmul.f32 %v2181, 1.442695
    %v2186 = vpow.pop %v2185
    %v2187 = vmul.f32 %v2182, 1.442695
    %v2188 = vpow.pop %v2187
    %v2189 = vadd.f32 %v2184, 1.0
    %v2190 = vadd.f32 %v2186, 1.0
    %v2191 = vadd.f32 %v2188, 1.0
    %v2192 = vrcp.pop %v2189
    %v2193 = vmul.f32 1.0, %v2192
    %v2194 = vrcp.pop %v2190
    %v2195 = vmul.f32 1.0, %v2194
    %v2196 = vrcp.pop %v2191
    %v2197 = vmul.f32 1.0, %v2196
    %v2198 = vtanh.pop %v2174
    %v2199 = vmul.f32 %v2195, %v1513
    %v2200 = vmul.f32 %v2193, %v2198
    %v2201 = vadd.f32 %v2199, %v2200
    %v2202 = vtanh.pop %v2201
    %v2203 = vmul.f32 %v2197, %v2202
    %2204 = vmatprep.subr.bf16.mxu0 %v1758
    %2205 = vmatpush1.bf16.msra.mxu0 %v1757
    %2206 = vmatprep.subr.bf16.mxu0 %v1754
    %2207 = vmatpush1.bf16.msra.mxu0 %v1753
    %2208 = vmatprep.subr.bf16.mxu0 %v1750
    %2209 = vmatpush1.bf16.msra.mxu0 %v1749
    %2210 = vmatprep.subr.bf16.mxu0 %v1746
    %2211 = vmatpush1.bf16.msra.mxu0 %v1745
    %2212 = vmatprep.subr.bf16.mxu0 %v1742
    %2213 = vmatpush1.bf16.msra.mxu0 %v1741
    %2214 = vmatprep.subr.bf16.mxu0 %v1738
    %2215 = vmatpush1.bf16.msra.mxu0 %v1737
    %2216 = vmatprep.subr.bf16.mxu0 %v1734
    %2217 = vmatpush1.bf16.msra.mxu0 %v1733
    %2218 = vmatprep.subr.bf16.mxu0 %v1730
    %2219 = vmatpush1.bf16.msra.mxu0 %v1729
    %2220 = vmatprep.subr.bf16.mxu0 %v1790
    %2221 = vmatpush2.bf16.msra.mxu0 %v1789
    %2222 = vmatprep.subr.bf16.mxu0 %v1786
    %2223 = vmatpush2.bf16.msra.mxu0 %v1785
    %2224 = vmatprep.subr.bf16.mxu0 %v1782
    %2225 = vmatpush2.bf16.msra.mxu0 %v1781
    %2226 = vmatprep.subr.bf16.mxu0 %v1778
    %2227 = vmatpush2.bf16.msra.mxu0 %v1777
    %2228 = vmatprep.subr.bf16.mxu0 %v1774
    %2229 = vmatpush2.bf16.msra.mxu0 %v1773
    %2230 = vmatprep.subr.bf16.mxu0 %v1770
    %2231 = vmatpush2.bf16.msra.mxu0 %v1769
    %2232 = vmatprep.subr.bf16.mxu0 %v1766
    %2233 = vmatpush2.bf16.msra.mxu0 %v1765
    %2234 = vmatprep.subr.bf16.mxu0 %v1762
    %2235 = vmatpush2.bf16.msra.mxu0 %v1761
    %2236 = vmatprep.mubr.bf16.mxu0 %v1965
    %2237 = vmatmul.mubr.bf16.gmra.mxu0 %v1964
    %v2238 = vpop.f32.mrf.mxu0
    %v2239 = vadd.f32 %v1520, %v2238
    %v2240 = vpop.f32.mrf.mxu0
    %v2241 = vadd.f32 %v1524, %v2240
    %v2242 = vpop.f32.mrf.mxu0
    %v2243 = vpop.f32.mrf.mxu0
    %2244 = vdwg.mxu0
    %2245 = vmatprep.subr.bf16.mxu0 %v1760
    %2246 = vmatpush1.bf16.msra.mxu0 %v1759
    %2247 = vmatprep.subr.bf16.mxu0 %v1756
    %2248 = vmatpush1.bf16.msra.mxu0 %v1755
    %2249 = vmatprep.subr.bf16.mxu0 %v1752
    %2250 = vmatpush1.bf16.msra.mxu0 %v1751
    %2251 = vmatprep.subr.bf16.mxu0 %v1748
    %2252 = vmatpush1.bf16.msra.mxu0 %v1747
    %2253 = vmatprep.subr.bf16.mxu0 %v1744
    %2254 = vmatpush1.bf16.msra.mxu0 %v1743
    %2255 = vmatprep.subr.bf16.mxu0 %v1740
    %2256 = vmatpush1.bf16.msra.mxu0 %v1739
    %2257 = vmatprep.subr.bf16.mxu0 %v1736
    %2258 = vmatpush1.bf16.msra.mxu0 %v1735
    %2259 = vmatprep.subr.bf16.mxu0 %v1732
    %2260 = vmatpush1.bf16.msra.mxu0 %v1731
    %2261 = vmatprep.subr.bf16.mxu0 %v1792
    %2262 = vmatpush2.bf16.msra.mxu0 %v1791
    %2263 = vmatprep.subr.bf16.mxu0 %v1788
    %2264 = vmatpush2.bf16.msra.mxu0 %v1787
    %2265 = vmatprep.subr.bf16.mxu0 %v1784
    %2266 = vmatpush2.bf16.msra.mxu0 %v1783
    %2267 = vmatprep.subr.bf16.mxu0 %v1780
    %2268 = vmatpush2.bf16.msra.mxu0 %v1779
    %2269 = vmatprep.subr.bf16.mxu0 %v1776
    %2270 = vmatpush2.bf16.msra.mxu0 %v1775
    %2271 = vmatprep.subr.bf16.mxu0 %v1772
    %2272 = vmatpush2.bf16.msra.mxu0 %v1771
    %2273 = vmatprep.subr.bf16.mxu0 %v1768
    %2274 = vmatpush2.bf16.msra.mxu0 %v1767
    %2275 = vmatprep.subr.bf16.mxu0 %v1764
    %2276 = vmatpush2.bf16.msra.mxu0 %v1763
    %2277 = vmatprep.mubr.bf16.mxu0 %v1965
    %2278 = vmatmul.mubr.bf16.gmra.mxu0 %v1964
    %v2279 = vpop.f32.mrf.mxu0
    %v2280 = vadd.f32 %v1528, %v2279
    %v2281 = vpop.f32.mrf.mxu0
    %v2282 = vadd.f32 %v1532, %v2281
    %v2283 = vpop.f32.mrf.mxu0
    %v2284 = vpop.f32.mrf.mxu0
    %2285 = vdwg.mxu0
    %v2286 = vxor.u32 %v2239, 2147483648
    %v2287 = vxor.u32 %v2241, 2147483648
    %v2288 = vxor.u32 %v2282, 2147483648
    %v2289 = vmul.f32 %v2286, 1.442695
    %v2290 = vpow.pop %v2289
    %v2291 = vmul.f32 %v2287, 1.442695
    %v2292 = vpow.pop %v2291
    %v2293 = vmul.f32 %v2288, 1.442695
    %v2294 = vpow.pop %v2293
    %v2295 = vadd.f32 %v2290, 1.0
    %v2296 = vadd.f32 %v2292, 1.0
    %v2297 = vadd.f32 %v2294, 1.0
    %v2298 = vrcp.pop %v2295
    %v2299 = vmul.f32 1.0, %v2298
    %v2300 = vrcp.pop %v2296
    %v2301 = vmul.f32 1.0, %v2300
    %v2302 = vrcp.pop %v2297
    %v2303 = vmul.f32 1.0, %v2302
    %v2304 = vtanh.pop %v2280
    %v2305 = vmul.f32 %v2301, %v1960
    %v2306 = vmul.f32 %v2299, %v2304
    %v2307 = vadd.f32 %v2305, %v2306
    %v2308 = vtanh.pop %v2307
    %v2309 = vmul.f32 %v2303, %v2308
    %v2310 = vpack.c.bf16 %v2093, %v2093
    %v2311 = vpack.c.bf16 %v2203, %v2203
    %v2312 = vpack.c.bf16 %v2309, %v2309
    %v2314 = vrot.slane %v2310, 3
    %2316 = vmatprep.subr.bf16.mxu0 %v558
    %2317 = vmatpush1.bf16.msra.mxu0 %v557
    %2318 = vmatprep.subr.bf16.mxu0 %v554
    %2319 = vmatpush1.bf16.msra.mxu0 %v553
    %2320 = vmatprep.subr.bf16.mxu0 %v550
    %2321 = vmatpush1.bf16.msra.mxu0 %v549
    %2322 = vmatprep.subr.bf16.mxu0 %v546
    %2323 = vmatpush1.bf16.msra.mxu0 %v545
    %2324 = vmatprep.subr.bf16.mxu0 %v542
    %2325 = vmatpush1.bf16.msra.mxu0 %v541
    %2326 = vmatprep.subr.bf16.mxu0 %v538
    %2327 = vmatpush1.bf16.msra.mxu0 %v537
    %2328 = vmatprep.subr.bf16.mxu0 %v534
    %2329 = vmatpush1.bf16.msra.mxu0 %v533
    %2330 = vmatprep.subr.bf16.mxu0 %v530
    %2331 = vmatpush1.bf16.msra.mxu0 %v529
    %2332 = vmatprep.subr.bf16.mxu0 0
    %2333 = vmatpush2.bf16.msra.mxu0 0
    %2334 = vmatprep.subr.bf16.mxu0 0
    %2335 = vmatpush2.bf16.msra.mxu0 0
    %2336 = vmatprep.subr.bf16.mxu0 0
    %2337 = vmatpush2.bf16.msra.mxu0 0
    %2338 = vmatprep.subr.bf16.mxu0 0
    %2339 = vmatpush2.bf16.msra.mxu0 0
    %2340 = vmatprep.subr.bf16.mxu0 0
    %2341 = vmatpush2.bf16.msra.mxu0 0
    %2342 = vmatprep.subr.bf16.mxu0 0
    %2343 = vmatpush2.bf16.msra.mxu0 0
    %2344 = vmatprep.subr.bf16.mxu0 0
    %2345 = vmatpush2.bf16.msra.mxu0 0
    %2346 = vmatprep.subr.bf16.mxu0 0
    %2347 = vmatpush2.bf16.msra.mxu0 0
    %2348 = vmatprep.mubr.bf16.mxu0 0
    %2349 = vmatmul.mubr.bf16.gmra.mxu0 %v2314
    %v2350 = vpop.f32.mrf.mxu0
    %v2351 = vadd.f32 0.0, %v2350
    %v2352 = vpop.f32.mrf.mxu0
    %v2353 = vadd.f32 0.0, %v2352
    %v2354 = vpop.f32.mrf.mxu0
    %v2355 = vpop.f32.mrf.mxu0
    %2356 = vdwg.mxu0
    %2357 = vmatprep.subr.bf16.mxu0 %v560
    %2358 = vmatpush1.bf16.msra.mxu0 %v559
    %2359 = vmatprep.subr.bf16.mxu0 %v556
    %2360 = vmatpush1.bf16.msra.mxu0 %v555
    %2361 = vmatprep.subr.bf16.mxu0 %v552
    %2362 = vmatpush1.bf16.msra.mxu0 %v551
    %2363 = vmatprep.subr.bf16.mxu0 %v548
    %2364 = vmatpush1.bf16.msra.mxu0 %v547
    %2365 = vmatprep.subr.bf16.mxu0 %v544
    %2366 = vmatpush1.bf16.msra.mxu0 %v543
    %2367 = vmatprep.subr.bf16.mxu0 %v540
    %2368 = vmatpush1.bf16.msra.mxu0 %v539
    %2369 = vmatprep.subr.bf16.mxu0 %v536
    %2370 = vmatpush1.bf16.msra.mxu0 %v535
    %2371 = vmatprep.subr.bf16.mxu0 %v532
    %2372 = vmatpush1.bf16.msra.mxu0 %v531
    %2373 = vmatprep.subr.bf16.mxu0 0
    %2374 = vmatpush2.bf16.msra.mxu0 0
    %2375 = vmatprep.subr.bf16.mxu0 0
    %2376 = vmatpush2.bf16.msra.mxu0 0
    %2377 = vmatprep.subr.bf16.mxu0 0
    %2378 = vmatpush2.bf16.msra.mxu0 0
    %2379 = vmatprep.subr.bf16.mxu0 0
    %2380 = vmatpush2.bf16.msra.mxu0 0
    %2381 = vmatprep.subr.bf16.mxu0 0
    %2382 = vmatpush2.bf16.msra.mxu0 0
    %2383 = vmatprep.subr.bf16.mxu0 0
    %2384 = vmatpush2.bf16.msra.mxu0 0
    %2385 = vmatprep.subr.bf16.mxu0 0
    %2386 = vmatpush2.bf16.msra.mxu0 0
    %2387 = vmatprep.subr.bf16.mxu0 0
    %2388 = vmatpush2.bf16.msra.mxu0 0
    %2389 = vmatprep.mubr.bf16.mxu0 0
    %2390 = vmatmul.mubr.bf16.gmra.mxu0 %v2314
    %v2391 = vpop.f32.mrf.mxu0
    %v2392 = vadd.f32 0.0, %v2391
    %v2393 = vpop.f32.mrf.mxu0
    %v2394 = vadd.f32 0.0, %v2393
    %v2395 = vpop.f32.mrf.mxu0
    %v2396 = vpop.f32.mrf.mxu0
    %2397 = vdwg.mxu0
    %v2398 = vadd.f32 %v260, %v2351
    %v2399 = vadd.f32 %v261, %v2353
    %v2400 = vadd.f32 %v262, %v2392
    %v2401 = vadd.f32 %v263, %v2394
    %v2402 = vxor.u32 %v2398, 2147483648
    %v2403 = vxor.u32 %v2399, 2147483648
    %v2404 = vxor.u32 %v2401, 2147483648
    %v2405 = vmul.f32 %v2402, 1.442695
    %v2406 = vpow.pop %v2405
    %v2407 = vmul.f32 %v2403, 1.442695
    %v2408 = vpow.pop %v2407
    %v2409 = vmul.f32 %v2404, 1.442695
    %v2410 = vpow.pop %v2409
    %v2411 = vadd.f32 %v2406, 1.0
    %v2412 = vadd.f32 %v2408, 1.0
    %v2413 = vadd.f32 %v2410, 1.0
    %v2414 = vrcp.pop %v2411
    %v2415 = vmul.f32 1.0, %v2414
    %v2416 = vrcp.pop %v2412
    %v2417 = vmul.f32 1.0, %v2416
    %v2418 = vrcp.pop %v2413
    %v2419 = vmul.f32 1.0, %v2418
    %v2420 = vtanh.pop %v2400
    %v2422 = vrot.slane %v2091, 6
    %v2424 = vmul.f32 %v2417, %v2422
    %v2425 = vmul.f32 %v2415, %v2420
    %v2426 = vadd.f32 %v2424, %v2425
    %v2427 = vtanh.pop %v2426
    %v2428 = vmul.f32 %v2419, %v2427
    %v2430 = vrot.slane %v2311, 5
    %v2431 = vrot.slane %v2430, 3
    %2433 = vmatprep.subr.bf16.mxu0 %v1071
    %2434 = vmatpush1.bf16.msra.mxu0 %v1070
    %2435 = vmatprep.subr.bf16.mxu0 %v1067
    %2436 = vmatpush1.bf16.msra.mxu0 %v1066
    %2437 = vmatprep.subr.bf16.mxu0 %v1063
    %2438 = vmatpush1.bf16.msra.mxu0 %v1062
    %2439 = vmatprep.subr.bf16.mxu0 %v1059
    %2440 = vmatpush1.bf16.msra.mxu0 %v1058
    %2441 = vmatprep.subr.bf16.mxu0 %v1055
    %2442 = vmatpush1.bf16.msra.mxu0 %v1054
    %2443 = vmatprep.subr.bf16.mxu0 %v1051
    %2444 = vmatpush1.bf16.msra.mxu0 %v1050
    %2445 = vmatprep.subr.bf16.mxu0 %v1047
    %2446 = vmatpush1.bf16.msra.mxu0 %v1046
    %2447 = vmatprep.subr.bf16.mxu0 %v1043
    %2448 = vmatpush1.bf16.msra.mxu0 %v1042
    %2449 = vmatprep.subr.bf16.mxu0 %v1103
    %2450 = vmatpush2.bf16.msra.mxu0 %v1102
    %2451 = vmatprep.subr.bf16.mxu0 %v1099
    %2452 = vmatpush2.bf16.msra.mxu0 %v1098
    %2453 = vmatprep.subr.bf16.mxu0 %v1095
    %2454 = vmatpush2.bf16.msra.mxu0 %v1094
    %2455 = vmatprep.subr.bf16.mxu0 %v1091
    %2456 = vmatpush2.bf16.msra.mxu0 %v1090
    %2457 = vmatprep.subr.bf16.mxu0 %v1087
    %2458 = vmatpush2.bf16.msra.mxu0 %v1086
    %2459 = vmatprep.subr.bf16.mxu0 %v1083
    %2460 = vmatpush2.bf16.msra.mxu0 %v1082
    %2461 = vmatprep.subr.bf16.mxu0 %v1079
    %2462 = vmatpush2.bf16.msra.mxu0 %v1078
    %2463 = vmatprep.subr.bf16.mxu0 %v1075
    %2464 = vmatpush2.bf16.msra.mxu0 %v1074
    %2465 = vmatprep.mubr.bf16.mxu0 %v2431
    %2466 = vmatmul.mubr.bf16.gmra.mxu0 %v2314
    %v2467 = vpop.f32.mrf.mxu0
    %v2468 = vadd.f32 %v833, %v2467
    %v2469 = vpop.f32.mrf.mxu0
    %v2470 = vadd.f32 %v837, %v2469
    %v2471 = vpop.f32.mrf.mxu0
    %v2472 = vpop.f32.mrf.mxu0
    %2473 = vdwg.mxu0
    %2474 = vmatprep.subr.bf16.mxu0 %v1073
    %2475 = vmatpush1.bf16.msra.mxu0 %v1072
    %2476 = vmatprep.subr.bf16.mxu0 %v1069
    %2477 = vmatpush1.bf16.msra.mxu0 %v1068
    %2478 = vmatprep.subr.bf16.mxu0 %v1065
    %2479 = vmatpush1.bf16.msra.mxu0 %v1064
    %2480 = vmatprep.subr.bf16.mxu0 %v1061
    %2481 = vmatpush1.bf16.msra.mxu0 %v1060
    %2482 = vmatprep.subr.bf16.mxu0 %v1057
    %2483 = vmatpush1.bf16.msra.mxu0 %v1056
    %2484 = vmatprep.subr.bf16.mxu0 %v1053
    %2485 = vmatpush1.bf16.msra.mxu0 %v1052
    %2486 = vmatprep.subr.bf16.mxu0 %v1049
    %2487 = vmatpush1.bf16.msra.mxu0 %v1048
    %2488 = vmatprep.subr.bf16.mxu0 %v1045
    %2489 = vmatpush1.bf16.msra.mxu0 %v1044
    %2490 = vmatprep.subr.bf16.mxu0 %v1105
    %2491 = vmatpush2.bf16.msra.mxu0 %v1104
    %2492 = vmatprep.subr.bf16.mxu0 %v1101
    %2493 = vmatpush2.bf16.msra.mxu0 %v1100
    %2494 = vmatprep.subr.bf16.mxu0 %v1097
    %2495 = vmatpush2.bf16.msra.mxu0 %v1096
    %2496 = vmatprep.subr.bf16.mxu0 %v1093
    %2497 = vmatpush2.bf16.msra.mxu0 %v1092
    %2498 = vmatprep.subr.bf16.mxu0 %v1089
    %2499 = vmatpush2.bf16.msra.mxu0 %v1088
    %2500 = vmatprep.subr.bf16.mxu0 %v1085
    %2501 = vmatpush2.bf16.msra.mxu0 %v1084
    %2502 = vmatprep.subr.bf16.mxu0 %v1081
    %2503 = vmatpush2.bf16.msra.mxu0 %v1080
    %2504 = vmatprep.subr.bf16.mxu0 %v1077
    %2505 = vmatpush2.bf16.msra.mxu0 %v1076
    %2506 = vmatprep.mubr.bf16.mxu0 %v2431
    %2507 = vmatmul.mubr.bf16.gmra.mxu0 %v2314
    %v2508 = vpop.f32.mrf.mxu0
    %v2509 = vadd.f32 %v841, %v2508
    %v2510 = vpop.f32.mrf.mxu0
    %v2511 = vadd.f32 %v845, %v2510
    %v2512 = vpop.f32.mrf.mxu0
    %v2513 = vpop.f32.mrf.mxu0
    %2514 = vdwg.mxu0
    %v2515 = vxor.u32 %v2468, 2147483648
    %v2516 = vxor.u32 %v2470, 2147483648
    %v2517 = vxor.u32 %v2511, 2147483648
    %v2518 = vmul.f32 %v2515, 1.442695
    %v2519 = vpow.pop %v2518
    %v2520 = vmul.f32 %v2516, 1.442695
    %v2521 = vpow.pop %v2520
    %v2522 = vmul.f32 %v2517, 1.442695
    %v2523 = vpow.pop %v2522
    %v2524 = vadd.f32 %v2519, 1.0
    %v2525 = vadd.f32 %v2521, 1.0
    %v2526 = vadd.f32 %v2523, 1.0
    %v2527 = vrcp.pop %v2524
    %v2528 = vmul.f32 1.0, %v2527
    %v2529 = vrcp.pop %v2525
    %v2530 = vmul.f32 1.0, %v2529
    %v2531 = vrcp.pop %v2526
    %v2532 = vmul.f32 1.0, %v2531
    %v2533 = vtanh.pop %v2509
    %v2534 = vmul.f32 %v2530, %v2201
    %v2535 = vmul.f32 %v2528, %v2533
    %v2536 = vadd.f32 %v2534, %v2535
    %v2537 = vtanh.pop %v2536
    %v2538 = vmul.f32 %v2532, %v2537
    %2539 = vmatprep.subr.bf16.mxu0 %v1758
    %2540 = vmatpush1.bf16.msra.mxu0 %v1757
    %2541 = vmatprep.subr.bf16.mxu0 %v1754
    %2542 = vmatpush1.bf16.msra.mxu0 %v1753
    %2543 = vmatprep.subr.bf16.mxu0 %v1750
    %2544 = vmatpush1.bf16.msra.mxu0 %v1749
    %2545 = vmatprep.subr.bf16.mxu0 %v1746
    %2546 = vmatpush1.bf16.msra.mxu0 %v1745
    %2547 = vmatprep.subr.bf16.mxu0 %v1742
    %2548 = vmatpush1.bf16.msra.mxu0 %v1741
    %2549 = vmatprep.subr.bf16.mxu0 %v1738
    %2550 = vmatpush1.bf16.msra.mxu0 %v1737
    %2551 = vmatprep.subr.bf16.mxu0 %v1734
    %2552 = vmatpush1.bf16.msra.mxu0 %v1733
    %2553 = vmatprep.subr.bf16.mxu0 %v1730
    %2554 = vmatpush1.bf16.msra.mxu0 %v1729
    %2555 = vmatprep.subr.bf16.mxu0 %v1790
    %2556 = vmatpush2.bf16.msra.mxu0 %v1789
    %2557 = vmatprep.subr.bf16.mxu0 %v1786
    %2558 = vmatpush2.bf16.msra.mxu0 %v1785
    %2559 = vmatprep.subr.bf16.mxu0 %v1782
    %2560 = vmatpush2.bf16.msra.mxu0 %v1781
    %2561 = vmatprep.subr.bf16.mxu0 %v1778
    %2562 = vmatpush2.bf16.msra.mxu0 %v1777
    %2563 = vmatprep.subr.bf16.mxu0 %v1774
    %2564 = vmatpush2.bf16.msra.mxu0 %v1773
    %2565 = vmatprep.subr.bf16.mxu0 %v1770
    %2566 = vmatpush2.bf16.msra.mxu0 %v1769
    %2567 = vmatprep.subr.bf16.mxu0 %v1766
    %2568 = vmatpush2.bf16.msra.mxu0 %v1765
    %2569 = vmatprep.subr.bf16.mxu0 %v1762
    %2570 = vmatpush2.bf16.msra.mxu0 %v1761
    %2571 = vmatprep.mubr.bf16.mxu0 %v2312
    %2572 = vmatmul.mubr.bf16.gmra.mxu0 %v2311
    %v2573 = vpop.f32.mrf.mxu0
    %v2574 = vadd.f32 %v1520, %v2573
    %v2575 = vpop.f32.mrf.mxu0
    %v2576 = vadd.f32 %v1524, %v2575
    %v2577 = vpop.f32.mrf.mxu0
    %v2578 = vpop.f32.mrf.mxu0
    %2579 = vdwg.mxu0
    %2580 = vmatprep.subr.bf16.mxu0 %v1760
    %2581 = vmatpush1.bf16.msra.mxu0 %v1759
    %2582 = vmatprep.subr.bf16.mxu0 %v1756
    %2583 = vmatpush1.bf16.msra.mxu0 %v1755
    %2584 = vmatprep.subr.bf16.mxu0 %v1752
    %2585 = vmatpush1.bf16.msra.mxu0 %v1751
    %2586 = vmatprep.subr.bf16.mxu0 %v1748
    %2587 = vmatpush1.bf16.msra.mxu0 %v1747
    %2588 = vmatprep.subr.bf16.mxu0 %v1744
    %2589 = vmatpush1.bf16.msra.mxu0 %v1743
    %2590 = vmatprep.subr.bf16.mxu0 %v1740
    %2591 = vmatpush1.bf16.msra.mxu0 %v1739
    %2592 = vmatprep.subr.bf16.mxu0 %v1736
    %2593 = vmatpush1.bf16.msra.mxu0 %v1735
    %2594 = vmatprep.subr.bf16.mxu0 %v1732
    %2595 = vmatpush1.bf16.msra.mxu0 %v1731
    %2596 = vmatprep.subr.bf16.mxu0 %v1792
    %2597 = vmatpush2.bf16.msra.mxu0 %v1791
    %2598 = vmatprep.subr.bf16.mxu0 %v1788
    %2599 = vmatpush2.bf16.msra.mxu0 %v1787
    %2600 = vmatprep.subr.bf16.mxu0 %v1784
    %2601 = vmatpush2.bf16.msra.mxu0 %v1783
    %2602 = vmatprep.subr.bf16.mxu0 %v1780
    %2603 = vmatpush2.bf16.msra.mxu0 %v1779
    %2604 = vmatprep.subr.bf16.mxu0 %v1776
    %2605 = vmatpush2.bf16.msra.mxu0 %v1775
    %2606 = vmatprep.subr.bf16.mxu0 %v1772
    %2607 = vmatpush2.bf16.msra.mxu0 %v1771
    %2608 = vmatprep.subr.bf16.mxu0 %v1768
    %2609 = vmatpush2.bf16.msra.mxu0 %v1767
    %2610 = vmatprep.subr.bf16.mxu0 %v1764
    %2611 = vmatpush2.bf16.msra.mxu0 %v1763
    %2612 = vmatprep.mubr.bf16.mxu0 %v2312
    %2613 = vmatmul.mubr.bf16.gmra.mxu0 %v2311
    %v2614 = vpop.f32.mrf.mxu0
    %v2615 = vadd.f32 %v1528, %v2614
    %v2616 = vpop.f32.mrf.mxu0
    %v2617 = vadd.f32 %v1532, %v2616
    %v2618 = vpop.f32.mrf.mxu0
    %v2619 = vpop.f32.mrf.mxu0
    %2620 = vdwg.mxu0
    %v2621 = vxor.u32 %v2574, 2147483648
    %v2622 = vxor.u32 %v2576, 2147483648
    %v2623 = vxor.u32 %v2617, 2147483648
    %v2624 = vmul.f32 %v2621, 1.442695
    %v2625 = vpow.pop %v2624
    %v2626 = vmul.f32 %v2622, 1.442695
    %v2627 = vpow.pop %v2626
    %v2628 = vmul.f32 %v2623, 1.442695
    %v2629 = vpow.pop %v2628
    %v2630 = vadd.f32 %v2625, 1.0
    %v2631 = vadd.f32 %v2627, 1.0
    %v2632 = vadd.f32 %v2629, 1.0
    %v2633 = vrcp.pop %v2630
    %v2634 = vmul.f32 1.0, %v2633
    %v2635 = vrcp.pop %v2631
    %v2636 = vmul.f32 1.0, %v2635
    %v2637 = vrcp.pop %v2632
    %v2638 = vmul.f32 1.0, %v2637
    %v2639 = vtanh.pop %v2615
    %v2640 = vmul.f32 %v2636, %v2307
    %v2641 = vmul.f32 %v2634, %v2639
    %v2642 = vadd.f32 %v2640, %v2641
    %v2643 = vtanh.pop %v2642
    %v2644 = vmul.f32 %v2638, %v2643
    %v2645 = vpack.c.bf16 %v2428, %v2428
    %v2646 = vpack.c.bf16 %v2538, %v2538
    %v2647 = vpack.c.bf16 %v2644, %v2644
    %2648 = vmatprep.subr.bf16.mxu0 %v558
    %2649 = vmatpush1.bf16.msra.mxu0 %v557
    %2650 = vmatprep.subr.bf16.mxu0 %v554
    %2651 = vmatpush1.bf16.msra.mxu0 %v553
    %2652 = vmatprep.subr.bf16.mxu0 %v550
    %2653 = vmatpush1.bf16.msra.mxu0 %v549
    %2654 = vmatprep.subr.bf16.mxu0 %v546
    %2655 = vmatpush1.bf16.msra.mxu0 %v545
    %2656 = vmatprep.subr.bf16.mxu0 %v542
    %2657 = vmatpush1.bf16.msra.mxu0 %v541
    %2658 = vmatprep.subr.bf16.mxu0 %v538
    %2659 = vmatpush1.bf16.msra.mxu0 %v537
    %2660 = vmatprep.subr.bf16.mxu0 %v534
    %2661 = vmatpush1.bf16.msra.mxu0 %v533
    %2662 = vmatprep.subr.bf16.mxu0 %v530
    %2663 = vmatpush1.bf16.msra.mxu0 %v529
    %2664 = vmatprep.subr.bf16.mxu0 0
    %2665 = vmatpush2.bf16.msra.mxu0 0
    %2666 = vmatprep.subr.bf16.mxu0 0
    %2667 = vmatpush2.bf16.msra.mxu0 0
    %2668 = vmatprep.subr.bf16.mxu0 0
    %2669 = vmatpush2.bf16.msra.mxu0 0
    %2670 = vmatprep.subr.bf16.mxu0 0
    %2671 = vmatpush2.bf16.msra.mxu0 0
    %2672 = vmatprep.subr.bf16.mxu0 0
    %2673 = vmatpush2.bf16.msra.mxu0 0
    %2674 = vmatprep.subr.bf16.mxu0 0
    %2675 = vmatpush2.bf16.msra.mxu0 0
    %2676 = vmatprep.subr.bf16.mxu0 0
    %2677 = vmatpush2.bf16.msra.mxu0 0
    %2678 = vmatprep.subr.bf16.mxu0 0
    %2679 = vmatpush2.bf16.msra.mxu0 0
    %2680 = vmatprep.mubr.bf16.mxu0 0
    %2681 = vmatmul.mubr.bf16.gmra.mxu0 %v2645
    %v2682 = vpop.f32.mrf.mxu0
    %v2683 = vadd.f32 0.0, %v2682
    %v2684 = vpop.f32.mrf.mxu0
    %v2685 = vadd.f32 0.0, %v2684
    %v2686 = vpop.f32.mrf.mxu0
    %v2687 = vpop.f32.mrf.mxu0
    %2688 = vdwg.mxu0
    %2689 = vmatprep.subr.bf16.mxu0 %v560
    %2690 = vmatpush1.bf16.msra.mxu0 %v559
    %2691 = vmatprep.subr.bf16.mxu0 %v556
    %2692 = vmatpush1.bf16.msra.mxu0 %v555
    %2693 = vmatprep.subr.bf16.mxu0 %v552
    %2694 = vmatpush1.bf16.msra.mxu0 %v551
    %2695 = vmatprep.subr.bf16.mxu0 %v548
    %2696 = vmatpush1.bf16.msra.mxu0 %v547
    %2697 = vmatprep.subr.bf16.mxu0 %v544
    %2698 = vmatpush1.bf16.msra.mxu0 %v543
    %2699 = vmatprep.subr.bf16.mxu0 %v540
    %2700 = vmatpush1.bf16.msra.mxu0 %v539
    %2701 = vmatprep.subr.bf16.mxu0 %v536
    %2702 = vmatpush1.bf16.msra.mxu0 %v535
    %2703 = vmatprep.subr.bf16.mxu0 %v532
    %2704 = vmatpush1.bf16.msra.mxu0 %v531
    %2705 = vmatprep.subr.bf16.mxu0 0
    %2706 = vmatpush2.bf16.msra.mxu0 0
    %2707 = vmatprep.subr.bf16.mxu0 0
    %2708 = vmatpush2.bf16.msra.mxu0 0
    %2709 = vmatprep.subr.bf16.mxu0 0
    %2710 = vmatpush2.bf16.msra.mxu0 0
    %2711 = vmatprep.subr.bf16.mxu0 0
    %2712 = vmatpush2.bf16.msra.mxu0 0
    %2713 = vmatprep.subr.bf16.mxu0 0
    %2714 = vmatpush2.bf16.msra.mxu0 0
    %2715 = vmatprep.subr.bf16.mxu0 0
    %2716 = vmatpush2.bf16.msra.mxu0 0
    %2717 = vmatprep.subr.bf16.mxu0 0
    %2718 = vmatpush2.bf16.msra.mxu0 0
    %2719 = vmatprep.subr.bf16.mxu0 0
    %2720 = vmatpush2.bf16.msra.mxu0 0
    %2721 = vmatprep.mubr.bf16.mxu0 0
    %2722 = vmatmul.mubr.bf16.gmra.mxu0 %v2645
    %v2723 = vpop.f32.mrf.mxu0
    %v2724 = vadd.f32 0.0, %v2723
    %v2725 = vpop.f32.mrf.mxu0
    %v2726 = vadd.f32 0.0, %v2725
    %v2727 = vpop.f32.mrf.mxu0
    %v2728 = vpop.f32.mrf.mxu0
    %2729 = vdwg.mxu0
    %v2734 = vrot.slane %v2683, 6
    %v2735 = vrot.slane %v2685, 6
    %v2736 = vrot.slane %v2724, 6
    %v2737 = vrot.slane %v2726, 6
    %v2742 = vadd.f32 %v260, %v2734
    %v2743 = vadd.f32 %v261, %v2735
    %v2744 = vadd.f32 %v262, %v2736
    %v2745 = vadd.f32 %v263, %v2737
    %v2746 = vxor.u32 %v2742, 2147483648
    %v2747 = vxor.u32 %v2743, 2147483648
    %v2748 = vxor.u32 %v2745, 2147483648
    %v2749 = vmul.f32 %v2746, 1.442695
    %v2750 = vpow.pop %v2749
    %v2751 = vmul.f32 %v2747, 1.442695
    %v2752 = vpow.pop %v2751
    %v2753 = vmul.f32 %v2748, 1.442695
    %v2754 = vpow.pop %v2753
    %v2755 = vadd.f32 %v2750, 1.0
    %v2756 = vadd.f32 %v2752, 1.0
    %v2757 = vadd.f32 %v2754, 1.0
    %v2758 = vrcp.pop %v2755
    %v2759 = vmul.f32 1.0, %v2758
    %v2760 = vrcp.pop %v2756
    %v2761 = vmul.f32 1.0, %v2760
    %v2762 = vrcp.pop %v2757
    %v2763 = vmul.f32 1.0, %v2762
    %v2764 = vtanh.pop %v2744
    %v2766 = vrot.slane %v2426, 6
    %v2768 = vmul.f32 %v2761, %v2766
    %v2769 = vmul.f32 %v2759, %v2764
    %v2770 = vadd.f32 %v2768, %v2769
    %v2771 = vtanh.pop %v2770
    %v2772 = vmul.f32 %v2763, %v2771
    %2773 = vmatprep.subr.bf16.mxu0 %v1071
    %2774 = vmatpush1.bf16.msra.mxu0 %v1070
    %2775 = vmatprep.subr.bf16.mxu0 %v1067
    %2776 = vmatpush1.bf16.msra.mxu0 %v1066
    %2777 = vmatprep.subr.bf16.mxu0 %v1063
    %2778 = vmatpush1.bf16.msra.mxu0 %v1062
    %2779 = vmatprep.subr.bf16.mxu0 %v1059
    %2780 = vmatpush1.bf16.msra.mxu0 %v1058
    %2781 = vmatprep.subr.bf16.mxu0 %v1055
    %2782 = vmatpush1.bf16.msra.mxu0 %v1054
    %2783 = vmatprep.subr.bf16.mxu0 %v1051
    %2784 = vmatpush1.bf16.msra.mxu0 %v1050
    %2785 = vmatprep.subr.bf16.mxu0 %v1047
    %2786 = vmatpush1.bf16.msra.mxu0 %v1046
    %2787 = vmatprep.subr.bf16.mxu0 %v1043
    %2788 = vmatpush1.bf16.msra.mxu0 %v1042
    %2789 = vmatprep.subr.bf16.mxu0 %v1103
    %2790 = vmatpush2.bf16.msra.mxu0 %v1102
    %2791 = vmatprep.subr.bf16.mxu0 %v1099
    %2792 = vmatpush2.bf16.msra.mxu0 %v1098
    %2793 = vmatprep.subr.bf16.mxu0 %v1095
    %2794 = vmatpush2.bf16.msra.mxu0 %v1094
    %2795 = vmatprep.subr.bf16.mxu0 %v1091
    %2796 = vmatpush2.bf16.msra.mxu0 %v1090
    %2797 = vmatprep.subr.bf16.mxu0 %v1087
    %2798 = vmatpush2.bf16.msra.mxu0 %v1086
    %2799 = vmatprep.subr.bf16.mxu0 %v1083
    %2800 = vmatpush2.bf16.msra.mxu0 %v1082
    %2801 = vmatprep.subr.bf16.mxu0 %v1079
    %2802 = vmatpush2.bf16.msra.mxu0 %v1078
    %2803 = vmatprep.subr.bf16.mxu0 %v1075
    %2804 = vmatpush2.bf16.msra.mxu0 %v1074
    %2805 = vmatprep.mubr.bf16.mxu0 %v2646
    %2806 = vmatmul.mubr.bf16.gmra.mxu0 %v2645
    %v2807 = vpop.f32.mrf.mxu0
    %v2808 = vadd.f32 %v833, %v2807
    %v2809 = vpop.f32.mrf.mxu0
    %v2810 = vadd.f32 %v837, %v2809
    %v2811 = vpop.f32.mrf.mxu0
    %v2812 = vpop.f32.mrf.mxu0
    %2813 = vdwg.mxu0
    %2814 = vmatprep.subr.bf16.mxu0 %v1073
    %2815 = vmatpush1.bf16.msra.mxu0 %v1072
    %2816 = vmatprep.subr.bf16.mxu0 %v1069
    %2817 = vmatpush1.bf16.msra.mxu0 %v1068
    %2818 = vmatprep.subr.bf16.mxu0 %v1065
    %2819 = vmatpush1.bf16.msra.mxu0 %v1064
    %2820 = vmatprep.subr.bf16.mxu0 %v1061
    %2821 = vmatpush1.bf16.msra.mxu0 %v1060
    %2822 = vmatprep.subr.bf16.mxu0 %v1057
    %2823 = vmatpush1.bf16.msra.mxu0 %v1056
    %2824 = vmatprep.subr.bf16.mxu0 %v1053
    %2825 = vmatpush1.bf16.msra.mxu0 %v1052
    %2826 = vmatprep.subr.bf16.mxu0 %v1049
    %2827 = vmatpush1.bf16.msra.mxu0 %v1048
    %2828 = vmatprep.subr.bf16.mxu0 %v1045
    %2829 = vmatpush1.bf16.msra.mxu0 %v1044
    %2830 = vmatprep.subr.bf16.mxu0 %v1105
    %2831 = vmatpush2.bf16.msra.mxu0 %v1104
    %2832 = vmatprep.subr.bf16.mxu0 %v1101
    %2833 = vmatpush2.bf16.msra.mxu0 %v1100
    %2834 = vmatprep.subr.bf16.mxu0 %v1097
    %2835 = vmatpush2.bf16.msra.mxu0 %v1096
    %2836 = vmatprep.subr.bf16.mxu0 %v1093
    %2837 = vmatpush2.bf16.msra.mxu0 %v1092
    %2838 = vmatprep.subr.bf16.mxu0 %v1089
    %2839 = vmatpush2.bf16.msra.mxu0 %v1088
    %2840 = vmatprep.subr.bf16.mxu0 %v1085
    %2841 = vmatpush2.bf16.msra.mxu0 %v1084
    %2842 = vmatprep.subr.bf16.mxu0 %v1081
    %2843 = vmatpush2.bf16.msra.mxu0 %v1080
    %2844 = vmatprep.subr.bf16.mxu0 %v1077
    %2845 = vmatpush2.bf16.msra.mxu0 %v1076
    %2846 = vmatprep.mubr.bf16.mxu0 %v2646
    %2847 = vmatmul.mubr.bf16.gmra.mxu0 %v2645
    %v2848 = vpop.f32.mrf.mxu0
    %v2849 = vadd.f32 %v841, %v2848
    %v2850 = vpop.f32.mrf.mxu0
    %v2851 = vadd.f32 %v845, %v2850
    %v2852 = vpop.f32.mrf.mxu0
    %v2853 = vpop.f32.mrf.mxu0
    %2854 = vdwg.mxu0
    %v2855 = vxor.u32 %v2808, 2147483648
    %v2856 = vxor.u32 %v2810, 2147483648
    %v2857 = vxor.u32 %v2851, 2147483648
    %v2858 = vmul.f32 %v2855, 1.442695
    %v2859 = vpow.pop %v2858
    %v2860 = vmul.f32 %v2856, 1.442695
    %v2861 = vpow.pop %v2860
    %v2862 = vmul.f32 %v2857, 1.442695
    %v2863 = vpow.pop %v2862
    %v2864 = vadd.f32 %v2859, 1.0
    %v2865 = vadd.f32 %v2861, 1.0
    %v2866 = vadd.f32 %v2863, 1.0
    %v2867 = vrcp.pop %v2864
    %v2868 = vmul.f32 1.0, %v2867
    %v2869 = vrcp.pop %v2865
    %v2870 = vmul.f32 1.0, %v2869
    %v2871 = vrcp.pop %v2866
    %v2872 = vmul.f32 1.0, %v2871
    %v2873 = vtanh.pop %v2849
    %v2874 = vmul.f32 %v2870, %v2536
    %v2875 = vmul.f32 %v2868, %v2873
    %v2876 = vadd.f32 %v2874, %v2875
    %v2877 = vtanh.pop %v2876
    %v2878 = vmul.f32 %v2872, %v2877
    %2879 = vmatprep.subr.bf16.mxu0 %v1758
    %2880 = vmatpush1.bf16.msra.mxu0 %v1757
    %2881 = vmatprep.subr.bf16.mxu0 %v1754
    %2882 = vmatpush1.bf16.msra.mxu0 %v1753
    %2883 = vmatprep.subr.bf16.mxu0 %v1750
    %2884 = vmatpush1.bf16.msra.mxu0 %v1749
    %2885 = vmatprep.subr.bf16.mxu0 %v1746
    %2886 = vmatpush1.bf16.msra.mxu0 %v1745
    %2887 = vmatprep.subr.bf16.mxu0 %v1742
    %2888 = vmatpush1.bf16.msra.mxu0 %v1741
    %2889 = vmatprep.subr.bf16.mxu0 %v1738
    %2890 = vmatpush1.bf16.msra.mxu0 %v1737
    %2891 = vmatprep.subr.bf16.mxu0 %v1734
    %2892 = vmatpush1.bf16.msra.mxu0 %v1733
    %2893 = vmatprep.subr.bf16.mxu0 %v1730
    %2894 = vmatpush1.bf16.msra.mxu0 %v1729
    %2895 = vmatprep.subr.bf16.mxu0 %v1790
    %2896 = vmatpush2.bf16.msra.mxu0 %v1789
    %2897 = vmatprep.subr.bf16.mxu0 %v1786
    %2898 = vmatpush2.bf16.msra.mxu0 %v1785
    %2899 = vmatprep.subr.bf16.mxu0 %v1782
    %2900 = vmatpush2.bf16.msra.mxu0 %v1781
    %2901 = vmatprep.subr.bf16.mxu0 %v1778
    %2902 = vmatpush2.bf16.msra.mxu0 %v1777
    %2903 = vmatprep.subr.bf16.mxu0 %v1774
    %2904 = vmatpush2.bf16.msra.mxu0 %v1773
    %2905 = vmatprep.subr.bf16.mxu0 %v1770
    %2906 = vmatpush2.bf16.msra.mxu0 %v1769
    %2907 = vmatprep.subr.bf16.mxu0 %v1766
    %2908 = vmatpush2.bf16.msra.mxu0 %v1765
    %2909 = vmatprep.subr.bf16.mxu0 %v1762
    %2910 = vmatpush2.bf16.msra.mxu0 %v1761
    %2911 = vmatprep.mubr.bf16.mxu0 %v2647
    %2912 = vmatmul.mubr.bf16.gmra.mxu0 %v2646
    %v2913 = vpop.f32.mrf.mxu0
    %v2914 = vadd.f32 %v1520, %v2913
    %v2915 = vpop.f32.mrf.mxu0
    %v2916 = vadd.f32 %v1524, %v2915
    %v2917 = vpop.f32.mrf.mxu0
    %v2918 = vpop.f32.mrf.mxu0
    %2919 = vdwg.mxu0
    %2920 = vmatprep.subr.bf16.mxu0 %v1760
    %2921 = vmatpush1.bf16.msra.mxu0 %v1759
    %2922 = vmatprep.subr.bf16.mxu0 %v1756
    %2923 = vmatpush1.bf16.msra.mxu0 %v1755
    %2924 = vmatprep.subr.bf16.mxu0 %v1752
    %2925 = vmatpush1.bf16.msra.mxu0 %v1751
    %2926 = vmatprep.subr.bf16.mxu0 %v1748
    %2927 = vmatpush1.bf16.msra.mxu0 %v1747
    %2928 = vmatprep.subr.bf16.mxu0 %v1744
    %2929 = vmatpush1.bf16.msra.mxu0 %v1743
    %2930 = vmatprep.subr.bf16.mxu0 %v1740
    %2931 = vmatpush1.bf16.msra.mxu0 %v1739
    %2932 = vmatprep.subr.bf16.mxu0 %v1736
    %2933 = vmatpush1.bf16.msra.mxu0 %v1735
    %2934 = vmatprep.subr.bf16.mxu0 %v1732
    %2935 = vmatpush1.bf16.msra.mxu0 %v1731
    %2936 = vmatprep.subr.bf16.mxu0 %v1792
    %2937 = vmatpush2.bf16.msra.mxu0 %v1791
    %2938 = vmatprep.subr.bf16.mxu0 %v1788
    %2939 = vmatpush2.bf16.msra.mxu0 %v1787
    %2940 = vmatprep.subr.bf16.mxu0 %v1784
    %2941 = vmatpush2.bf16.msra.mxu0 %v1783
    %2942 = vmatprep.subr.bf16.mxu0 %v1780
    %2943 = vmatpush2.bf16.msra.mxu0 %v1779
    %2944 = vmatprep.subr.bf16.mxu0 %v1776
    %2945 = vmatpush2.bf16.msra.mxu0 %v1775
    %2946 = vmatprep.subr.bf16.mxu0 %v1772
    %2947 = vmatpush2.bf16.msra.mxu0 %v1771
    %2948 = vmatprep.subr.bf16.mxu0 %v1768
    %2949 = vmatpush2.bf16.msra.mxu0 %v1767
    %2950 = vmatprep.subr.bf16.mxu0 %v1764
    %2951 = vmatpush2.bf16.msra.mxu0 %v1763
    %2952 = vmatprep.mubr.bf16.mxu0 %v2647
    %2953 = vmatmul.mubr.bf16.gmra.mxu0 %v2646
    %v2954 = vpop.f32.mrf.mxu0
    %v2955 = vadd.f32 %v1528, %v2954
    %v2956 = vpop.f32.mrf.mxu0
    %v2957 = vadd.f32 %v1532, %v2956
    %v2958 = vpop.f32.mrf.mxu0
    %v2959 = vpop.f32.mrf.mxu0
    %2960 = vdwg.mxu0
    %v2961 = vxor.u32 %v2914, 2147483648
    %v2962 = vxor.u32 %v2916, 2147483648
    %v2963 = vxor.u32 %v2957, 2147483648
    %v2964 = vmul.f32 %v2961, 1.442695
    %v2965 = vpow.pop %v2964
    %v2966 = vmul.f32 %v2962, 1.442695
    %v2967 = vpow.pop %v2966
    %v2968 = vmul.f32 %v2963, 1.442695
    %v2969 = vpow.pop %v2968
    %v2970 = vadd.f32 %v2965, 1.0
    %v2971 = vadd.f32 %v2967, 1.0
    %v2972 = vadd.f32 %v2969, 1.0
    %v2973 = vrcp.pop %v2970
    %v2974 = vmul.f32 1.0, %v2973
    %v2975 = vrcp.pop %v2971
    %v2976 = vmul.f32 1.0, %v2975
    %v2977 = vrcp.pop %v2972
    %v2978 = vmul.f32 1.0, %v2977
    %v2979 = vtanh.pop %v2955
    %v2980 = vmul.f32 %v2976, %v2642
    %v2981 = vmul.f32 %v2974, %v2979
    %v2982 = vadd.f32 %v2980, %v2981
    %v2983 = vtanh.pop %v2982
    %v2984 = vmul.f32 %v2978, %v2983
    %v2985 = vpack.c.bf16 %v2772, %v2772
    %v2986 = vpack.c.bf16 %v2878, %v2878
    %v2987 = vpack.c.bf16 %v2984, %v2984
    %v2989 = vrot.slane %v2985, 1
    %2991 = vmatprep.subr.bf16.mxu0 %v558
    %2992 = vmatpush1.bf16.msra.mxu0 %v557
    %2993 = vmatprep.subr.bf16.mxu0 %v554
    %2994 = vmatpush1.bf16.msra.mxu0 %v553
    %2995 = vmatprep.subr.bf16.mxu0 %v550
    %2996 = vmatpush1.bf16.msra.mxu0 %v549
    %2997 = vmatprep.subr.bf16.mxu0 %v546
    %2998 = vmatpush1.bf16.msra.mxu0 %v545
    %2999 = vmatprep.subr.bf16.mxu0 %v542
    %3000 = vmatpush1.bf16.msra.mxu0 %v541
    %3001 = vmatprep.subr.bf16.mxu0 %v538
    %3002 = vmatpush1.bf16.msra.mxu0 %v537
    %3003 = vmatprep.subr.bf16.mxu0 %v534
    %3004 = vmatpush1.bf16.msra.mxu0 %v533
    %3005 = vmatprep.subr.bf16.mxu0 %v530
    %3006 = vmatpush1.bf16.msra.mxu0 %v529
    %3007 = vmatprep.subr.bf16.mxu0 0
    %3008 = vmatpush2.bf16.msra.mxu0 0
    %3009 = vmatprep.subr.bf16.mxu0 0
    %3010 = vmatpush2.bf16.msra.mxu0 0
    %3011 = vmatprep.subr.bf16.mxu0 0
    %3012 = vmatpush2.bf16.msra.mxu0 0
    %3013 = vmatprep.subr.bf16.mxu0 0
    %3014 = vmatpush2.bf16.msra.mxu0 0
    %3015 = vmatprep.subr.bf16.mxu0 0
    %3016 = vmatpush2.bf16.msra.mxu0 0
    %3017 = vmatprep.subr.bf16.mxu0 0
    %3018 = vmatpush2.bf16.msra.mxu0 0
    %3019 = vmatprep.subr.bf16.mxu0 0
    %3020 = vmatpush2.bf16.msra.mxu0 0
    %3021 = vmatprep.subr.bf16.mxu0 0
    %3022 = vmatpush2.bf16.msra.mxu0 0
    %3023 = vmatprep.mubr.bf16.mxu0 0
    %3024 = vmatmul.mubr.bf16.gmra.mxu0 %v2989
    %v3025 = vpop.f32.mrf.mxu0
    %v3026 = vadd.f32 0.0, %v3025
    %v3027 = vpop.f32.mrf.mxu0
    %v3028 = vadd.f32 0.0, %v3027
    %v3029 = vpop.f32.mrf.mxu0
    %v3030 = vpop.f32.mrf.mxu0
    %3031 = vdwg.mxu0
    %3032 = vmatprep.subr.bf16.mxu0 %v560
    %3033 = vmatpush1.bf16.msra.mxu0 %v559
    %3034 = vmatprep.subr.bf16.mxu0 %v556
    %3035 = vmatpush1.bf16.msra.mxu0 %v555
    %3036 = vmatprep.subr.bf16.mxu0 %v552
    %3037 = vmatpush1.bf16.msra.mxu0 %v551
    %3038 = vmatprep.subr.bf16.mxu0 %v548
    %3039 = vmatpush1.bf16.msra.mxu0 %v547
    %3040 = vmatprep.subr.bf16.mxu0 %v544
    %3041 = vmatpush1.bf16.msra.mxu0 %v543
    %3042 = vmatprep.subr.bf16.mxu0 %v540
    %3043 = vmatpush1.bf16.msra.mxu0 %v539
    %3044 = vmatprep.subr.bf16.mxu0 %v536
    %3045 = vmatpush1.bf16.msra.mxu0 %v535
    %3046 = vmatprep.subr.bf16.mxu0 %v532
    %3047 = vmatpush1.bf16.msra.mxu0 %v531
    %3048 = vmatprep.subr.bf16.mxu0 0
    %3049 = vmatpush2.bf16.msra.mxu0 0
    %3050 = vmatprep.subr.bf16.mxu0 0
    %3051 = vmatpush2.bf16.msra.mxu0 0
    %3052 = vmatprep.subr.bf16.mxu0 0
    %3053 = vmatpush2.bf16.msra.mxu0 0
    %3054 = vmatprep.subr.bf16.mxu0 0
    %3055 = vmatpush2.bf16.msra.mxu0 0
    %3056 = vmatprep.subr.bf16.mxu0 0
    %3057 = vmatpush2.bf16.msra.mxu0 0
    %3058 = vmatprep.subr.bf16.mxu0 0
    %3059 = vmatpush2.bf16.msra.mxu0 0
    %3060 = vmatprep.subr.bf16.mxu0 0
    %3061 = vmatpush2.bf16.msra.mxu0 0
    %3062 = vmatprep.subr.bf16.mxu0 0
    %3063 = vmatpush2.bf16.msra.mxu0 0
    %3064 = vmatprep.mubr.bf16.mxu0 0
    %3065 = vmatmul.mubr.bf16.gmra.mxu0 %v2989
    %v3066 = vpop.f32.mrf.mxu0
    %v3067 = vadd.f32 0.0, %v3066
    %v3068 = vpop.f32.mrf.mxu0
    %v3069 = vadd.f32 0.0, %v3068
    %v3070 = vpop.f32.mrf.mxu0
    %v3071 = vpop.f32.mrf.mxu0
    %3072 = vdwg.mxu0
    %v3077 = vrot.slane %v3026, 4
    %v3078 = vrot.slane %v3028, 4
    %v3079 = vrot.slane %v3067, 4
    %v3080 = vrot.slane %v3069, 4
    %v3085 = vadd.f32 %v260, %v3077
    %v3086 = vadd.f32 %v261, %v3078
    %v3087 = vadd.f32 %v262, %v3079
    %v3088 = vadd.f32 %v263, %v3080
    %v3089 = vxor.u32 %v3085, 2147483648
    %v3090 = vxor.u32 %v3086, 2147483648
    %v3091 = vxor.u32 %v3088, 2147483648
    %v3092 = vmul.f32 %v3089, 1.442695
    %v3093 = vpow.pop %v3092
    %v3094 = vmul.f32 %v3090, 1.442695
    %v3095 = vpow.pop %v3094
    %v3096 = vmul.f32 %v3091, 1.442695
    %v3097 = vpow.pop %v3096
    %v3098 = vadd.f32 %v3093, 1.0
    %v3099 = vadd.f32 %v3095, 1.0
    %v3100 = vadd.f32 %v3097, 1.0
    %v3101 = vrcp.pop %v3098
    %v3102 = vmul.f32 1.0, %v3101
    %v3103 = vrcp.pop %v3099
    %v3104 = vmul.f32 1.0, %v3103
    %v3105 = vrcp.pop %v3100
    %v3106 = vmul.f32 1.0, %v3105
    %v3107 = vtanh.pop %v3087
    %v3109 = vrot.slane %v2770, 6
    %v3111 = vmul.f32 %v3104, %v3109
    %v3112 = vmul.f32 %v3102, %v3107
    %v3113 = vadd.f32 %v3111, %v3112
    %v3114 = vtanh.pop %v3113
    %v3115 = vmul.f32 %v3106, %v3114
    %v3117 = vrot.slane %v2986, 7
    %v3118 = vrot.slane %v3117, 1
    %3120 = vmatprep.subr.bf16.mxu0 %v1071
    %3121 = vmatpush1.bf16.msra.mxu0 %v1070
    %3122 = vmatprep.subr.bf16.mxu0 %v1067
    %3123 = vmatpush1.bf16.msra.mxu0 %v1066
    %3124 = vmatprep.subr.bf16.mxu0 %v1063
    %3125 = vmatpush1.bf16.msra.mxu0 %v1062
    %3126 = vmatprep.subr.bf16.mxu0 %v1059
    %3127 = vmatpush1.bf16.msra.mxu0 %v1058
    %3128 = vmatprep.subr.bf16.mxu0 %v1055
    %3129 = vmatpush1.bf16.msra.mxu0 %v1054
    %3130 = vmatprep.subr.bf16.mxu0 %v1051
    %3131 = vmatpush1.bf16.msra.mxu0 %v1050
    %3132 = vmatprep.subr.bf16.mxu0 %v1047
    %3133 = vmatpush1.bf16.msra.mxu0 %v1046
    %3134 = vmatprep.subr.bf16.mxu0 %v1043
    %3135 = vmatpush1.bf16.msra.mxu0 %v1042
    %3136 = vmatprep.subr.bf16.mxu0 %v1103
    %3137 = vmatpush2.bf16.msra.mxu0 %v1102
    %3138 = vmatprep.subr.bf16.mxu0 %v1099
    %3139 = vmatpush2.bf16.msra.mxu0 %v1098
    %3140 = vmatprep.subr.bf16.mxu0 %v1095
    %3141 = vmatpush2.bf16.msra.mxu0 %v1094
    %3142 = vmatprep.subr.bf16.mxu0 %v1091
    %3143 = vmatpush2.bf16.msra.mxu0 %v1090
    %3144 = vmatprep.subr.bf16.mxu0 %v1087
    %3145 = vmatpush2.bf16.msra.mxu0 %v1086
    %3146 = vmatprep.subr.bf16.mxu0 %v1083
    %3147 = vmatpush2.bf16.msra.mxu0 %v1082
    %3148 = vmatprep.subr.bf16.mxu0 %v1079
    %3149 = vmatpush2.bf16.msra.mxu0 %v1078
    %3150 = vmatprep.subr.bf16.mxu0 %v1075
    %3151 = vmatpush2.bf16.msra.mxu0 %v1074
    %3152 = vmatprep.mubr.bf16.mxu0 %v3118
    %3153 = vmatmul.mubr.bf16.gmra.mxu0 %v2989
    %v3154 = vpop.f32.mrf.mxu0
    %v3155 = vadd.f32 %v833, %v3154
    %v3156 = vpop.f32.mrf.mxu0
    %v3157 = vadd.f32 %v837, %v3156
    %v3158 = vpop.f32.mrf.mxu0
    %v3159 = vpop.f32.mrf.mxu0
    %3160 = vdwg.mxu0
    %3161 = vmatprep.subr.bf16.mxu0 %v1073
    %3162 = vmatpush1.bf16.msra.mxu0 %v1072
    %3163 = vmatprep.subr.bf16.mxu0 %v1069
    %3164 = vmatpush1.bf16.msra.mxu0 %v1068
    %3165 = vmatprep.subr.bf16.mxu0 %v1065
    %3166 = vmatpush1.bf16.msra.mxu0 %v1064
    %3167 = vmatprep.subr.bf16.mxu0 %v1061
    %3168 = vmatpush1.bf16.msra.mxu0 %v1060
    %3169 = vmatprep.subr.bf16.mxu0 %v1057
    %3170 = vmatpush1.bf16.msra.mxu0 %v1056
    %3171 = vmatprep.subr.bf16.mxu0 %v1053
    %3172 = vmatpush1.bf16.msra.mxu0 %v1052
    %3173 = vmatprep.subr.bf16.mxu0 %v1049
    %3174 = vmatpush1.bf16.msra.mxu0 %v1048
    %3175 = vmatprep.subr.bf16.mxu0 %v1045
    %3176 = vmatpush1.bf16.msra.mxu0 %v1044
    %3177 = vmatprep.subr.bf16.mxu0 %v1105
    %3178 = vmatpush2.bf16.msra.mxu0 %v1104
    %3179 = vmatprep.subr.bf16.mxu0 %v1101
    %3180 = vmatpush2.bf16.msra.mxu0 %v1100
    %3181 = vmatprep.subr.bf16.mxu0 %v1097
    %3182 = vmatpush2.bf16.msra.mxu0 %v1096
    %3183 = vmatprep.subr.bf16.mxu0 %v1093
    %3184 = vmatpush2.bf16.msra.mxu0 %v1092
    %3185 = vmatprep.subr.bf16.mxu0 %v1089
    %3186 = vmatpush2.bf16.msra.mxu0 %v1088
    %3187 = vmatprep.subr.bf16.mxu0 %v1085
    %3188 = vmatpush2.bf16.msra.mxu0 %v1084
    %3189 = vmatprep.subr.bf16.mxu0 %v1081
    %3190 = vmatpush2.bf16.msra.mxu0 %v1080
    %3191 = vmatprep.subr.bf16.mxu0 %v1077
    %3192 = vmatpush2.bf16.msra.mxu0 %v1076
    %3193 = vmatprep.mubr.bf16.mxu0 %v3118
    %3194 = vmatmul.mubr.bf16.gmra.mxu0 %v2989
    %v3195 = vpop.f32.mrf.mxu0
    %v3196 = vadd.f32 %v841, %v3195
    %v3197 = vpop.f32.mrf.mxu0
    %v3198 = vadd.f32 %v845, %v3197
    %v3199 = vpop.f32.mrf.mxu0
    %v3200 = vpop.f32.mrf.mxu0
    %3201 = vdwg.mxu0
    %v3202 = vxor.u32 %v3155, 2147483648
    %v3203 = vxor.u32 %v3157, 2147483648
    %v3204 = vxor.u32 %v3198, 2147483648
    %v3205 = vmul.f32 %v3202, 1.442695
    %v3206 = vpow.pop %v3205
    %v3207 = vmul.f32 %v3203, 1.442695
    %v3208 = vpow.pop %v3207
    %v3209 = vmul.f32 %v3204, 1.442695
    %v3210 = vpow.pop %v3209
    %v3211 = vadd.f32 %v3206, 1.0
    %v3212 = vadd.f32 %v3208, 1.0
    %v3213 = vadd.f32 %v3210, 1.0
    %v3214 = vrcp.pop %v3211
    %v3215 = vmul.f32 1.0, %v3214
    %v3216 = vrcp.pop %v3212
    %v3217 = vmul.f32 1.0, %v3216
    %v3218 = vrcp.pop %v3213
    %v3219 = vmul.f32 1.0, %v3218
    %v3220 = vtanh.pop %v3196
    %v3221 = vmul.f32 %v3217, %v2876
    %v3222 = vmul.f32 %v3215, %v3220
    %v3223 = vadd.f32 %v3221, %v3222
    %v3224 = vtanh.pop %v3223
    %v3225 = vmul.f32 %v3219, %v3224
    %3226 = vmatprep.subr.bf16.mxu0 %v1758
    %3227 = vmatpush1.bf16.msra.mxu0 %v1757
    %3228 = vmatprep.subr.bf16.mxu0 %v1754
    %3229 = vmatpush1.bf16.msra.mxu0 %v1753
    %3230 = vmatprep.subr.bf16.mxu0 %v1750
    %3231 = vmatpush1.bf16.msra.mxu0 %v1749
    %3232 = vmatprep.subr.bf16.mxu0 %v1746
    %3233 = vmatpush1.bf16.msra.mxu0 %v1745
    %3234 = vmatprep.subr.bf16.mxu0 %v1742
    %3235 = vmatpush1.bf16.msra.mxu0 %v1741
    %3236 = vmatprep.subr.bf16.mxu0 %v1738
    %3237 = vmatpush1.bf16.msra.mxu0 %v1737
    %3238 = vmatprep.subr.bf16.mxu0 %v1734
    %3239 = vmatpush1.bf16.msra.mxu0 %v1733
    %3240 = vmatprep.subr.bf16.mxu0 %v1730
    %3241 = vmatpush1.bf16.msra.mxu0 %v1729
    %3242 = vmatprep.subr.bf16.mxu0 %v1790
    %3243 = vmatpush2.bf16.msra.mxu0 %v1789
    %3244 = vmatprep.subr.bf16.mxu0 %v1786
    %3245 = vmatpush2.bf16.msra.mxu0 %v1785
    %3246 = vmatprep.subr.bf16.mxu0 %v1782
    %3247 = vmatpush2.bf16.msra.mxu0 %v1781
    %3248 = vmatprep.subr.bf16.mxu0 %v1778
    %3249 = vmatpush2.bf16.msra.mxu0 %v1777
    %3250 = vmatprep.subr.bf16.mxu0 %v1774
    %3251 = vmatpush2.bf16.msra.mxu0 %v1773
    %3252 = vmatprep.subr.bf16.mxu0 %v1770
    %3253 = vmatpush2.bf16.msra.mxu0 %v1769
    %3254 = vmatprep.subr.bf16.mxu0 %v1766
    %3255 = vmatpush2.bf16.msra.mxu0 %v1765
    %3256 = vmatprep.subr.bf16.mxu0 %v1762
    %3257 = vmatpush2.bf16.msra.mxu0 %v1761
    %3258 = vmatprep.mubr.bf16.mxu0 %v2987
    %3259 = vmatmul.mubr.bf16.gmra.mxu0 %v2986
    %v3260 = vpop.f32.mrf.mxu0
    %v3261 = vadd.f32 %v1520, %v3260
    %v3262 = vpop.f32.mrf.mxu0
    %v3263 = vadd.f32 %v1524, %v3262
    %v3264 = vpop.f32.mrf.mxu0
    %v3265 = vpop.f32.mrf.mxu0
    %3266 = vdwg.mxu0
    %3267 = vmatprep.subr.bf16.mxu0 %v1760
    %3268 = vmatpush1.bf16.msra.mxu0 %v1759
    %3269 = vmatprep.subr.bf16.mxu0 %v1756
    %3270 = vmatpush1.bf16.msra.mxu0 %v1755
    %3271 = vmatprep.subr.bf16.mxu0 %v1752
    %3272 = vmatpush1.bf16.msra.mxu0 %v1751
    %3273 = vmatprep.subr.bf16.mxu0 %v1748
    %3274 = vmatpush1.bf16.msra.mxu0 %v1747
    %3275 = vmatprep.subr.bf16.mxu0 %v1744
    %3276 = vmatpush1.bf16.msra.mxu0 %v1743
    %3277 = vmatprep.subr.bf16.mxu0 %v1740
    %3278 = vmatpush1.bf16.msra.mxu0 %v1739
    %3279 = vmatprep.subr.bf16.mxu0 %v1736
    %3280 = vmatpush1.bf16.msra.mxu0 %v1735
    %3281 = vmatprep.subr.bf16.mxu0 %v1732
    %3282 = vmatpush1.bf16.msra.mxu0 %v1731
    %3283 = vmatprep.subr.bf16.mxu0 %v1792
    %3284 = vmatpush2.bf16.msra.mxu0 %v1791
    %3285 = vmatprep.subr.bf16.mxu0 %v1788
    %3286 = vmatpush2.bf16.msra.mxu0 %v1787
    %3287 = vmatprep.subr.bf16.mxu0 %v1784
    %3288 = vmatpush2.bf16.msra.mxu0 %v1783
    %3289 = vmatprep.subr.bf16.mxu0 %v1780
    %3290 = vmatpush2.bf16.msra.mxu0 %v1779
    %3291 = vmatprep.subr.bf16.mxu0 %v1776
    %3292 = vmatpush2.bf16.msra.mxu0 %v1775
    %3293 = vmatprep.subr.bf16.mxu0 %v1772
    %3294 = vmatpush2.bf16.msra.mxu0 %v1771
    %3295 = vmatprep.subr.bf16.mxu0 %v1768
    %3296 = vmatpush2.bf16.msra.mxu0 %v1767
    %3297 = vmatprep.subr.bf16.mxu0 %v1764
    %3298 = vmatpush2.bf16.msra.mxu0 %v1763
    %3299 = vmatprep.mubr.bf16.mxu0 %v2987
    %3300 = vmatmul.mubr.bf16.gmra.mxu0 %v2986
    %v3301 = vpop.f32.mrf.mxu0
    %v3302 = vadd.f32 %v1528, %v3301
    %v3303 = vpop.f32.mrf.mxu0
    %v3304 = vadd.f32 %v1532, %v3303
    %v3305 = vpop.f32.mrf.mxu0
    %v3306 = vpop.f32.mrf.mxu0
    %3307 = vdwg.mxu0
    %v3308 = vxor.u32 %v3261, 2147483648
    %v3309 = vxor.u32 %v3263, 2147483648
    %v3310 = vxor.u32 %v3304, 2147483648
    %v3311 = vmul.f32 %v3308, 1.442695
    %v3312 = vpow.pop %v3311
    %v3313 = vmul.f32 %v3309, 1.442695
    %v3314 = vpow.pop %v3313
    %v3315 = vmul.f32 %v3310, 1.442695
    %v3316 = vpow.pop %v3315
    %v3317 = vadd.f32 %v3312, 1.0
    %v3318 = vadd.f32 %v3314, 1.0
    %v3319 = vadd.f32 %v3316, 1.0
    %v3320 = vrcp.pop %v3317
    %v3321 = vmul.f32 1.0, %v3320
    %v3322 = vrcp.pop %v3318
    %v3323 = vmul.f32 1.0, %v3322
    %v3324 = vrcp.pop %v3319
    %v3325 = vmul.f32 1.0, %v3324
    %v3326 = vtanh.pop %v3302
    %v3327 = vmul.f32 %v3323, %v2982
    %v3328 = vmul.f32 %v3321, %v3326
    %v3329 = vadd.f32 %v3327, %v3328
    %v3330 = vtanh.pop %v3329
    %v3331 = vmul.f32 %v3325, %v3330
    %v3332 = vpack.c.bf16 %v3115, %v3115
    %v3333 = vpack.c.bf16 %v3225, %v3225
    %v3334 = vpack.c.bf16 %v3331, %v3331
    %v3336 = vrot.slane %v3332, 2
    %3338 = vmatprep.subr.bf16.mxu0 %v558
    %3339 = vmatpush1.bf16.msra.mxu0 %v557
    %3340 = vmatprep.subr.bf16.mxu0 %v554
    %3341 = vmatpush1.bf16.msra.mxu0 %v553
    %3342 = vmatprep.subr.bf16.mxu0 %v550
    %3343 = vmatpush1.bf16.msra.mxu0 %v549
    %3344 = vmatprep.subr.bf16.mxu0 %v546
    %3345 = vmatpush1.bf16.msra.mxu0 %v545
    %3346 = vmatprep.subr.bf16.mxu0 %v542
    %3347 = vmatpush1.bf16.msra.mxu0 %v541
    %3348 = vmatprep.subr.bf16.mxu0 %v538
    %3349 = vmatpush1.bf16.msra.mxu0 %v537
    %3350 = vmatprep.subr.bf16.mxu0 %v534
    %3351 = vmatpush1.bf16.msra.mxu0 %v533
    %3352 = vmatprep.subr.bf16.mxu0 %v530
    %3353 = vmatpush1.bf16.msra.mxu0 %v529
    %3354 = vmatprep.subr.bf16.mxu0 0
    %3355 = vmatpush2.bf16.msra.mxu0 0
    %3356 = vmatprep.subr.bf16.mxu0 0
    %3357 = vmatpush2.bf16.msra.mxu0 0
    %3358 = vmatprep.subr.bf16.mxu0 0
    %3359 = vmatpush2.bf16.msra.mxu0 0
    %3360 = vmatprep.subr.bf16.mxu0 0
    %3361 = vmatpush2.bf16.msra.mxu0 0
    %3362 = vmatprep.subr.bf16.mxu0 0
    %3363 = vmatpush2.bf16.msra.mxu0 0
    %3364 = vmatprep.subr.bf16.mxu0 0
    %3365 = vmatpush2.bf16.msra.mxu0 0
    %3366 = vmatprep.subr.bf16.mxu0 0
    %3367 = vmatpush2.bf16.msra.mxu0 0
    %3368 = vmatprep.subr.bf16.mxu0 0
    %3369 = vmatpush2.bf16.msra.mxu0 0
    %3370 = vmatprep.mubr.bf16.mxu0 0
    %3371 = vmatmul.mubr.bf16.gmra.mxu0 %v3336
    %v3372 = vpop.f32.mrf.mxu0
    %v3373 = vadd.f32 0.0, %v3372
    %v3374 = vpop.f32.mrf.mxu0
    %v3375 = vadd.f32 0.0, %v3374
    %v3376 = vpop.f32.mrf.mxu0
    %v3377 = vpop.f32.mrf.mxu0
    %3378 = vdwg.mxu0
    %3379 = vmatprep.subr.bf16.mxu0 %v560
    %3380 = vmatpush1.bf16.msra.mxu0 %v559
    %3381 = vmatprep.subr.bf16.mxu0 %v556
    %3382 = vmatpush1.bf16.msra.mxu0 %v555
    %3383 = vmatprep.subr.bf16.mxu0 %v552
    %3384 = vmatpush1.bf16.msra.mxu0 %v551
    %3385 = vmatprep.subr.bf16.mxu0 %v548
    %3386 = vmatpush1.bf16.msra.mxu0 %v547
    %3387 = vmatprep.subr.bf16.mxu0 %v544
    %3388 = vmatpush1.bf16.msra.mxu0 %v543
    %3389 = vmatprep.subr.bf16.mxu0 %v540
    %3390 = vmatpush1.bf16.msra.mxu0 %v539
    %3391 = vmatprep.subr.bf16.mxu0 %v536
    %3392 = vmatpush1.bf16.msra.mxu0 %v535
    %3393 = vmatprep.subr.bf16.mxu0 %v532
    %3394 = vmatpush1.bf16.msra.mxu0 %v531
    %3395 = vmatprep.subr.bf16.mxu0 0
    %3396 = vmatpush2.bf16.msra.mxu0 0
    %3397 = vmatprep.subr.bf16.mxu0 0
    %3398 = vmatpush2.bf16.msra.mxu0 0
    %3399 = vmatprep.subr.bf16.mxu0 0
    %3400 = vmatpush2.bf16.msra.mxu0 0
    %3401 = vmatprep.subr.bf16.mxu0 0
    %3402 = vmatpush2.bf16.msra.mxu0 0
    %3403 = vmatprep.subr.bf16.mxu0 0
    %3404 = vmatpush2.bf16.msra.mxu0 0
    %3405 = vmatprep.subr.bf16.mxu0 0
    %3406 = vmatpush2.bf16.msra.mxu0 0
    %3407 = vmatprep.subr.bf16.mxu0 0
    %3408 = vmatpush2.bf16.msra.mxu0 0
    %3409 = vmatprep.subr.bf16.mxu0 0
    %3410 = vmatpush2.bf16.msra.mxu0 0
    %3411 = vmatprep.mubr.bf16.mxu0 0
    %3412 = vmatmul.mubr.bf16.gmra.mxu0 %v3336
    %v3413 = vpop.f32.mrf.mxu0
    %v3414 = vadd.f32 0.0, %v3413
    %v3415 = vpop.f32.mrf.mxu0
    %v3416 = vadd.f32 0.0, %v3415
    %v3417 = vpop.f32.mrf.mxu0
    %v3418 = vpop.f32.mrf.mxu0
    %3419 = vdwg.mxu0
    %v3424 = vrot.slane %v3373, 2
    %v3425 = vrot.slane %v3375, 2
    %v3426 = vrot.slane %v3414, 2
    %v3427 = vrot.slane %v3416, 2
    %v3432 = vadd.f32 %v260, %v3424
    %v3433 = vadd.f32 %v261, %v3425
    %v3434 = vadd.f32 %v262, %v3426
    %v3435 = vadd.f32 %v263, %v3427
    %v3436 = vxor.u32 %v3432, 2147483648
    %v3437 = vxor.u32 %v3433, 2147483648
    %v3438 = vxor.u32 %v3435, 2147483648
    %v3439 = vmul.f32 %v3436, 1.442695
    %v3440 = vpow.pop %v3439
    %v3441 = vmul.f32 %v3437, 1.442695
    %v3442 = vpow.pop %v3441
    %v3443 = vmul.f32 %v3438, 1.442695
    %v3444 = vpow.pop %v3443
    %v3445 = vadd.f32 %v3440, 1.0
    %v3446 = vadd.f32 %v3442, 1.0
    %v3447 = vadd.f32 %v3444, 1.0
    %v3448 = vrcp.pop %v3445
    %v3449 = vmul.f32 1.0, %v3448
    %v3450 = vrcp.pop %v3446
    %v3451 = vmul.f32 1.0, %v3450
    %v3452 = vrcp.pop %v3447
    %v3453 = vmul.f32 1.0, %v3452
    %v3454 = vtanh.pop %v3434
    %v3456 = vrot.slane %v3113, 6
    %v3458 = vmul.f32 %v3451, %v3456
    %v3459 = vmul.f32 %v3449, %v3454
    %v3460 = vadd.f32 %v3458, %v3459
    %v3461 = vtanh.pop %v3460
    %v3462 = vmul.f32 %v3453, %v3461
    %v3464 = vrot.slane %v3333, 6
    %v3465 = vrot.slane %v3464, 2
    %3467 = vmatprep.subr.bf16.mxu0 %v1071
    %3468 = vmatpush1.bf16.msra.mxu0 %v1070
    %3469 = vmatprep.subr.bf16.mxu0 %v1067
    %3470 = vmatpush1.bf16.msra.mxu0 %v1066
    %3471 = vmatprep.subr.bf16.mxu0 %v1063
    %3472 = vmatpush1.bf16.msra.mxu0 %v1062
    %3473 = vmatprep.subr.bf16.mxu0 %v1059
    %3474 = vmatpush1.bf16.msra.mxu0 %v1058
    %3475 = vmatprep.subr.bf16.mxu0 %v1055
    %3476 = vmatpush1.bf16.msra.mxu0 %v1054
    %3477 = vmatprep.subr.bf16.mxu0 %v1051
    %3478 = vmatpush1.bf16.msra.mxu0 %v1050
    %3479 = vmatprep.subr.bf16.mxu0 %v1047
    %3480 = vmatpush1.bf16.msra.mxu0 %v1046
    %3481 = vmatprep.subr.bf16.mxu0 %v1043
    %3482 = vmatpush1.bf16.msra.mxu0 %v1042
    %3483 = vmatprep.subr.bf16.mxu0 %v1103
    %3484 = vmatpush2.bf16.msra.mxu0 %v1102
    %3485 = vmatprep.subr.bf16.mxu0 %v1099
    %3486 = vmatpush2.bf16.msra.mxu0 %v1098
    %3487 = vmatprep.subr.bf16.mxu0 %v1095
    %3488 = vmatpush2.bf16.msra.mxu0 %v1094
    %3489 = vmatprep.subr.bf16.mxu0 %v1091
    %3490 = vmatpush2.bf16.msra.mxu0 %v1090
    %3491 = vmatprep.subr.bf16.mxu0 %v1087
    %3492 = vmatpush2.bf16.msra.mxu0 %v1086
    %3493 = vmatprep.subr.bf16.mxu0 %v1083
    %3494 = vmatpush2.bf16.msra.mxu0 %v1082
    %3495 = vmatprep.subr.bf16.mxu0 %v1079
    %3496 = vmatpush2.bf16.msra.mxu0 %v1078
    %3497 = vmatprep.subr.bf16.mxu0 %v1075
    %3498 = vmatpush2.bf16.msra.mxu0 %v1074
    %3499 = vmatprep.mubr.bf16.mxu0 %v3465
    %3500 = vmatmul.mubr.bf16.gmra.mxu0 %v3336
    %v3501 = vpop.f32.mrf.mxu0
    %v3502 = vadd.f32 %v833, %v3501
    %v3503 = vpop.f32.mrf.mxu0
    %v3504 = vadd.f32 %v837, %v3503
    %v3505 = vpop.f32.mrf.mxu0
    %v3506 = vpop.f32.mrf.mxu0
    %3507 = vdwg.mxu0
    %3508 = vmatprep.subr.bf16.mxu0 %v1073
    %3509 = vmatpush1.bf16.msra.mxu0 %v1072
    %3510 = vmatprep.subr.bf16.mxu0 %v1069
    %3511 = vmatpush1.bf16.msra.mxu0 %v1068
    %3512 = vmatprep.subr.bf16.mxu0 %v1065
    %3513 = vmatpush1.bf16.msra.mxu0 %v1064
    %3514 = vmatprep.subr.bf16.mxu0 %v1061
    %3515 = vmatpush1.bf16.msra.mxu0 %v1060
    %3516 = vmatprep.subr.bf16.mxu0 %v1057
    %3517 = vmatpush1.bf16.msra.mxu0 %v1056
    %3518 = vmatprep.subr.bf16.mxu0 %v1053
    %3519 = vmatpush1.bf16.msra.mxu0 %v1052
    %3520 = vmatprep.subr.bf16.mxu0 %v1049
    %3521 = vmatpush1.bf16.msra.mxu0 %v1048
    %3522 = vmatprep.subr.bf16.mxu0 %v1045
    %3523 = vmatpush1.bf16.msra.mxu0 %v1044
    %3524 = vmatprep.subr.bf16.mxu0 %v1105
    %3525 = vmatpush2.bf16.msra.mxu0 %v1104
    %3526 = vmatprep.subr.bf16.mxu0 %v1101
    %3527 = vmatpush2.bf16.msra.mxu0 %v1100
    %3528 = vmatprep.subr.bf16.mxu0 %v1097
    %3529 = vmatpush2.bf16.msra.mxu0 %v1096
    %3530 = vmatprep.subr.bf16.mxu0 %v1093
    %3531 = vmatpush2.bf16.msra.mxu0 %v1092
    %3532 = vmatprep.subr.bf16.mxu0 %v1089
    %3533 = vmatpush2.bf16.msra.mxu0 %v1088
    %3534 = vmatprep.subr.bf16.mxu0 %v1085
    %3535 = vmatpush2.bf16.msra.mxu0 %v1084
    %3536 = vmatprep.subr.bf16.mxu0 %v1081
    %3537 = vmatpush2.bf16.msra.mxu0 %v1080
    %3538 = vmatprep.subr.bf16.mxu0 %v1077
    %3539 = vmatpush2.bf16.msra.mxu0 %v1076
    %3540 = vmatprep.mubr.bf16.mxu0 %v3465
    %3541 = vmatmul.mubr.bf16.gmra.mxu0 %v3336
    %v3542 = vpop.f32.mrf.mxu0
    %v3543 = vadd.f32 %v841, %v3542
    %v3544 = vpop.f32.mrf.mxu0
    %v3545 = vadd.f32 %v845, %v3544
    %v3546 = vpop.f32.mrf.mxu0
    %v3547 = vpop.f32.mrf.mxu0
    %3548 = vdwg.mxu0
    %v3549 = vxor.u32 %v3502, 2147483648
    %v3550 = vxor.u32 %v3504, 2147483648
    %v3551 = vxor.u32 %v3545, 2147483648
    %v3552 = vmul.f32 %v3549, 1.442695
    %v3553 = vpow.pop %v3552
    %v3554 = vmul.f32 %v3550, 1.442695
    %v3555 = vpow.pop %v3554
    %v3556 = vmul.f32 %v3551, 1.442695
    %v3557 = vpow.pop %v3556
    %v3558 = vadd.f32 %v3553, 1.0
    %v3559 = vadd.f32 %v3555, 1.0
    %v3560 = vadd.f32 %v3557, 1.0
    %v3561 = vrcp.pop %v3558
    %v3562 = vmul.f32 1.0, %v3561
    %v3563 = vrcp.pop %v3559
    %v3564 = vmul.f32 1.0, %v3563
    %v3565 = vrcp.pop %v3560
    %v3566 = vmul.f32 1.0, %v3565
    %v3567 = vtanh.pop %v3543
    %v3568 = vmul.f32 %v3564, %v3223
    %v3569 = vmul.f32 %v3562, %v3567
    %v3570 = vadd.f32 %v3568, %v3569
    %v3571 = vtanh.pop %v3570
    %v3572 = vmul.f32 %v3566, %v3571
    %3573 = vmatprep.subr.bf16.mxu0 %v1758
    %3574 = vmatpush1.bf16.msra.mxu0 %v1757
    %3575 = vmatprep.subr.bf16.mxu0 %v1754
    %3576 = vmatpush1.bf16.msra.mxu0 %v1753
    %3577 = vmatprep.subr.bf16.mxu0 %v1750
    %3578 = vmatpush1.bf16.msra.mxu0 %v1749
    %3579 = vmatprep.subr.bf16.mxu0 %v1746
    %3580 = vmatpush1.bf16.msra.mxu0 %v1745
    %3581 = vmatprep.subr.bf16.mxu0 %v1742
    %3582 = vmatpush1.bf16.msra.mxu0 %v1741
    %3583 = vmatprep.subr.bf16.mxu0 %v1738
    %3584 = vmatpush1.bf16.msra.mxu0 %v1737
    %3585 = vmatprep.subr.bf16.mxu0 %v1734
    %3586 = vmatpush1.bf16.msra.mxu0 %v1733
    %3587 = vmatprep.subr.bf16.mxu0 %v1730
    %3588 = vmatpush1.bf16.msra.mxu0 %v1729
    %3589 = vmatprep.subr.bf16.mxu0 %v1790
    %3590 = vmatpush2.bf16.msra.mxu0 %v1789
    %3591 = vmatprep.subr.bf16.mxu0 %v1786
    %3592 = vmatpush2.bf16.msra.mxu0 %v1785
    %3593 = vmatprep.subr.bf16.mxu0 %v1782
    %3594 = vmatpush2.bf16.msra.mxu0 %v1781
    %3595 = vmatprep.subr.bf16.mxu0 %v1778
    %3596 = vmatpush2.bf16.msra.mxu0 %v1777
    %3597 = vmatprep.subr.bf16.mxu0 %v1774
    %3598 = vmatpush2.bf16.msra.mxu0 %v1773
    %3599 = vmatprep.subr.bf16.mxu0 %v1770
    %3600 = vmatpush2.bf16.msra.mxu0 %v1769
    %3601 = vmatprep.subr.bf16.mxu0 %v1766
    %3602 = vmatpush2.bf16.msra.mxu0 %v1765
    %3603 = vmatprep.subr.bf16.mxu0 %v1762
    %3604 = vmatpush2.bf16.msra.mxu0 %v1761
    %3605 = vmatprep.mubr.bf16.mxu0 %v3334
    %3606 = vmatmul.mubr.bf16.gmra.mxu0 %v3333
    %v3607 = vpop.f32.mrf.mxu0
    %v3608 = vadd.f32 %v1520, %v3607
    %v3609 = vpop.f32.mrf.mxu0
    %v3610 = vadd.f32 %v1524, %v3609
    %v3611 = vpop.f32.mrf.mxu0
    %v3612 = vpop.f32.mrf.mxu0
    %3613 = vdwg.mxu0
    %3614 = vmatprep.subr.bf16.mxu0 %v1760
    %3615 = vmatpush1.bf16.msra.mxu0 %v1759
    %3616 = vmatprep.subr.bf16.mxu0 %v1756
    %3617 = vmatpush1.bf16.msra.mxu0 %v1755
    %3618 = vmatprep.subr.bf16.mxu0 %v1752
    %3619 = vmatpush1.bf16.msra.mxu0 %v1751
    %3620 = vmatprep.subr.bf16.mxu0 %v1748
    %3621 = vmatpush1.bf16.msra.mxu0 %v1747
    %3622 = vmatprep.subr.bf16.mxu0 %v1744
    %3623 = vmatpush1.bf16.msra.mxu0 %v1743
    %3624 = vmatprep.subr.bf16.mxu0 %v1740
    %3625 = vmatpush1.bf16.msra.mxu0 %v1739
    %3626 = vmatprep.subr.bf16.mxu0 %v1736
    %3627 = vmatpush1.bf16.msra.mxu0 %v1735
    %3628 = vmatprep.subr.bf16.mxu0 %v1732
    %3629 = vmatpush1.bf16.msra.mxu0 %v1731
    %3630 = vmatprep.subr.bf16.mxu0 %v1792
    %3631 = vmatpush2.bf16.msra.mxu0 %v1791
    %3632 = vmatprep.subr.bf16.mxu0 %v1788
    %3633 = vmatpush2.bf16.msra.mxu0 %v1787
    %3634 = vmatprep.subr.bf16.mxu0 %v1784
    %3635 = vmatpush2.bf16.msra.mxu0 %v1783
    %3636 = vmatprep.subr.bf16.mxu0 %v1780
    %3637 = vmatpush2.bf16.msra.mxu0 %v1779
    %3638 = vmatprep.subr.bf16.mxu0 %v1776
    %3639 = vmatpush2.bf16.msra.mxu0 %v1775
    %3640 = vmatprep.subr.bf16.mxu0 %v1772
    %3641 = vmatpush2.bf16.msra.mxu0 %v1771
    %3642 = vmatprep.subr.bf16.mxu0 %v1768
    %3643 = vmatpush2.bf16.msra.mxu0 %v1767
    %3644 = vmatprep.subr.bf16.mxu0 %v1764
    %3645 = vmatpush2.bf16.msra.mxu0 %v1763
    %3646 = vmatprep.mubr.bf16.mxu0 %v3334
    %3647 = vmatmul.mubr.bf16.gmra.mxu0 %v3333
    %v3648 = vpop.f32.mrf.mxu0
    %v3649 = vadd.f32 %v1528, %v3648
    %v3650 = vpop.f32.mrf.mxu0
    %v3651 = vadd.f32 %v1532, %v3650
    %v3652 = vpop.f32.mrf.mxu0
    %v3653 = vpop.f32.mrf.mxu0
    %3654 = vdwg.mxu0
    %v3655 = vxor.u32 %v3608, 2147483648
    %v3656 = vxor.u32 %v3610, 2147483648
    %v3657 = vxor.u32 %v3651, 2147483648
    %v3658 = vmul.f32 %v3655, 1.442695
    %v3659 = vpow.pop %v3658
    %v3660 = vmul.f32 %v3656, 1.442695
    %v3661 = vpow.pop %v3660
    %v3662 = vmul.f32 %v3657, 1.442695
    %v3663 = vpow.pop %v3662
    %v3664 = vadd.f32 %v3659, 1.0
    %v3665 = vadd.f32 %v3661, 1.0
    %v3666 = vadd.f32 %v3663, 1.0
    %v3667 = vrcp.pop %v3664
    %v3668 = vmul.f32 1.0, %v3667
    %v3669 = vrcp.pop %v3665
    %v3670 = vmul.f32 1.0, %v3669
    %v3671 = vrcp.pop %v3666
    %v3672 = vmul.f32 1.0, %v3671
    %v3673 = vtanh.pop %v3649
    %v3674 = vmul.f32 %v3670, %v3329
    %v3675 = vmul.f32 %v3668, %v3673
    %v3676 = vadd.f32 %v3674, %v3675
    %v3677 = vtanh.pop %v3676
    %v3678 = vmul.f32 %v3672, %v3677
    %v3679 = vpack.c.bf16 %v3462, %v3462
    %v3680 = vpack.c.bf16 %v3572, %v3572
    %v3681 = vpack.c.bf16 %v3678, %v3678
    %v3683 = vrot.slane %v3679, 3
    %3685 = vmatprep.subr.bf16.mxu0 %v558
    %3686 = vmatpush1.bf16.msra.mxu0 %v557
    %3687 = vmatprep.subr.bf16.mxu0 %v554
    %3688 = vmatpush1.bf16.msra.mxu0 %v553
    %3689 = vmatprep.subr.bf16.mxu0 %v550
    %3690 = vmatpush1.bf16.msra.mxu0 %v549
    %3691 = vmatprep.subr.bf16.mxu0 %v546
    %3692 = vmatpush1.bf16.msra.mxu0 %v545
    %3693 = vmatprep.subr.bf16.mxu0 %v542
    %3694 = vmatpush1.bf16.msra.mxu0 %v541
    %3695 = vmatprep.subr.bf16.mxu0 %v538
    %3696 = vmatpush1.bf16.msra.mxu0 %v537
    %3697 = vmatprep.subr.bf16.mxu0 %v534
    %3698 = vmatpush1.bf16.msra.mxu0 %v533
    %3699 = vmatprep.subr.bf16.mxu0 %v530
    %3700 = vmatpush1.bf16.msra.mxu0 %v529
    %3701 = vmatprep.subr.bf16.mxu0 0
    %3702 = vmatpush2.bf16.msra.mxu0 0
    %3703 = vmatprep.subr.bf16.mxu0 0
    %3704 = vmatpush2.bf16.msra.mxu0 0
    %3705 = vmatprep.subr.bf16.mxu0 0
    %3706 = vmatpush2.bf16.msra.mxu0 0
    %3707 = vmatprep.subr.bf16.mxu0 0
    %3708 = vmatpush2.bf16.msra.mxu0 0
    %3709 = vmatprep.subr.bf16.mxu0 0
    %3710 = vmatpush2.bf16.msra.mxu0 0
    %3711 = vmatprep.subr.bf16.mxu0 0
    %3712 = vmatpush2.bf16.msra.mxu0 0
    %3713 = vmatprep.subr.bf16.mxu0 0
    %3714 = vmatpush2.bf16.msra.mxu0 0
    %3715 = vmatprep.subr.bf16.mxu0 0
    %3716 = vmatpush2.bf16.msra.mxu0 0
    %3717 = vmatprep.mubr.bf16.mxu0 0
    %3718 = vmatmul.mubr.bf16.gmra.mxu0 %v3683
    %v3719 = vpop.f32.mrf.mxu0
    %v3720 = vadd.f32 0.0, %v3719
    %v3721 = vpop.f32.mrf.mxu0
    %v3722 = vadd.f32 0.0, %v3721
    %v3723 = vpop.f32.mrf.mxu0
    %v3724 = vpop.f32.mrf.mxu0
    %3725 = vdwg.mxu0
    %3726 = vmatprep.subr.bf16.mxu0 %v560
    %3727 = vmatpush1.bf16.msra.mxu0 %v559
    %3728 = vmatprep.subr.bf16.mxu0 %v556
    %3729 = vmatpush1.bf16.msra.mxu0 %v555
    %3730 = vmatprep.subr.bf16.mxu0 %v552
    %3731 = vmatpush1.bf16.msra.mxu0 %v551
    %3732 = vmatprep.subr.bf16.mxu0 %v548
    %3733 = vmatpush1.bf16.msra.mxu0 %v547
    %3734 = vmatprep.subr.bf16.mxu0 %v544
    %3735 = vmatpush1.bf16.msra.mxu0 %v543
    %3736 = vmatprep.subr.bf16.mxu0 %v540
    %3737 = vmatpush1.bf16.msra.mxu0 %v539
    %3738 = vmatprep.subr.bf16.mxu0 %v536
    %3739 = vmatpush1.bf16.msra.mxu0 %v535
    %3740 = vmatprep.subr.bf16.mxu0 %v532
    %3741 = vmatpush1.bf16.msra.mxu0 %v531
    %3742 = vmatprep.subr.bf16.mxu0 0
    %3743 = vmatpush2.bf16.msra.mxu0 0
    %3744 = vmatprep.subr.bf16.mxu0 0
    %3745 = vmatpush2.bf16.msra.mxu0 0
    %3746 = vmatprep.subr.bf16.mxu0 0
    %3747 = vmatpush2.bf16.msra.mxu0 0
    %3748 = vmatprep.subr.bf16.mxu0 0
    %3749 = vmatpush2.bf16.msra.mxu0 0
    %3750 = vmatprep.subr.bf16.mxu0 0
    %3751 = vmatpush2.bf16.msra.mxu0 0
    %3752 = vmatprep.subr.bf16.mxu0 0
    %3753 = vmatpush2.bf16.msra.mxu0 0
    %3754 = vmatprep.subr.bf16.mxu0 0
    %3755 = vmatpush2.bf16.msra.mxu0 0
    %3756 = vmatprep.subr.bf16.mxu0 0
    %3757 = vmatpush2.bf16.msra.mxu0 0
    %3758 = vmatprep.mubr.bf16.mxu0 0
    %3759 = vmatmul.mubr.bf16.gmra.mxu0 %v3683
    %v3760 = vpop.f32.mrf.mxu0
    %v3761 = vadd.f32 0.0, %v3760
    %v3762 = vpop.f32.mrf.mxu0
    %v3763 = vadd.f32 0.0, %v3762
    %v3764 = vpop.f32.mrf.mxu0
    %v3765 = vpop.f32.mrf.mxu0
    %3766 = vdwg.mxu0
    %v3767 = vadd.f32 %v264, %v3720
    %v3768 = vadd.f32 %v265, %v3722
    %v3769 = vadd.f32 %v266, %v3761
    %v3770 = vadd.f32 %v267, %v3763
    %v3771 = vxor.u32 %v3767, 2147483648
    %v3772 = vxor.u32 %v3768, 2147483648
    %v3773 = vxor.u32 %v3770, 2147483648
    %v3774 = vmul.f32 %v3771, 1.442695
    %v3775 = vpow.pop %v3774
    %v3776 = vmul.f32 %v3772, 1.442695
    %v3777 = vpow.pop %v3776
    %v3778 = vmul.f32 %v3773, 1.442695
    %v3779 = vpow.pop %v3778
    %v3780 = vadd.f32 %v3775, 1.0
    %v3781 = vadd.f32 %v3777, 1.0
    %v3782 = vadd.f32 %v3779, 1.0
    %v3783 = vrcp.pop %v3780
    %v3784 = vmul.f32 1.0, %v3783
    %v3785 = vrcp.pop %v3781
    %v3786 = vmul.f32 1.0, %v3785
    %v3787 = vrcp.pop %v3782
    %v3788 = vmul.f32 1.0, %v3787
    %v3789 = vtanh.pop %v3769
    %v3791 = vrot.slane %v3460, 6
    %v3793 = vmul.f32 %v3786, %v3791
    %v3794 = vmul.f32 %v3784, %v3789
    %v3795 = vadd.f32 %v3793, %v3794
    %v3796 = vtanh.pop %v3795
    %v3797 = vmul.f32 %v3788, %v3796
    %v3799 = vrot.slane %v3680, 5
    %v3800 = vrot.slane %v3799, 3
    %3802 = vmatprep.subr.bf16.mxu0 %v1071
    %3803 = vmatpush1.bf16.msra.mxu0 %v1070
    %3804 = vmatprep.subr.bf16.mxu0 %v1067
    %3805 = vmatpush1.bf16.msra.mxu0 %v1066
    %3806 = vmatprep.subr.bf16.mxu0 %v1063
    %3807 = vmatpush1.bf16.msra.mxu0 %v1062
    %3808 = vmatprep.subr.bf16.mxu0 %v1059
    %3809 = vmatpush1.bf16.msra.mxu0 %v1058
    %3810 = vmatprep.subr.bf16.mxu0 %v1055
    %3811 = vmatpush1.bf16.msra.mxu0 %v1054
    %3812 = vmatprep.subr.bf16.mxu0 %v1051
    %3813 = vmatpush1.bf16.msra.mxu0 %v1050
    %3814 = vmatprep.subr.bf16.mxu0 %v1047
    %3815 = vmatpush1.bf16.msra.mxu0 %v1046
    %3816 = vmatprep.subr.bf16.mxu0 %v1043
    %3817 = vmatpush1.bf16.msra.mxu0 %v1042
    %3818 = vmatprep.subr.bf16.mxu0 %v1103
    %3819 = vmatpush2.bf16.msra.mxu0 %v1102
    %3820 = vmatprep.subr.bf16.mxu0 %v1099
    %3821 = vmatpush2.bf16.msra.mxu0 %v1098
    %3822 = vmatprep.subr.bf16.mxu0 %v1095
    %3823 = vmatpush2.bf16.msra.mxu0 %v1094
    %3824 = vmatprep.subr.bf16.mxu0 %v1091
    %3825 = vmatpush2.bf16.msra.mxu0 %v1090
    %3826 = vmatprep.subr.bf16.mxu0 %v1087
    %3827 = vmatpush2.bf16.msra.mxu0 %v1086
    %3828 = vmatprep.subr.bf16.mxu0 %v1083
    %3829 = vmatpush2.bf16.msra.mxu0 %v1082
    %3830 = vmatprep.subr.bf16.mxu0 %v1079
    %3831 = vmatpush2.bf16.msra.mxu0 %v1078
    %3832 = vmatprep.subr.bf16.mxu0 %v1075
    %3833 = vmatpush2.bf16.msra.mxu0 %v1074
    %3834 = vmatprep.mubr.bf16.mxu0 %v3800
    %3835 = vmatmul.mubr.bf16.gmra.mxu0 %v3683
    %v3836 = vpop.f32.mrf.mxu0
    %v3837 = vadd.f32 %v833, %v3836
    %v3838 = vpop.f32.mrf.mxu0
    %v3839 = vadd.f32 %v837, %v3838
    %v3840 = vpop.f32.mrf.mxu0
    %v3841 = vpop.f32.mrf.mxu0
    %3842 = vdwg.mxu0
    %3843 = vmatprep.subr.bf16.mxu0 %v1073
    %3844 = vmatpush1.bf16.msra.mxu0 %v1072
    %3845 = vmatprep.subr.bf16.mxu0 %v1069
    %3846 = vmatpush1.bf16.msra.mxu0 %v1068
    %3847 = vmatprep.subr.bf16.mxu0 %v1065
    %3848 = vmatpush1.bf16.msra.mxu0 %v1064
    %3849 = vmatprep.subr.bf16.mxu0 %v1061
    %3850 = vmatpush1.bf16.msra.mxu0 %v1060
    %3851 = vmatprep.subr.bf16.mxu0 %v1057
    %3852 = vmatpush1.bf16.msra.mxu0 %v1056
    %3853 = vmatprep.subr.bf16.mxu0 %v1053
    %3854 = vmatpush1.bf16.msra.mxu0 %v1052
    %3855 = vmatprep.subr.bf16.mxu0 %v1049
    %3856 = vmatpush1.bf16.msra.mxu0 %v1048
    %3857 = vmatprep.subr.bf16.mxu0 %v1045
    %3858 = vmatpush1.bf16.msra.mxu0 %v1044
    %3859 = vmatprep.subr.bf16.mxu0 %v1105
    %3860 = vmatpush2.bf16.msra.mxu0 %v1104
    %3861 = vmatprep.subr.bf16.mxu0 %v1101
    %3862 = vmatpush2.bf16.msra.mxu0 %v1100
    %3863 = vmatprep.subr.bf16.mxu0 %v1097
    %3864 = vmatpush2.bf16.msra.mxu0 %v1096
    %3865 = vmatprep.subr.bf16.mxu0 %v1093
    %3866 = vmatpush2.bf16.msra.mxu0 %v1092
    %3867 = vmatprep.subr.bf16.mxu0 %v1089
    %3868 = vmatpush2.bf16.msra.mxu0 %v1088
    %3869 = vmatprep.subr.bf16.mxu0 %v1085
    %3870 = vmatpush2.bf16.msra.mxu0 %v1084
    %3871 = vmatprep.subr.bf16.mxu0 %v1081
    %3872 = vmatpush2.bf16.msra.mxu0 %v1080
    %3873 = vmatprep.subr.bf16.mxu0 %v1077
    %3874 = vmatpush2.bf16.msra.mxu0 %v1076
    %3875 = vmatprep.mubr.bf16.mxu0 %v3800
    %3876 = vmatmul.mubr.bf16.gmra.mxu0 %v3683
    %v3877 = vpop.f32.mrf.mxu0
    %v3878 = vadd.f32 %v841, %v3877
    %v3879 = vpop.f32.mrf.mxu0
    %v3880 = vadd.f32 %v845, %v3879
    %v3881 = vpop.f32.mrf.mxu0
    %v3882 = vpop.f32.mrf.mxu0
    %3883 = vdwg.mxu0
    %v3884 = vxor.u32 %v3837, 2147483648
    %v3885 = vxor.u32 %v3839, 2147483648
    %v3886 = vxor.u32 %v3880, 2147483648
    %v3887 = vmul.f32 %v3884, 1.442695
    %v3888 = vpow.pop %v3887
    %v3889 = vmul.f32 %v3885, 1.442695
    %v3890 = vpow.pop %v3889
    %v3891 = vmul.f32 %v3886, 1.442695
    %v3892 = vpow.pop %v3891
    %v3893 = vadd.f32 %v3888, 1.0
    %v3894 = vadd.f32 %v3890, 1.0
    %v3895 = vadd.f32 %v3892, 1.0
    %v3896 = vrcp.pop %v3893
    %v3897 = vmul.f32 1.0, %v3896
    %v3898 = vrcp.pop %v3894
    %v3899 = vmul.f32 1.0, %v3898
    %v3900 = vrcp.pop %v3895
    %v3901 = vmul.f32 1.0, %v3900
    %v3902 = vtanh.pop %v3878
    %v3903 = vmul.f32 %v3899, %v3570
    %v3904 = vmul.f32 %v3897, %v3902
    %v3905 = vadd.f32 %v3903, %v3904
    %v3906 = vtanh.pop %v3905
    %v3907 = vmul.f32 %v3901, %v3906
    %3908 = vmatprep.subr.bf16.mxu0 %v1758
    %3909 = vmatpush1.bf16.msra.mxu0 %v1757
    %3910 = vmatprep.subr.bf16.mxu0 %v1754
    %3911 = vmatpush1.bf16.msra.mxu0 %v1753
    %3912 = vmatprep.subr.bf16.mxu0 %v1750
    %3913 = vmatpush1.bf16.msra.mxu0 %v1749
    %3914 = vmatprep.subr.bf16.mxu0 %v1746
    %3915 = vmatpush1.bf16.msra.mxu0 %v1745
    %3916 = vmatprep.subr.bf16.mxu0 %v1742
    %3917 = vmatpush1.bf16.msra.mxu0 %v1741
    %3918 = vmatprep.subr.bf16.mxu0 %v1738
    %3919 = vmatpush1.bf16.msra.mxu0 %v1737
    %3920 = vmatprep.subr.bf16.mxu0 %v1734
    %3921 = vmatpush1.bf16.msra.mxu0 %v1733
    %3922 = vmatprep.subr.bf16.mxu0 %v1730
    %3923 = vmatpush1.bf16.msra.mxu0 %v1729
    %3924 = vmatprep.subr.bf16.mxu0 %v1790
    %3925 = vmatpush2.bf16.msra.mxu0 %v1789
    %3926 = vmatprep.subr.bf16.mxu0 %v1786
    %3927 = vmatpush2.bf16.msra.mxu0 %v1785
    %3928 = vmatprep.subr.bf16.mxu0 %v1782
    %3929 = vmatpush2.bf16.msra.mxu0 %v1781
    %3930 = vmatprep.subr.bf16.mxu0 %v1778
    %3931 = vmatpush2.bf16.msra.mxu0 %v1777
    %3932 = vmatprep.subr.bf16.mxu0 %v1774
    %3933 = vmatpush2.bf16.msra.mxu0 %v1773
    %3934 = vmatprep.subr.bf16.mxu0 %v1770
    %3935 = vmatpush2.bf16.msra.mxu0 %v1769
    %3936 = vmatprep.subr.bf16.mxu0 %v1766
    %3937 = vmatpush2.bf16.msra.mxu0 %v1765
    %3938 = vmatprep.subr.bf16.mxu0 %v1762
    %3939 = vmatpush2.bf16.msra.mxu0 %v1761
    %3940 = vmatprep.mubr.bf16.mxu0 %v3681
    %3941 = vmatmul.mubr.bf16.gmra.mxu0 %v3680
    %v3942 = vpop.f32.mrf.mxu0
    %v3943 = vadd.f32 %v1520, %v3942
    %v3944 = vpop.f32.mrf.mxu0
    %v3945 = vadd.f32 %v1524, %v3944
    %v3946 = vpop.f32.mrf.mxu0
    %v3947 = vpop.f32.mrf.mxu0
    %3948 = vdwg.mxu0
    %3949 = vmatprep.subr.bf16.mxu0 %v1760
    %3950 = vmatpush1.bf16.msra.mxu0 %v1759
    %3951 = vmatprep.subr.bf16.mxu0 %v1756
    %3952 = vmatpush1.bf16.msra.mxu0 %v1755
    %3953 = vmatprep.subr.bf16.mxu0 %v1752
    %3954 = vmatpush1.bf16.msra.mxu0 %v1751
    %3955 = vmatprep.subr.bf16.mxu0 %v1748
    %3956 = vmatpush1.bf16.msra.mxu0 %v1747
    %3957 = vmatprep.subr.bf16.mxu0 %v1744
    %3958 = vmatpush1.bf16.msra.mxu0 %v1743
    %3959 = vmatprep.subr.bf16.mxu0 %v1740
    %3960 = vmatpush1.bf16.msra.mxu0 %v1739
    %3961 = vmatprep.subr.bf16.mxu0 %v1736
    %3962 = vmatpush1.bf16.msra.mxu0 %v1735
    %3963 = vmatprep.subr.bf16.mxu0 %v1732
    %3964 = vmatpush1.bf16.msra.mxu0 %v1731
    %3965 = vmatprep.subr.bf16.mxu0 %v1792
    %3966 = vmatpush2.bf16.msra.mxu0 %v1791
    %3967 = vmatprep.subr.bf16.mxu0 %v1788
    %3968 = vmatpush2.bf16.msra.mxu0 %v1787
    %3969 = vmatprep.subr.bf16.mxu0 %v1784
    %3970 = vmatpush2.bf16.msra.mxu0 %v1783
    %3971 = vmatprep.subr.bf16.mxu0 %v1780
    %3972 = vmatpush2.bf16.msra.mxu0 %v1779
    %3973 = vmatprep.subr.bf16.mxu0 %v1776
    %3974 = vmatpush2.bf16.msra.mxu0 %v1775
    %3975 = vmatprep.subr.bf16.mxu0 %v1772
    %3976 = vmatpush2.bf16.msra.mxu0 %v1771
    %3977 = vmatprep.subr.bf16.mxu0 %v1768
    %3978 = vmatpush2.bf16.msra.mxu0 %v1767
    %3979 = vmatprep.subr.bf16.mxu0 %v1764
    %3980 = vmatpush2.bf16.msra.mxu0 %v1763
    %3981 = vmatprep.mubr.bf16.mxu0 %v3681
    %3982 = vmatmul.mubr.bf16.gmra.mxu0 %v3680
    %v3983 = vpop.f32.mrf.mxu0
    %v3984 = vadd.f32 %v1528, %v3983
    %v3985 = vpop.f32.mrf.mxu0
    %v3986 = vadd.f32 %v1532, %v3985
    %v3987 = vpop.f32.mrf.mxu0
    %v3988 = vpop.f32.mrf.mxu0
    %3989 = vdwg.mxu0
    %v3990 = vxor.u32 %v3943, 2147483648
    %v3991 = vxor.u32 %v3945, 2147483648
    %v3992 = vxor.u32 %v3986, 2147483648
    %v3993 = vmul.f32 %v3990, 1.442695
    %v3994 = vpow.pop %v3993
    %v3995 = vmul.f32 %v3991, 1.442695
    %v3996 = vpow.pop %v3995
    %v3997 = vmul.f32 %v3992, 1.442695
    %v3998 = vpow.pop %v3997
    %v3999 = vadd.f32 %v3994, 1.0
    %v4000 = vadd.f32 %v3996, 1.0
    %v4001 = vadd.f32 %v3998, 1.0
    %v4002 = vrcp.pop %v3999
    %v4003 = vmul.f32 1.0, %v4002
    %v4004 = vrcp.pop %v4000
    %v4005 = vmul.f32 1.0, %v4004
    %v4006 = vrcp.pop %v4001
    %v4007 = vmul.f32 1.0, %v4006
    %v4008 = vtanh.pop %v3984
    %v4009 = vmul.f32 %v4005, %v3676
    %v4010 = vmul.f32 %v4003, %v4008
    %v4011 = vadd.f32 %v4009, %v4010
    %v4012 = vtanh.pop %v4011
    %v4013 = vmul.f32 %v4007, %v4012
    %v4014 = vpack.c.bf16 %v3797, %v3797
    %v4015 = vpack.c.bf16 %v3907, %v3907
    %v4016 = vpack.c.bf16 %v4013, %v4013
    %4017 = vmatprep.subr.bf16.mxu0 %v558
    %4018 = vmatpush1.bf16.msra.mxu0 %v557
    %4019 = vmatprep.subr.bf16.mxu0 %v554
    %4020 = vmatpush1.bf16.msra.mxu0 %v553
    %4021 = vmatprep.subr.bf16.mxu0 %v550
    %4022 = vmatpush1.bf16.msra.mxu0 %v549
    %4023 = vmatprep.subr.bf16.mxu0 %v546
    %4024 = vmatpush1.bf16.msra.mxu0 %v545
    %4025 = vmatprep.subr.bf16.mxu0 %v542
    %4026 = vmatpush1.bf16.msra.mxu0 %v541
    %4027 = vmatprep.subr.bf16.mxu0 %v538
    %4028 = vmatpush1.bf16.msra.mxu0 %v537
    %4029 = vmatprep.subr.bf16.mxu0 %v534
    %4030 = vmatpush1.bf16.msra.mxu0 %v533
    %4031 = vmatprep.subr.bf16.mxu0 %v530
    %4032 = vmatpush1.bf16.msra.mxu0 %v529
    %4033 = vmatprep.subr.bf16.mxu0 0
    %4034 = vmatpush2.bf16.msra.mxu0 0
    %4035 = vmatprep.subr.bf16.mxu0 0
    %4036 = vmatpush2.bf16.msra.mxu0 0
    %4037 = vmatprep.subr.bf16.mxu0 0
    %4038 = vmatpush2.bf16.msra.mxu0 0
    %4039 = vmatprep.subr.bf16.mxu0 0
    %4040 = vmatpush2.bf16.msra.mxu0 0
    %4041 = vmatprep.subr.bf16.mxu0 0
    %4042 = vmatpush2.bf16.msra.mxu0 0
    %4043 = vmatprep.subr.bf16.mxu0 0
    %4044 = vmatpush2.bf16.msra.mxu0 0
    %4045 = vmatprep.subr.bf16.mxu0 0
    %4046 = vmatpush2.bf16.msra.mxu0 0
    %4047 = vmatprep.subr.bf16.mxu0 0
    %4048 = vmatpush2.bf16.msra.mxu0 0
    %4049 = vmatprep.mubr.bf16.mxu0 0
    %4050 = vmatmul.mubr.bf16.gmra.mxu0 %v4014
    %v4051 = vpop.f32.mrf.mxu0
    %v4052 = vadd.f32 0.0, %v4051
    %v4053 = vpop.f32.mrf.mxu0
    %v4054 = vadd.f32 0.0, %v4053
    %v4055 = vpop.f32.mrf.mxu0
    %v4056 = vpop.f32.mrf.mxu0
    %4057 = vdwg.mxu0
    %4058 = vmatprep.subr.bf16.mxu0 %v560
    %4059 = vmatpush1.bf16.msra.mxu0 %v559
    %4060 = vmatprep.subr.bf16.mxu0 %v556
    %4061 = vmatpush1.bf16.msra.mxu0 %v555
    %4062 = vmatprep.subr.bf16.mxu0 %v552
    %4063 = vmatpush1.bf16.msra.mxu0 %v551
    %4064 = vmatprep.subr.bf16.mxu0 %v548
    %4065 = vmatpush1.bf16.msra.mxu0 %v547
    %4066 = vmatprep.subr.bf16.mxu0 %v544
    %4067 = vmatpush1.bf16.msra.mxu0 %v543
    %4068 = vmatprep.subr.bf16.mxu0 %v540
    %4069 = vmatpush1.bf16.msra.mxu0 %v539
    %4070 = vmatprep.subr.bf16.mxu0 %v536
    %4071 = vmatpush1.bf16.msra.mxu0 %v535
    %4072 = vmatprep.subr.bf16.mxu0 %v532
    %4073 = vmatpush1.bf16.msra.mxu0 %v531
    %4074 = vmatprep.subr.bf16.mxu0 0
    %4075 = vmatpush2.bf16.msra.mxu0 0
    %4076 = vmatprep.subr.bf16.mxu0 0
    %4077 = vmatpush2.bf16.msra.mxu0 0
    %4078 = vmatprep.subr.bf16.mxu0 0
    %4079 = vmatpush2.bf16.msra.mxu0 0
    %4080 = vmatprep.subr.bf16.mxu0 0
    %4081 = vmatpush2.bf16.msra.mxu0 0
    %4082 = vmatprep.subr.bf16.mxu0 0
    %4083 = vmatpush2.bf16.msra.mxu0 0
    %4084 = vmatprep.subr.bf16.mxu0 0
    %4085 = vmatpush2.bf16.msra.mxu0 0
    %4086 = vmatprep.subr.bf16.mxu0 0
    %4087 = vmatpush2.bf16.msra.mxu0 0
    %4088 = vmatprep.subr.bf16.mxu0 0
    %4089 = vmatpush2.bf16.msra.mxu0 0
    %4090 = vmatprep.mubr.bf16.mxu0 0
    %4091 = vmatmul.mubr.bf16.gmra.mxu0 %v4014
    %v4092 = vpop.f32.mrf.mxu0
    %v4093 = vadd.f32 0.0, %v4092
    %v4094 = vpop.f32.mrf.mxu0
    %v4095 = vadd.f32 0.0, %v4094
    %v4096 = vpop.f32.mrf.mxu0
    %v4097 = vpop.f32.mrf.mxu0
    %4098 = vdwg.mxu0
    %v4103 = vrot.slane %v4052, 6
    %v4104 = vrot.slane %v4054, 6
    %v4105 = vrot.slane %v4093, 6
    %v4106 = vrot.slane %v4095, 6
    %v4111 = vadd.f32 %v264, %v4103
    %v4112 = vadd.f32 %v265, %v4104
    %v4113 = vadd.f32 %v266, %v4105
    %v4114 = vadd.f32 %v267, %v4106
    %v4115 = vxor.u32 %v4111, 2147483648
    %v4116 = vxor.u32 %v4112, 2147483648
    %v4117 = vxor.u32 %v4114, 2147483648
    %v4118 = vmul.f32 %v4115, 1.442695
    %v4119 = vpow.pop %v4118
    %v4120 = vmul.f32 %v4116, 1.442695
    %v4121 = vpow.pop %v4120
    %v4122 = vmul.f32 %v4117, 1.442695
    %v4123 = vpow.pop %v4122
    %v4124 = vadd.f32 %v4119, 1.0
    %v4125 = vadd.f32 %v4121, 1.0
    %v4126 = vadd.f32 %v4123, 1.0
    %v4127 = vrcp.pop %v4124
    %v4128 = vmul.f32 1.0, %v4127
    %v4129 = vrcp.pop %v4125
    %v4130 = vmul.f32 1.0, %v4129
    %v4131 = vrcp.pop %v4126
    %v4132 = vmul.f32 1.0, %v4131
    %v4133 = vtanh.pop %v4113
    %v4135 = vrot.slane %v3795, 6
    %v4137 = vmul.f32 %v4130, %v4135
    %v4138 = vmul.f32 %v4128, %v4133
    %v4139 = vadd.f32 %v4137, %v4138
    %v4140 = vtanh.pop %v4139
    %v4141 = vmul.f32 %v4132, %v4140
    %4142 = vmatprep.subr.bf16.mxu0 %v1071
    %4143 = vmatpush1.bf16.msra.mxu0 %v1070
    %4144 = vmatprep.subr.bf16.mxu0 %v1067
    %4145 = vmatpush1.bf16.msra.mxu0 %v1066
    %4146 = vmatprep.subr.bf16.mxu0 %v1063
    %4147 = vmatpush1.bf16.msra.mxu0 %v1062
    %4148 = vmatprep.subr.bf16.mxu0 %v1059
    %4149 = vmatpush1.bf16.msra.mxu0 %v1058
    %4150 = vmatprep.subr.bf16.mxu0 %v1055
    %4151 = vmatpush1.bf16.msra.mxu0 %v1054
    %4152 = vmatprep.subr.bf16.mxu0 %v1051
    %4153 = vmatpush1.bf16.msra.mxu0 %v1050
    %4154 = vmatprep.subr.bf16.mxu0 %v1047
    %4155 = vmatpush1.bf16.msra.mxu0 %v1046
    %4156 = vmatprep.subr.bf16.mxu0 %v1043
    %4157 = vmatpush1.bf16.msra.mxu0 %v1042
    %4158 = vmatprep.subr.bf16.mxu0 %v1103
    %4159 = vmatpush2.bf16.msra.mxu0 %v1102
    %4160 = vmatprep.subr.bf16.mxu0 %v1099
    %4161 = vmatpush2.bf16.msra.mxu0 %v1098
    %4162 = vmatprep.subr.bf16.mxu0 %v1095
    %4163 = vmatpush2.bf16.msra.mxu0 %v1094
    %4164 = vmatprep.subr.bf16.mxu0 %v1091
    %4165 = vmatpush2.bf16.msra.mxu0 %v1090
    %4166 = vmatprep.subr.bf16.mxu0 %v1087
    %4167 = vmatpush2.bf16.msra.mxu0 %v1086
    %4168 = vmatprep.subr.bf16.mxu0 %v1083
    %4169 = vmatpush2.bf16.msra.mxu0 %v1082
    %4170 = vmatprep.subr.bf16.mxu0 %v1079
    %4171 = vmatpush2.bf16.msra.mxu0 %v1078
    %4172 = vmatprep.subr.bf16.mxu0 %v1075
    %4173 = vmatpush2.bf16.msra.mxu0 %v1074
    %4174 = vmatprep.mubr.bf16.mxu0 %v4015
    %4175 = vmatmul.mubr.bf16.gmra.mxu0 %v4014
    %v4176 = vpop.f32.mrf.mxu0
    %v4177 = vadd.f32 %v833, %v4176
    %v4178 = vpop.f32.mrf.mxu0
    %v4179 = vadd.f32 %v837, %v4178
    %v4180 = vpop.f32.mrf.mxu0
    %v4181 = vpop.f32.mrf.mxu0
    %4182 = vdwg.mxu0
    %4183 = vmatprep.subr.bf16.mxu0 %v1073
    %4184 = vmatpush1.bf16.msra.mxu0 %v1072
    %4185 = vmatprep.subr.bf16.mxu0 %v1069
    %4186 = vmatpush1.bf16.msra.mxu0 %v1068
    %4187 = vmatprep.subr.bf16.mxu0 %v1065
    %4188 = vmatpush1.bf16.msra.mxu0 %v1064
    %4189 = vmatprep.subr.bf16.mxu0 %v1061
    %4190 = vmatpush1.bf16.msra.mxu0 %v1060
    %4191 = vmatprep.subr.bf16.mxu0 %v1057
    %4192 = vmatpush1.bf16.msra.mxu0 %v1056
    %4193 = vmatprep.subr.bf16.mxu0 %v1053
    %4194 = vmatpush1.bf16.msra.mxu0 %v1052
    %4195 = vmatprep.subr.bf16.mxu0 %v1049
    %4196 = vmatpush1.bf16.msra.mxu0 %v1048
    %4197 = vmatprep.subr.bf16.mxu0 %v1045
    %4198 = vmatpush1.bf16.msra.mxu0 %v1044
    %4199 = vmatprep.subr.bf16.mxu0 %v1105
    %4200 = vmatpush2.bf16.msra.mxu0 %v1104
    %4201 = vmatprep.subr.bf16.mxu0 %v1101
    %4202 = vmatpush2.bf16.msra.mxu0 %v1100
    %4203 = vmatprep.subr.bf16.mxu0 %v1097
    %4204 = vmatpush2.bf16.msra.mxu0 %v1096
    %4205 = vmatprep.subr.bf16.mxu0 %v1093
    %4206 = vmatpush2.bf16.msra.mxu0 %v1092
    %4207 = vmatprep.subr.bf16.mxu0 %v1089
    %4208 = vmatpush2.bf16.msra.mxu0 %v1088
    %4209 = vmatprep.subr.bf16.mxu0 %v1085
    %4210 = vmatpush2.bf16.msra.mxu0 %v1084
    %4211 = vmatprep.subr.bf16.mxu0 %v1081
    %4212 = vmatpush2.bf16.msra.mxu0 %v1080
    %4213 = vmatprep.subr.bf16.mxu0 %v1077
    %4214 = vmatpush2.bf16.msra.mxu0 %v1076
    %4215 = vmatprep.mubr.bf16.mxu0 %v4015
    %4216 = vmatmul.mubr.bf16.gmra.mxu0 %v4014
    %v4217 = vpop.f32.mrf.mxu0
    %v4218 = vadd.f32 %v841, %v4217
    %v4219 = vpop.f32.mrf.mxu0
    %v4220 = vadd.f32 %v845, %v4219
    %v4221 = vpop.f32.mrf.mxu0
    %v4222 = vpop.f32.mrf.mxu0
    %4223 = vdwg.mxu0
    %v4224 = vxor.u32 %v4177, 2147483648
    %v4225 = vxor.u32 %v4179, 2147483648
    %v4226 = vxor.u32 %v4220, 2147483648
    %v4227 = vmul.f32 %v4224, 1.442695
    %v4228 = vpow.pop %v4227
    %v4229 = vmul.f32 %v4225, 1.442695
    %v4230 = vpow.pop %v4229
    %v4231 = vmul.f32 %v4226, 1.442695
    %v4232 = vpow.pop %v4231
    %v4233 = vadd.f32 %v4228, 1.0
    %v4234 = vadd.f32 %v4230, 1.0
    %v4235 = vadd.f32 %v4232, 1.0
    %v4236 = vrcp.pop %v4233
    %v4237 = vmul.f32 1.0, %v4236
    %v4238 = vrcp.pop %v4234
    %v4239 = vmul.f32 1.0, %v4238
    %v4240 = vrcp.pop %v4235
    %v4241 = vmul.f32 1.0, %v4240
    %v4242 = vtanh.pop %v4218
    %v4243 = vmul.f32 %v4239, %v3905
    %v4244 = vmul.f32 %v4237, %v4242
    %v4245 = vadd.f32 %v4243, %v4244
    %v4246 = vtanh.pop %v4245
    %v4247 = vmul.f32 %v4241, %v4246
    %4248 = vmatprep.subr.bf16.mxu0 %v1758
    %4249 = vmatpush1.bf16.msra.mxu0 %v1757
    %4250 = vmatprep.subr.bf16.mxu0 %v1754
    %4251 = vmatpush1.bf16.msra.mxu0 %v1753
    %4252 = vmatprep.subr.bf16.mxu0 %v1750
    %4253 = vmatpush1.bf16.msra.mxu0 %v1749
    %4254 = vmatprep.subr.bf16.mxu0 %v1746
    %4255 = vmatpush1.bf16.msra.mxu0 %v1745
    %4256 = vmatprep.subr.bf16.mxu0 %v1742
    %4257 = vmatpush1.bf16.msra.mxu0 %v1741
    %4258 = vmatprep.subr.bf16.mxu0 %v1738
    %4259 = vmatpush1.bf16.msra.mxu0 %v1737
    %4260 = vmatprep.subr.bf16.mxu0 %v1734
    %4261 = vmatpush1.bf16.msra.mxu0 %v1733
    %4262 = vmatprep.subr.bf16.mxu0 %v1730
    %4263 = vmatpush1.bf16.msra.mxu0 %v1729
    %4264 = vmatprep.subr.bf16.mxu0 %v1790
    %4265 = vmatpush2.bf16.msra.mxu0 %v1789
    %4266 = vmatprep.subr.bf16.mxu0 %v1786
    %4267 = vmatpush2.bf16.msra.mxu0 %v1785
    %4268 = vmatprep.subr.bf16.mxu0 %v1782
    %4269 = vmatpush2.bf16.msra.mxu0 %v1781
    %4270 = vmatprep.subr.bf16.mxu0 %v1778
    %4271 = vmatpush2.bf16.msra.mxu0 %v1777
    %4272 = vmatprep.subr.bf16.mxu0 %v1774
    %4273 = vmatpush2.bf16.msra.mxu0 %v1773
    %4274 = vmatprep.subr.bf16.mxu0 %v1770
    %4275 = vmatpush2.bf16.msra.mxu0 %v1769
    %4276 = vmatprep.subr.bf16.mxu0 %v1766
    %4277 = vmatpush2.bf16.msra.mxu0 %v1765
    %4278 = vmatprep.subr.bf16.mxu0 %v1762
    %4279 = vmatpush2.bf16.msra.mxu0 %v1761
    %4280 = vmatprep.mubr.bf16.mxu0 %v4016
    %4281 = vmatmul.mubr.bf16.gmra.mxu0 %v4015
    %v4282 = vpop.f32.mrf.mxu0
    %v4283 = vadd.f32 %v1520, %v4282
    %v4284 = vpop.f32.mrf.mxu0
    %v4285 = vadd.f32 %v1524, %v4284
    %v4286 = vpop.f32.mrf.mxu0
    %v4287 = vpop.f32.mrf.mxu0
    %4288 = vdwg.mxu0
    %4289 = vmatprep.subr.bf16.mxu0 %v1760
    %4290 = vmatpush1.bf16.msra.mxu0 %v1759
    %4291 = vmatprep.subr.bf16.mxu0 %v1756
    %4292 = vmatpush1.bf16.msra.mxu0 %v1755
    %4293 = vmatprep.subr.bf16.mxu0 %v1752
    %4294 = vmatpush1.bf16.msra.mxu0 %v1751
    %4295 = vmatprep.subr.bf16.mxu0 %v1748
    %4296 = vmatpush1.bf16.msra.mxu0 %v1747
    %4297 = vmatprep.subr.bf16.mxu0 %v1744
    %4298 = vmatpush1.bf16.msra.mxu0 %v1743
    %4299 = vmatprep.subr.bf16.mxu0 %v1740
    %4300 = vmatpush1.bf16.msra.mxu0 %v1739
    %4301 = vmatprep.subr.bf16.mxu0 %v1736
    %4302 = vmatpush1.bf16.msra.mxu0 %v1735
    %4303 = vmatprep.subr.bf16.mxu0 %v1732
    %4304 = vmatpush1.bf16.msra.mxu0 %v1731
    %4305 = vmatprep.subr.bf16.mxu0 %v1792
    %4306 = vmatpush2.bf16.msra.mxu0 %v1791
    %4307 = vmatprep.subr.bf16.mxu0 %v1788
    %4308 = vmatpush2.bf16.msra.mxu0 %v1787
    %4309 = vmatprep.subr.bf16.mxu0 %v1784
    %4310 = vmatpush2.bf16.msra.mxu0 %v1783
    %4311 = vmatprep.subr.bf16.mxu0 %v1780
    %4312 = vmatpush2.bf16.msra.mxu0 %v1779
    %4313 = vmatprep.subr.bf16.mxu0 %v1776
    %4314 = vmatpush2.bf16.msra.mxu0 %v1775
    %4315 = vmatprep.subr.bf16.mxu0 %v1772
    %4316 = vmatpush2.bf16.msra.mxu0 %v1771
    %4317 = vmatprep.subr.bf16.mxu0 %v1768
    %4318 = vmatpush2.bf16.msra.mxu0 %v1767
    %4319 = vmatprep.subr.bf16.mxu0 %v1764
    %4320 = vmatpush2.bf16.msra.mxu0 %v1763
    %4321 = vmatprep.mubr.bf16.mxu0 %v4016
    %4322 = vmatmul.mubr.bf16.gmra.mxu0 %v4015
    %v4323 = vpop.f32.mrf.mxu0
    %v4324 = vadd.f32 %v1528, %v4323
    %v4325 = vpop.f32.mrf.mxu0
    %v4326 = vadd.f32 %v1532, %v4325
    %v4327 = vpop.f32.mrf.mxu0
    %v4328 = vpop.f32.mrf.mxu0
    %4329 = vdwg.mxu0
    %v4330 = vxor.u32 %v4283, 2147483648
    %v4331 = vxor.u32 %v4285, 2147483648
    %v4332 = vxor.u32 %v4326, 2147483648
    %v4333 = vmul.f32 %v4330, 1.442695
    %v4334 = vpow.pop %v4333
    %v4335 = vmul.f32 %v4331, 1.442695
    %v4336 = vpow.pop %v4335
    %v4337 = vmul.f32 %v4332, 1.442695
    %v4338 = vpow.pop %v4337
    %v4339 = vadd.f32 %v4334, 1.0
    %v4340 = vadd.f32 %v4336, 1.0
    %v4341 = vadd.f32 %v4338, 1.0
    %v4342 = vrcp.pop %v4339
    %v4343 = vmul.f32 1.0, %v4342
    %v4344 = vrcp.pop %v4340
    %v4345 = vmul.f32 1.0, %v4344
    %v4346 = vrcp.pop %v4341
    %v4347 = vmul.f32 1.0, %v4346
    %v4348 = vtanh.pop %v4324
    %v4349 = vmul.f32 %v4345, %v4011
    %v4350 = vmul.f32 %v4343, %v4348
    %v4351 = vadd.f32 %v4349, %v4350
    %v4352 = vtanh.pop %v4351
    %v4353 = vmul.f32 %v4347, %v4352
    %v4354 = vpack.c.bf16 %v4141, %v4141
    %v4355 = vpack.c.bf16 %v4247, %v4247
    %v4356 = vpack.c.bf16 %v4353, %v4353
    %v4358 = vrot.slane %v4355, 7
    %v4360 = vrot.slane %v4354, 1
    %v4361 = vrot.slane %v4358, 1
    %4364 = vmatprep.subr.bf16.mxu0 %v1071
    %4365 = vmatpush1.bf16.msra.mxu0 %v1070
    %4366 = vmatprep.subr.bf16.mxu0 %v1067
    %4367 = vmatpush1.bf16.msra.mxu0 %v1066
    %4368 = vmatprep.subr.bf16.mxu0 %v1063
    %4369 = vmatpush1.bf16.msra.mxu0 %v1062
    %4370 = vmatprep.subr.bf16.mxu0 %v1059
    %4371 = vmatpush1.bf16.msra.mxu0 %v1058
    %4372 = vmatprep.subr.bf16.mxu0 %v1055
    %4373 = vmatpush1.bf16.msra.mxu0 %v1054
    %4374 = vmatprep.subr.bf16.mxu0 %v1051
    %4375 = vmatpush1.bf16.msra.mxu0 %v1050
    %4376 = vmatprep.subr.bf16.mxu0 %v1047
    %4377 = vmatpush1.bf16.msra.mxu0 %v1046
    %4378 = vmatprep.subr.bf16.mxu0 %v1043
    %4379 = vmatpush1.bf16.msra.mxu0 %v1042
    %4380 = vmatprep.subr.bf16.mxu0 %v1103
    %4381 = vmatpush2.bf16.msra.mxu0 %v1102
    %4382 = vmatprep.subr.bf16.mxu0 %v1099
    %4383 = vmatpush2.bf16.msra.mxu0 %v1098
    %4384 = vmatprep.subr.bf16.mxu0 %v1095
    %4385 = vmatpush2.bf16.msra.mxu0 %v1094
    %4386 = vmatprep.subr.bf16.mxu0 %v1091
    %4387 = vmatpush2.bf16.msra.mxu0 %v1090
    %4388 = vmatprep.subr.bf16.mxu0 %v1087
    %4389 = vmatpush2.bf16.msra.mxu0 %v1086
    %4390 = vmatprep.subr.bf16.mxu0 %v1083
    %4391 = vmatpush2.bf16.msra.mxu0 %v1082
    %4392 = vmatprep.subr.bf16.mxu0 %v1079
    %4393 = vmatpush2.bf16.msra.mxu0 %v1078
    %4394 = vmatprep.subr.bf16.mxu0 %v1075
    %4395 = vmatpush2.bf16.msra.mxu0 %v1074
    %4396 = vmatprep.mubr.bf16.mxu0 %v4361
    %4397 = vmatmul.mubr.bf16.gmra.mxu0 %v4360
    %v4398 = vpop.f32.mrf.mxu0
    %v4399 = vadd.f32 %v833, %v4398
    %v4400 = vpop.f32.mrf.mxu0
    %v4401 = vadd.f32 %v837, %v4400
    %v4402 = vpop.f32.mrf.mxu0
    %v4403 = vpop.f32.mrf.mxu0
    %4404 = vdwg.mxu0
    %4405 = vmatprep.subr.bf16.mxu0 %v1073
    %4406 = vmatpush1.bf16.msra.mxu0 %v1072
    %4407 = vmatprep.subr.bf16.mxu0 %v1069
    %4408 = vmatpush1.bf16.msra.mxu0 %v1068
    %4409 = vmatprep.subr.bf16.mxu0 %v1065
    %4410 = vmatpush1.bf16.msra.mxu0 %v1064
    %4411 = vmatprep.subr.bf16.mxu0 %v1061
    %4412 = vmatpush1.bf16.msra.mxu0 %v1060
    %4413 = vmatprep.subr.bf16.mxu0 %v1057
    %4414 = vmatpush1.bf16.msra.mxu0 %v1056
    %4415 = vmatprep.subr.bf16.mxu0 %v1053
    %4416 = vmatpush1.bf16.msra.mxu0 %v1052
    %4417 = vmatprep.subr.bf16.mxu0 %v1049
    %4418 = vmatpush1.bf16.msra.mxu0 %v1048
    %4419 = vmatprep.subr.bf16.mxu0 %v1045
    %4420 = vmatpush1.bf16.msra.mxu0 %v1044
    %4421 = vmatprep.subr.bf16.mxu0 %v1105
    %4422 = vmatpush2.bf16.msra.mxu0 %v1104
    %4423 = vmatprep.subr.bf16.mxu0 %v1101
    %4424 = vmatpush2.bf16.msra.mxu0 %v1100
    %4425 = vmatprep.subr.bf16.mxu0 %v1097
    %4426 = vmatpush2.bf16.msra.mxu0 %v1096
    %4427 = vmatprep.subr.bf16.mxu0 %v1093
    %4428 = vmatpush2.bf16.msra.mxu0 %v1092
    %4429 = vmatprep.subr.bf16.mxu0 %v1089
    %4430 = vmatpush2.bf16.msra.mxu0 %v1088
    %4431 = vmatprep.subr.bf16.mxu0 %v1085
    %4432 = vmatpush2.bf16.msra.mxu0 %v1084
    %4433 = vmatprep.subr.bf16.mxu0 %v1081
    %4434 = vmatpush2.bf16.msra.mxu0 %v1080
    %4435 = vmatprep.subr.bf16.mxu0 %v1077
    %4436 = vmatpush2.bf16.msra.mxu0 %v1076
    %4437 = vmatprep.mubr.bf16.mxu0 %v4361
    %4438 = vmatmul.mubr.bf16.gmra.mxu0 %v4360
    %v4439 = vpop.f32.mrf.mxu0
    %v4440 = vadd.f32 %v841, %v4439
    %v4441 = vpop.f32.mrf.mxu0
    %v4442 = vadd.f32 %v845, %v4441
    %v4443 = vpop.f32.mrf.mxu0
    %v4444 = vpop.f32.mrf.mxu0
    %4445 = vdwg.mxu0
    %v4446 = vxor.u32 %v4399, 2147483648
    %v4447 = vxor.u32 %v4401, 2147483648
    %v4448 = vxor.u32 %v4442, 2147483648
    %v4449 = vmul.f32 %v4446, 1.442695
    %v4450 = vpow.pop %v4449
    %v4451 = vmul.f32 %v4447, 1.442695
    %v4452 = vpow.pop %v4451
    %v4453 = vmul.f32 %v4448, 1.442695
    %v4454 = vpow.pop %v4453
    %v4455 = vadd.f32 %v4450, 1.0
    %v4456 = vadd.f32 %v4452, 1.0
    %v4457 = vadd.f32 %v4454, 1.0
    %v4458 = vrcp.pop %v4455
    %v4459 = vmul.f32 1.0, %v4458
    %v4460 = vrcp.pop %v4456
    %v4461 = vmul.f32 1.0, %v4460
    %v4462 = vrcp.pop %v4457
    %v4463 = vmul.f32 1.0, %v4462
    %v4464 = vtanh.pop %v4440
    %v4465 = vmul.f32 %v4461, %v4245
    %v4466 = vmul.f32 %v4459, %v4464
    %v4467 = vadd.f32 %v4465, %v4466
    %v4468 = vtanh.pop %v4467
    %v4469 = vmul.f32 %v4463, %v4468
    %4470 = vmatprep.subr.bf16.mxu0 %v1758
    %4471 = vmatpush1.bf16.msra.mxu0 %v1757
    %4472 = vmatprep.subr.bf16.mxu0 %v1754
    %4473 = vmatpush1.bf16.msra.mxu0 %v1753
    %4474 = vmatprep.subr.bf16.mxu0 %v1750
    %4475 = vmatpush1.bf16.msra.mxu0 %v1749
    %4476 = vmatprep.subr.bf16.mxu0 %v1746
    %4477 = vmatpush1.bf16.msra.mxu0 %v1745
    %4478 = vmatprep.subr.bf16.mxu0 %v1742
    %4479 = vmatpush1.bf16.msra.mxu0 %v1741
    %4480 = vmatprep.subr.bf16.mxu0 %v1738
    %4481 = vmatpush1.bf16.msra.mxu0 %v1737
    %4482 = vmatprep.subr.bf16.mxu0 %v1734
    %4483 = vmatpush1.bf16.msra.mxu0 %v1733
    %4484 = vmatprep.subr.bf16.mxu0 %v1730
    %4485 = vmatpush1.bf16.msra.mxu0 %v1729
    %4486 = vmatprep.subr.bf16.mxu0 %v1790
    %4487 = vmatpush2.bf16.msra.mxu0 %v1789
    %4488 = vmatprep.subr.bf16.mxu0 %v1786
    %4489 = vmatpush2.bf16.msra.mxu0 %v1785
    %4490 = vmatprep.subr.bf16.mxu0 %v1782
    %4491 = vmatpush2.bf16.msra.mxu0 %v1781
    %4492 = vmatprep.subr.bf16.mxu0 %v1778
    %4493 = vmatpush2.bf16.msra.mxu0 %v1777
    %4494 = vmatprep.subr.bf16.mxu0 %v1774
    %4495 = vmatpush2.bf16.msra.mxu0 %v1773
    %4496 = vmatprep.subr.bf16.mxu0 %v1770
    %4497 = vmatpush2.bf16.msra.mxu0 %v1769
    %4498 = vmatprep.subr.bf16.mxu0 %v1766
    %4499 = vmatpush2.bf16.msra.mxu0 %v1765
    %4500 = vmatprep.subr.bf16.mxu0 %v1762
    %4501 = vmatpush2.bf16.msra.mxu0 %v1761
    %4502 = vmatprep.mubr.bf16.mxu0 %v4356
    %4503 = vmatmul.mubr.bf16.gmra.mxu0 %v4355
    %v4504 = vpop.f32.mrf.mxu0
    %v4505 = vadd.f32 %v1520, %v4504
    %v4506 = vpop.f32.mrf.mxu0
    %v4507 = vadd.f32 %v1524, %v4506
    %v4508 = vpop.f32.mrf.mxu0
    %v4509 = vpop.f32.mrf.mxu0
    %4510 = vdwg.mxu0
    %4511 = vmatprep.subr.bf16.mxu0 %v1760
    %4512 = vmatpush1.bf16.msra.mxu0 %v1759
    %4513 = vmatprep.subr.bf16.mxu0 %v1756
    %4514 = vmatpush1.bf16.msra.mxu0 %v1755
    %4515 = vmatprep.subr.bf16.mxu0 %v1752
    %4516 = vmatpush1.bf16.msra.mxu0 %v1751
    %4517 = vmatprep.subr.bf16.mxu0 %v1748
    %4518 = vmatpush1.bf16.msra.mxu0 %v1747
    %4519 = vmatprep.subr.bf16.mxu0 %v1744
    %4520 = vmatpush1.bf16.msra.mxu0 %v1743
    %4521 = vmatprep.subr.bf16.mxu0 %v1740
    %4522 = vmatpush1.bf16.msra.mxu0 %v1739
    %4523 = vmatprep.subr.bf16.mxu0 %v1736
    %4524 = vmatpush1.bf16.msra.mxu0 %v1735
    %4525 = vmatprep.subr.bf16.mxu0 %v1732
    %4526 = vmatpush1.bf16.msra.mxu0 %v1731
    %4527 = vmatprep.subr.bf16.mxu0 %v1792
    %4528 = vmatpush2.bf16.msra.mxu0 %v1791
    %4529 = vmatprep.subr.bf16.mxu0 %v1788
    %4530 = vmatpush2.bf16.msra.mxu0 %v1787
    %4531 = vmatprep.subr.bf16.mxu0 %v1784
    %4532 = vmatpush2.bf16.msra.mxu0 %v1783
    %4533 = vmatprep.subr.bf16.mxu0 %v1780
    %4534 = vmatpush2.bf16.msra.mxu0 %v1779
    %4535 = vmatprep.subr.bf16.mxu0 %v1776
    %4536 = vmatpush2.bf16.msra.mxu0 %v1775
    %4537 = vmatprep.subr.bf16.mxu0 %v1772
    %4538 = vmatpush2.bf16.msra.mxu0 %v1771
    %4539 = vmatprep.subr.bf16.mxu0 %v1768
    %4540 = vmatpush2.bf16.msra.mxu0 %v1767
    %4541 = vmatprep.subr.bf16.mxu0 %v1764
    %4542 = vmatpush2.bf16.msra.mxu0 %v1763
    %4543 = vmatprep.mubr.bf16.mxu0 %v4356
    %4544 = vmatmul.mubr.bf16.gmra.mxu0 %v4355
    %v4545 = vpop.f32.mrf.mxu0
    %v4546 = vadd.f32 %v1528, %v4545
    %v4547 = vpop.f32.mrf.mxu0
    %v4548 = vadd.f32 %v1532, %v4547
    %v4549 = vpop.f32.mrf.mxu0
    %v4550 = vpop.f32.mrf.mxu0
    %4551 = vdwg.mxu0
    %v4552 = vxor.u32 %v4505, 2147483648
    %v4553 = vxor.u32 %v4507, 2147483648
    %v4554 = vxor.u32 %v4548, 2147483648
    %v4555 = vmul.f32 %v4552, 1.442695
    %v4556 = vpow.pop %v4555
    %v4557 = vmul.f32 %v4553, 1.442695
    %v4558 = vpow.pop %v4557
    %v4559 = vmul.f32 %v4554, 1.442695
    %v4560 = vpow.pop %v4559
    %v4561 = vadd.f32 %v4556, 1.0
    %v4562 = vadd.f32 %v4558, 1.0
    %v4563 = vadd.f32 %v4560, 1.0
    %v4564 = vrcp.pop %v4561
    %v4565 = vmul.f32 1.0, %v4564
    %v4566 = vrcp.pop %v4562
    %v4567 = vmul.f32 1.0, %v4566
    %v4568 = vrcp.pop %v4563
    %v4569 = vmul.f32 1.0, %v4568
    %v4570 = vtanh.pop %v4546
    %v4571 = vmul.f32 %v4567, %v4351
    %v4572 = vmul.f32 %v4565, %v4570
    %v4573 = vadd.f32 %v4571, %v4572
    %v4574 = vtanh.pop %v4573
    %v4575 = vmul.f32 %v4569, %v4574
    %v4576 = vpack.c.bf16 %v4469, %v4469
    %v4577 = vpack.c.bf16 %v4575, %v4575
    %4578 = vmatprep.subr.bf16.mxu0 %v1758
    %4579 = vmatpush1.bf16.msra.mxu0 %v1757
    %4580 = vmatprep.subr.bf16.mxu0 %v1754
    %4581 = vmatpush1.bf16.msra.mxu0 %v1753
    %4582 = vmatprep.subr.bf16.mxu0 %v1750
    %4583 = vmatpush1.bf16.msra.mxu0 %v1749
    %4584 = vmatprep.subr.bf16.mxu0 %v1746
    %4585 = vmatpush1.bf16.msra.mxu0 %v1745
    %4586 = vmatprep.subr.bf16.mxu0 %v1742
    %4587 = vmatpush1.bf16.msra.mxu0 %v1741
    %4588 = vmatprep.subr.bf16.mxu0 %v1738
    %4589 = vmatpush1.bf16.msra.mxu0 %v1737
    %4590 = vmatprep.subr.bf16.mxu0 %v1734
    %4591 = vmatpush1.bf16.msra.mxu0 %v1733
    %4592 = vmatprep.subr.bf16.mxu0 %v1730
    %4593 = vmatpush1.bf16.msra.mxu0 %v1729
    %4594 = vmatprep.subr.bf16.mxu0 %v1790
    %4595 = vmatpush2.bf16.msra.mxu0 %v1789
    %4596 = vmatprep.subr.bf16.mxu0 %v1786
    %4597 = vmatpush2.bf16.msra.mxu0 %v1785
    %4598 = vmatprep.subr.bf16.mxu0 %v1782
    %4599 = vmatpush2.bf16.msra.mxu0 %v1781
    %4600 = vmatprep.subr.bf16.mxu0 %v1778
    %4601 = vmatpush2.bf16.msra.mxu0 %v1777
    %4602 = vmatprep.subr.bf16.mxu0 %v1774
    %4603 = vmatpush2.bf16.msra.mxu0 %v1773
    %4604 = vmatprep.subr.bf16.mxu0 %v1770
    %4605 = vmatpush2.bf16.msra.mxu0 %v1769
    %4606 = vmatprep.subr.bf16.mxu0 %v1766
    %4607 = vmatpush2.bf16.msra.mxu0 %v1765
    %4608 = vmatprep.subr.bf16.mxu0 %v1762
    %4609 = vmatpush2.bf16.msra.mxu0 %v1761
    %4610 = vmatprep.mubr.bf16.mxu0 %v4577
    %4611 = vmatmul.mubr.bf16.gmra.mxu0 %v4576
    %v4612 = vpop.f32.mrf.mxu0
    %v4613 = vadd.f32 %v1520, %v4612
    %v4614 = vpop.f32.mrf.mxu0
    %v4615 = vadd.f32 %v1524, %v4614
    %v4616 = vpop.f32.mrf.mxu0
    %v4617 = vpop.f32.mrf.mxu0
    %4618 = vdwg.mxu0
    %4619 = vmatprep.subr.bf16.mxu0 %v1760
    %4620 = vmatpush1.bf16.msra.mxu0 %v1759
    %4621 = vmatprep.subr.bf16.mxu0 %v1756
    %4622 = vmatpush1.bf16.msra.mxu0 %v1755
    %4623 = vmatprep.subr.bf16.mxu0 %v1752
    %4624 = vmatpush1.bf16.msra.mxu0 %v1751
    %4625 = vmatprep.subr.bf16.mxu0 %v1748
    %4626 = vmatpush1.bf16.msra.mxu0 %v1747
    %4627 = vmatprep.subr.bf16.mxu0 %v1744
    %4628 = vmatpush1.bf16.msra.mxu0 %v1743
    %4629 = vmatprep.subr.bf16.mxu0 %v1740
    %4630 = vmatpush1.bf16.msra.mxu0 %v1739
    %4631 = vmatprep.subr.bf16.mxu0 %v1736
    %4632 = vmatpush1.bf16.msra.mxu0 %v1735
    %4633 = vmatprep.subr.bf16.mxu0 %v1732
    %4634 = vmatpush1.bf16.msra.mxu0 %v1731
    %4635 = vmatprep.subr.bf16.mxu0 %v1792
    %4636 = vmatpush2.bf16.msra.mxu0 %v1791
    %4637 = vmatprep.subr.bf16.mxu0 %v1788
    %4638 = vmatpush2.bf16.msra.mxu0 %v1787
    %4639 = vmatprep.subr.bf16.mxu0 %v1784
    %4640 = vmatpush2.bf16.msra.mxu0 %v1783
    %4641 = vmatprep.subr.bf16.mxu0 %v1780
    %4642 = vmatpush2.bf16.msra.mxu0 %v1779
    %4643 = vmatprep.subr.bf16.mxu0 %v1776
    %4644 = vmatpush2.bf16.msra.mxu0 %v1775
    %4645 = vmatprep.subr.bf16.mxu0 %v1772
    %4646 = vmatpush2.bf16.msra.mxu0 %v1771
    %4647 = vmatprep.subr.bf16.mxu0 %v1768
    %4648 = vmatpush2.bf16.msra.mxu0 %v1767
    %4649 = vmatprep.subr.bf16.mxu0 %v1764
    %4650 = vmatpush2.bf16.msra.mxu0 %v1763
    %4651 = vmatprep.mubr.bf16.mxu0 %v4577
    %4652 = vmatmul.mubr.bf16.gmra.mxu0 %v4576
    %v4653 = vpop.f32.mrf.mxu0
    %v4654 = vadd.f32 %v1528, %v4653
    %v4655 = vpop.f32.mrf.mxu0
    %v4656 = vadd.f32 %v1532, %v4655
    %v4657 = vpop.f32.mrf.mxu0
    %v4658 = vpop.f32.mrf.mxu0
    %4659 = vdwg.mxu0
    %v4660 = vxor.u32 %v4613, 2147483648
    %v4661 = vxor.u32 %v4615, 2147483648
    %v4662 = vxor.u32 %v4656, 2147483648
    %v4663 = vmul.f32 %v4660, 1.442695
    %v4664 = vpow.pop %v4663
    %v4665 = vmul.f32 %v4661, 1.442695
    %v4666 = vpow.pop %v4665
    %v4667 = vmul.f32 %v4662, 1.442695
    %v4668 = vpow.pop %v4667
    %v4669 = vadd.f32 %v4664, 1.0
    %v4670 = vadd.f32 %v4666, 1.0
    %v4671 = vadd.f32 %v4668, 1.0
    %v4672 = vrcp.pop %v4669
    %v4673 = vmul.f32 1.0, %v4672
    %v4674 = vrcp.pop %v4670
    %v4675 = vmul.f32 1.0, %v4674
    %v4676 = vrcp.pop %v4671
    %v4677 = vmul.f32 1.0, %v4676
    %v4678 = vtanh.pop %v4654
    %v4679 = vmul.f32 %v4675, %v4573
    %v4680 = vmul.f32 %v4673, %v4678
    %v4681 = vadd.f32 %v4679, %v4680
    %v4682 = vtanh.pop %v4681
    %v4683 = vmul.f32 %v4677, %v4682
    %v4684 = vld [vmem:[%s9] sm:$0x1]
    %v4686 = vlaneseq
    %v4687 = vshrl.u32 %v4686, 7
    %v4688 = vsub.s32 0, %v4687
    %v4689 = vrot.slane %v4684, %v4688
    %v4691 = vmul.f32 %v4683, %v4689
    %vm4692 = vcmask 1041408
    %v4693 = vsel %vm4692, %v4691, 0.0
    %4694 = vadd.xlane.f32.xlu0 %v4693
    %v4695 = vpop.xlane.xlu0 %4694
    %v4696 = vld [vmem:[#allocation5] sm:$0x1]
    %v4698 = vlaneseq
    %v4699 = vshrl.u32 %v4698, 7
    %v4700 = vsub.s32 0, %v4699
    %v4701 = vrot.slane %v4696, %v4700
    %v4703 = vadd.f32 %v4695, %v4701
    %vm4704 = vcmask 1024
    %4705 = vst.msk [vmem:[%s11] sm:$0x3] %vm4704, %v4703
    // Predicated region
    $region54: #{tpu_custom_call.1} parent=1 // pred_check
      _
    $region55: #{tpu_custom_call.1} parent=1 // pred_check_branch
      %4707 = sbr.rel (0) target = $region57
    $region56: #{tpu_custom_call.1} parent=1 // pred_region
      _
    $region57: #{tpu_custom_call.1} parent=1 // pred_fallthru
      _
    // Predicated region
    $region58: #{tpu_custom_call.1} parent=1 // pred_check
      _
    $region59: #{tpu_custom_call.1} parent=1 // pred_check_branch
      %4709 = sbr.rel (0) target = $region61
    $region60: #{tpu_custom_call.1} parent=1 // pred_region
      _
    $region61: #{tpu_custom_call.1} parent=1 // pred_fallthru
      _
    %4710 = vsyncpa [#allocation7], 1
    %4711 = vsyncpa [#allocation9], 1

</llo_original>
